<compile_context>
chip_gen: v6e
topology: v6e:2x2x1
jax: 0.10.0
libtpu: 0.0.40
codegen_flags: <defaults>
</compile_context>

<pallas_src>
import jax
import jax.numpy as jnp
from jax.experimental import pallas as pl
from jax.experimental.pallas import tpu as pltpu

N_INCHANNELS = 3
N_OUTPUT_FILTER_SIZE = 6
NEG_SLOPE = 0.1
BN_EPS = 1e-5
HEAD_PAD = 128            # pad the 6-wide head to a full 128-lane slab


def _full_spec(shape):
    """Whole-array block for a grid=(1,) kernel."""
    return pl.BlockSpec(shape, lambda i, _nd=len(shape): (0,) * _nd)


def _leaky_relu(y):
    return jnp.where(y > 0, y, NEG_SLOPE * y)


# ----------------------------------------------------------------------------
# Kernel 1: fused conv stack (conv + folded BN + LeakyReLU, 5 stages)
# ----------------------------------------------------------------------------
def _conv_stack_kernel(p1_ref,
                       w1_ref, w2_ref, w3_ref, w4_ref, w5_ref,
                       s1_ref, s2_ref, s3_ref, s4_ref, s5_ref,
                       o_ref,
                       pad2_ref, pad3_ref, pad4_ref, pad5_ref):
    """All 5 conv stages for ONE sample; activations never leave VMEM.

    Stage 1 consumes wrapper-built im2col patches.  Stages 2..5 gather the
    stride-2 / pad-1 conv taps from a zero-padded VMEM scratch with stride-2
    sublane reads and issue a single MXU matmul per stage.
    """
    # ---- stage 1: plain matmul on pre-built patches ------------------------
    p = p1_ref[0].astype(jnp.bfloat16)                      # (512, k*Cin)
    y = jnp.dot(p, w1_ref[...], preferred_element_type=jnp.float32) + s1_ref[...]
    act = _leaky_relu(y)                                    # (512, 8) f32

    # ---- stages 2..5: strided tap gather + single matmul per stage ---------
    for w_ref, s_ref, pad_ref in ((w2_ref, s2_ref, pad2_ref),
                                  (w3_ref, s3_ref, pad3_ref),
                                  (w4_ref, s4_ref, pad4_ref),
                                  (w5_ref, s5_ref, pad5_ref)):
        l_in, c_in = act.shape
        l_out = l_in // 2
        zeros8 = jnp.zeros((8, c_in), jnp.float32)
        # activation lives at rows [8, 8+l_in); rows 7 and 8+l_in are the
        # conv zero padding (aligned 8-row zero blocks on both sides).
        pad_ref[0:8, :] = zeros8
        pad_ref[8:8 + l_in, :] = act
        pad_ref[8 + l_in:16 + l_in, :] = zeros8
        # tap t of output o reads input row (2*o + t - 1) == padded row (2*o + t + 7)
        taps = [pad_ref[pl.ds(7 + t, l_out, stride=2), :] for t in range(4)]
        patch = jnp.concatenate(taps, axis=1).astype(jnp.bfloat16)   # (l_out, 4*Cin)
        y = jnp.dot(patch, w_ref[...], preferred_element_type=jnp.float32) + s_ref[...]
        act = _leaky_relu(y)

    o_ref[0] = act.astype(o_ref.dtype)                      # (32, 128): lane-dense bf16


def conv_stack(p1, conv_params):
    """p1: (N, L1, k*Cin) stage-1 patches -> (N, 32, 128) bf16 length-major acts."""
    n, l1, kc = p1.shape
    ws = [w for (w, _) in conv_params]
    ss = [s for (_, s) in conv_params]
    c_last = ws[-1].shape[-1]
    l_last = l1 // 16                                        # 4 more stride-2 stages
    out_shape = (n, l_last, c_last)

    scratch = []
    l_in = l1
    for w in ws[1:]:                                         # stages 2..5
        c_in = w.shape[0] // 4
        scratch.append(pltpu.VMEM((l_in + 16, c_in), jnp.float32))
        l_in //= 2

    return pl.pallas_call(
        _conv_stack_kernel,
        out_shape=jax.ShapeDtypeStruct(out_shape, jnp.bfloat16),
        grid=(n,),
        in_specs=([pl.BlockSpec((1, l1, kc), lambda i: (i, 0, 0))]
                  + [pl.BlockSpec(w.shape, lambda i: (0, 0)) for w in ws]
                  + [pl.BlockSpec(s.shape, lambda i: (0, 0)) for s in ss]),
        out_specs=pl.BlockSpec((1, l_last, c_last), lambda i: (i, 0, 0)),
        scratch_shapes=scratch,
        compiler_params=pltpu.CompilerParams(
            dimension_semantics=("parallel",)),              # v7x: 2 TCs split batch
    )(p1, *ws, *ss)


# ----------------------------------------------------------------------------
# Kernel 2: folded output head (single 4096 -> 128-padded matmul)
# ----------------------------------------------------------------------------
def _head_kernel(a_ref, w_ref, b_ref, o_ref):
    y = jnp.dot(a_ref[...], w_ref[...], preferred_element_type=jnp.float32)
    o_ref[...] = (y + b_ref[...]).astype(o_ref.dtype)


def head_matmul(a, w_bf16, b_f32):
    """a: (M, 4096) bf16, w: (4096, 128) bf16, b: (1, 128) f32 -> (M, 128) f32."""
    m = a.shape[0]
    n_out = w_bf16.shape[1]
    return pl.pallas_call(
        _head_kernel,
        out_shape=jax.ShapeDtypeStruct((m, n_out), jnp.float32),
        grid=(1,),
        in_specs=[_full_spec(a.shape), _full_spec(w_bf16.shape),
                  _full_spec(b_f32.shape)],
        out_specs=_full_spec((m, n_out)),
    )(a, w_bf16, b_f32)


# ----------------------------------------------------------------------------
# Glue: stage-1 im2col, parameter init / offline prep, forward
# ----------------------------------------------------------------------------
def im2col_first(x_nlc, k=4, stride=2, pad=1):
    """x_nlc: (N, L, C) -> patches (N, L_out, k*C), tap-major K ordering."""
    n, l, c = x_nlc.shape
    xp = jnp.pad(x_nlc, ((0, 0), (pad, pad), (0, 0)))
    l_out = (l + 2 * pad - k) // stride + 1
    taps = [xp[:, t: t + stride * l_out: stride, :] for t in range(k)]
    patches = jnp.stack(taps, axis=-2).reshape(n, l_out, k * c)
    return patches, l_out


def init_params(key, in_channels=N_INCHANNELS, out_channels=N_OUTPUT_FILTER_SIZE):
    """PyTorch-layout parameters (as nn.Module would hold them)."""
    conv_channels = [in_channels, 8, 16, 32, 64, 128]
    conv = []
    for i in range(5):
        key, k1, k2, k3 = jax.random.split(key, 4)
        cin, cout = conv_channels[i], conv_channels[i + 1]
        w = jax.random.normal(k1, (cout, cin, 4), jnp.float32) / jnp.sqrt(cin * 4.0)
        gamma = 1.0 + 0.1 * jax.random.normal(k2, (cout,), jnp.float32)
        beta = 0.1 * jax.random.normal(k3, (cout,), jnp.float32)
        mean = jnp.zeros((cout,), jnp.float32)   # BN running_mean (PyTorch default)
        var = jnp.ones((cout,), jnp.float32)     # BN running_var  (PyTorch default)
        conv.append((w, gamma, beta, mean, var))
    lin_dims = [4096, 2048, 1024, 512, 256, out_channels]
    out = []
    for i in range(5):
        key, k1, k2 = jax.random.split(key, 3)
        fin, fout = lin_dims[i], lin_dims[i + 1]
        w = jax.random.normal(k1, (fout, fin), jnp.float32) / jnp.sqrt(float(fin))
        b = 0.01 * jax.random.normal(k2, (fout,), jnp.float32)
        out.append((w, b))
    return {"conv": conv, "out": out}


def prepare_params(params):
    """One-time offline prep: fold BN into conv weights, fold the activation-free
    Linear chain into a single (4096, 128-padded) matrix, permute for the
    channel-major flatten, cast MXU operands to bf16."""
    conv = []
    for (w, gamma, beta, mean, var) in params["conv"]:
        cout, cin, k = w.shape
        scale = gamma / jnp.sqrt(var + BN_EPS)
        shift = (beta - mean * scale).reshape(1, cout).astype(jnp.float32)
        w_t = jnp.transpose(w, (2, 1, 0)) * scale[None, None, :]     # (k, cin, cout)
        conv.append((w_t.reshape(k * cin, cout).astype(jnp.bfloat16), shift))

    # Fold Linear1..Linear5 (no nonlinearity between them in the PyTorch spec).
    (w1, b1), *rest = params["out"]
    w_eff = jnp.transpose(w1).astype(jnp.float32)                    # (4096, 2048)
    b_eff = b1.astype(jnp.float32)
    for w, b in rest:
        wt = jnp.transpose(w).astype(jnp.float32)
        w_eff = jnp.dot(w_eff, wt, precision=jax.lax.Precision.HIGHEST)
        b_eff = jnp.dot(b_eff, wt, precision=jax.lax.Precision.HIGHEST) + b

    # Fold PyTorch's channel-major flatten (index c*L + l) into the weight so the
    # kernel's length-major activation layout (index l*C + c) multiplies directly.
    c_f = params["conv"][-1][0].shape[0]            # 128 output channels
    l_f = w_eff.shape[0] // c_f                     # 32 output length
    w_perm = w_eff.reshape(c_f, l_f, -1).transpose(1, 0, 2).reshape(c_f * l_f, -1)

    pad_n = HEAD_PAD - w_perm.shape[1]              # pad 6 -> 128 lanes
    head_w = jnp.pad(w_perm, ((0, 0), (0, pad_n))).astype(jnp.bfloat16)
    head_b = jnp.pad(b_eff.reshape(1, -1), ((0, 0), (0, pad_n))).astype(jnp.float32)
    return {"conv": conv, "head_w": head_w, "head_b": head_b}


def filter_conv_forward(x_ncl, prep):
    """x_ncl: (N, C_in, 1024) -> (N, N_OUTPUT_FILTER_SIZE). Inference semantics."""
    n = x_ncl.shape[0]
    x = jnp.transpose(x_ncl, (0, 2, 1)).astype(jnp.float32)   # (N, L, C) - tiny
    p1, _ = im2col_first(x)                                    # (N, 512, 12) - tiny
    h = conv_stack(p1, prep["conv"])                           # (N, 32, 128) bf16
    h = h.reshape(n, -1)                                       # (N, 4096), free bitcast
    y = head_matmul(h, prep["head_w"], prep["head_b"])         # (N, 128), padded head
    return y[:, :N_OUTPUT_FILTER_SIZE]


if __name__ == "__main__":
    key = jax.random.PRNGKey(0)
    key, pkey, xkey = jax.random.split(key, 3)
    params = init_params(pkey)
    prep = prepare_params(params)
    # Input length must be 1024: 5x stride-2 convs -> L=32, 128*32 = 4096 = Linear in.
    x = jax.random.normal(xkey, (2, N_INCHANNELS, 1024), jnp.float32)
    fwd = jax.jit(filter_conv_forward)
    out = jax.block_until_ready(fwd(x, prep))
    assert out.shape == (2, N_OUTPUT_FILTER_SIZE), out.shape
    print("KERNEL_OK")
</pallas_src>

<mosaic_0001>
module attributes {stable_mosaic.version = 11 : i64} {
  func.func @_conv_stack_kernel(%arg0: i32, %arg1: memref<1x512x12xf32, #tpu.memory_space<vmem>>, %arg2: memref<12x8xbf16, #tpu.memory_space<vmem>>, %arg3: memref<32x16xbf16, #tpu.memory_space<vmem>>, %arg4: memref<64x32xbf16, #tpu.memory_space<vmem>>, %arg5: memref<128x64xbf16, #tpu.memory_space<vmem>>, %arg6: memref<256x128xbf16, #tpu.memory_space<vmem>>, %arg7: memref<1x8xf32, #tpu.memory_space<vmem>>, %arg8: memref<1x16xf32, #tpu.memory_space<vmem>>, %arg9: memref<1x32xf32, #tpu.memory_space<vmem>>, %arg10: memref<1x64xf32, #tpu.memory_space<vmem>>, %arg11: memref<1x128xf32, #tpu.memory_space<vmem>>, %arg12: memref<1x32x128xbf16, #tpu.memory_space<vmem>>, %arg13: memref<528x8xf32, #tpu.memory_space<vmem>>, %arg14: memref<272x16xf32, #tpu.memory_space<vmem>>, %arg15: memref<144x32xf32, #tpu.memory_space<vmem>>, %arg16: memref<80x64xf32, #tpu.memory_space<vmem>>) attributes {dimension_semantics = [#tpu.dimension_semantics<parallel>], iteration_bounds = array<i64: 2>, scalar_prefetch = 0 : i64, scratch_operands = 4 : i64, tpu.core_type = #tpu.core_type<tc>, window_params = [{transform_indices = @transform_0, window_bounds = array<i64: 1, 512, 12>}, {pipeline_mode = #tpu.pipeline_mode<synchronous>, transform_indices = @transform_1, window_bounds = array<i64: 12, 8>}, {pipeline_mode = #tpu.pipeline_mode<synchronous>, transform_indices = @transform_2, window_bounds = array<i64: 32, 16>}, {pipeline_mode = #tpu.pipeline_mode<synchronous>, transform_indices = @transform_3, window_bounds = array<i64: 64, 32>}, {pipeline_mode = #tpu.pipeline_mode<synchronous>, transform_indices = @transform_4, window_bounds = array<i64: 128, 64>}, {pipeline_mode = #tpu.pipeline_mode<synchronous>, transform_indices = @transform_5, window_bounds = array<i64: 256, 128>}, {pipeline_mode = #tpu.pipeline_mode<synchronous>, transform_indices = @transform_6, window_bounds = array<i64: 1, 8>}, {pipeline_mode = #tpu.pipeline_mode<synchronous>, transform_indices = @transform_7, window_bounds = array<i64: 1, 16>}, {pipeline_mode = #tpu.pipeline_mode<synchronous>, transform_indices = @transform_8, window_bounds = array<i64: 1, 32>}, {pipeline_mode = #tpu.pipeline_mode<synchronous>, transform_indices = @transform_9, window_bounds = array<i64: 1, 64>}, {pipeline_mode = #tpu.pipeline_mode<synchronous>, transform_indices = @transform_10, window_bounds = array<i64: 1, 128>}, {transform_indices = @transform_11, window_bounds = array<i64: 1, 32, 128>}]} {
    %c0 = arith.constant 0 : index
    %c0_0 = arith.constant 0 : index
    %c0_1 = arith.constant 0 : index
    %0 = vector.load %arg1[%c0, %c0_0, %c0_1] : memref<1x512x12xf32, #tpu.memory_space<vmem>>, vector<1x512x12xf32>
    %1 = vector.shape_cast %0 : vector<1x512x12xf32> to vector<512x12xf32>
    %2 = arith.truncf %1 : vector<512x12xf32> to vector<512x12xbf16>
    %c0_2 = arith.constant 0 : index
    %c0_3 = arith.constant 0 : index
    %3 = vector.load %arg2[%c0_2, %c0_3] : memref<12x8xbf16, #tpu.memory_space<vmem>>, vector<12x8xbf16>
    %cst = arith.constant dense<0.000000e+00> : vector<512x8xf32>
    %4 = tpu.matmul %2, %3, %cst {dimension_numbers = #tpu.dot_dimension_numbers<[1], [0], [0], [1], [0, 0, 1, 1], [], []>} : vector<512x12xbf16>, vector<12x8xbf16>, vector<512x8xf32> -> vector<512x8xf32>
    %c0_4 = arith.constant 0 : index
    %c0_5 = arith.constant 0 : index
    %5 = vector.load %arg7[%c0_4, %c0_5] : memref<1x8xf32, #tpu.memory_space<vmem>>, vector<1x8xf32>
    %6 = vector.broadcast %5 : vector<1x8xf32> to vector<512x8xf32>
    %7 = arith.addf %4, %6 : vector<512x8xf32>
    %cst_6 = arith.constant 0.000000e+00 : f32
    %8 = vector.broadcast %cst_6 : f32 to vector<512x8xf32>
    %9 = arith.cmpf ogt, %7, %8 : vector<512x8xf32>
    %cst_7 = arith.constant 1.000000e-01 : f32
    %10 = vector.broadcast %cst_7 : f32 to vector<512x8xf32>
    %11 = arith.mulf %10, %7 : vector<512x8xf32>
    %12 = arith.select %9, %7, %11 : vector<512x8xi1>, vector<512x8xf32>
    %cst_8 = arith.constant 0.000000e+00 : f32
    %13 = vector.broadcast %cst_8 : f32 to vector<8x8xf32>
    %c0_9 = arith.constant 0 : index
    %c0_10 = arith.constant 0 : index
    %14 = vector.load %arg13[%c0_9, %c0_10] : memref<528x8xf32, #tpu.memory_space<vmem>>, vector<8x8xf32>
    tpu.vector_store %arg13[%c0_9, %c0_10], %13 {strides = array<i32>} : memref<528x8xf32, #tpu.memory_space<vmem>>, vector<8x8xf32>,
    %c8 = arith.constant 8 : index
    %c0_11 = arith.constant 0 : index
    %15 = vector.load %arg13[%c8, %c0_11] : memref<528x8xf32, #tpu.memory_space<vmem>>, vector<512x8xf32>
    tpu.vector_store %arg13[%c8, %c0_11], %12 {strides = array<i32>} : memref<528x8xf32, #tpu.memory_space<vmem>>, vector<512x8xf32>,
    %c520 = arith.constant 520 : index
    %c0_12 = arith.constant 0 : index
    %16 = vector.load %arg13[%c520, %c0_12] : memref<528x8xf32, #tpu.memory_space<vmem>>, vector<8x8xf32>
    tpu.vector_store %arg13[%c520, %c0_12], %13 {strides = array<i32>} : memref<528x8xf32, #tpu.memory_space<vmem>>, vector<8x8xf32>,
    %c7 = arith.constant 7 : index
    %c0_13 = arith.constant 0 : index
    %17 = tpu.strided_load %arg13[%c7, %c0_13] {strides = array<i32: 2, 1>} : memref<528x8xf32, #tpu.memory_space<vmem>>, vector<256x8xf32>
    %c8_14 = arith.constant 8 : index
    %c0_15 = arith.constant 0 : index
    %18 = tpu.strided_load %arg13[%c8_14, %c0_15] {strides = array<i32: 2, 1>} : memref<528x8xf32, #tpu.memory_space<vmem>>, vector<256x8xf32>
    %c9 = arith.constant 9 : index
    %c0_16 = arith.constant 0 : index
    %19 = tpu.strided_load %arg13[%c9, %c0_16] {strides = array<i32: 2, 1>} : memref<528x8xf32, #tpu.memory_space<vmem>>, vector<256x8xf32>
    %c10 = arith.constant 10 : index
    %c0_17 = arith.constant 0 : index
    %20 = tpu.strided_load %arg13[%c10, %c0_17] {strides = array<i32: 2, 1>} : memref<528x8xf32, #tpu.memory_space<vmem>>, vector<256x8xf32>
    %21 = tpu.concatenate %17, %18, %19, %20 in 1 : vector<256x8xf32>, vector<256x8xf32>, vector<256x8xf32>, vector<256x8xf32> -> vector<256x32xf32>
    %22 = arith.truncf %21 : vector<256x32xf32> to vector<256x32xbf16>
    %c0_18 = arith.constant 0 : index
    %c0_19 = arith.constant 0 : index
    %23 = vector.load %arg3[%c0_18, %c0_19] : memref<32x16xbf16, #tpu.memory_space<vmem>>, vector<32x16xbf16>
    %cst_20 = arith.constant dense<0.000000e+00> : vector<256x16xf32>
    %24 = tpu.matmul %22, %23, %cst_20 {dimension_numbers = #tpu.dot_dimension_numbers<[1], [0], [0], [1], [0, 0, 1, 1], [], []>} : vector<256x32xbf16>, vector<32x16xbf16>, vector<256x16xf32> -> vector<256x16xf32>
    %c0_21 = arith.constant 0 : index
    %c0_22 = arith.constant 0 : index
    %25 = vector.load %arg8[%c0_21, %c0_22] : memref<1x16xf32, #tpu.memory_space<vmem>>, vector<1x16xf32>
    %26 = vector.broadcast %25 : vector<1x16xf32> to vector<256x16xf32>
    %27 = arith.addf %24, %26 : vector<256x16xf32>
    %cst_23 = arith.constant 0.000000e+00 : f32
    %28 = vector.broadcast %cst_23 : f32 to vector<256x16xf32>
    %29 = arith.cmpf ogt, %27, %28 : vector<256x16xf32>
    %cst_24 = arith.constant 1.000000e-01 : f32
    %30 = vector.broadcast %cst_24 : f32 to vector<256x16xf32>
    %31 = arith.mulf %30, %27 : vector<256x16xf32>
    %32 = arith.select %29, %27, %31 : vector<256x16xi1>, vector<256x16xf32>
    %cst_25 = arith.constant 0.000000e+00 : f32
    %33 = vector.broadcast %cst_25 : f32 to vector<8x16xf32>
    %c0_26 = arith.constant 0 : index
    %c0_27 = arith.constant 0 : index
    %34 = vector.load %arg14[%c0_26, %c0_27] : memref<272x16xf32, #tpu.memory_space<vmem>>, vector<8x16xf32>
    tpu.vector_store %arg14[%c0_26, %c0_27], %33 {strides = array<i32>} : memref<272x16xf32, #tpu.memory_space<vmem>>, vector<8x16xf32>,
    %c8_28 = arith.constant 8 : index
    %c0_29 = arith.constant 0 : index
    %35 = vector.load %arg14[%c8_28, %c0_29] : memref<272x16xf32, #tpu.memory_space<vmem>>, vector<256x16xf32>
    tpu.vector_store %arg14[%c8_28, %c0_29], %32 {strides = array<i32>} : memref<272x16xf32, #tpu.memory_space<vmem>>, vector<256x16xf32>,
    %c264 = arith.constant 264 : index
    %c0_30 = arith.constant 0 : index
    %36 = vector.load %arg14[%c264, %c0_30] : memref<272x16xf32, #tpu.memory_space<vmem>>, vector<8x16xf32>
    tpu.vector_store %arg14[%c264, %c0_30], %33 {strides = array<i32>} : memref<272x16xf32, #tpu.memory_space<vmem>>, vector<8x16xf32>,
    %c7_31 = arith.constant 7 : index
    %c0_32 = arith.constant 0 : index
    %37 = tpu.strided_load %arg14[%c7_31, %c0_32] {strides = array<i32: 2, 1>} : memref<272x16xf32, #tpu.memory_space<vmem>>, vector<128x16xf32>
    %c8_33 = arith.constant 8 : index
    %c0_34 = arith.constant 0 : index
    %38 = tpu.strided_load %arg14[%c8_33, %c0_34] {strides = array<i32: 2, 1>} : memref<272x16xf32, #tpu.memory_space<vmem>>, vector<128x16xf32>
    %c9_35 = arith.constant 9 : index
    %c0_36 = arith.constant 0 : index
    %39 = tpu.strided_load %arg14[%c9_35, %c0_36] {strides = array<i32: 2, 1>} : memref<272x16xf32, #tpu.memory_space<vmem>>, vector<128x16xf32>
    %c10_37 = arith.constant 10 : index
    %c0_38 = arith.constant 0 : index
    %40 = tpu.strided_load %arg14[%c10_37, %c0_38] {strides = array<i32: 2, 1>} : memref<272x16xf32, #tpu.memory_space<vmem>>, vector<128x16xf32>
    %41 = tpu.concatenate %37, %38, %39, %40 in 1 : vector<128x16xf32>, vector<128x16xf32>, vector<128x16xf32>, vector<128x16xf32> -> vector<128x64xf32>
    %42 = arith.truncf %41 : vector<128x64xf32> to vector<128x64xbf16>
    %c0_39 = arith.constant 0 : index
    %c0_40 = arith.constant 0 : index
    %43 = vector.load %arg4[%c0_39, %c0_40] : memref<64x32xbf16, #tpu.memory_space<vmem>>, vector<64x32xbf16>
    %cst_41 = arith.constant dense<0.000000e+00> : vector<128x32xf32>
    %44 = tpu.matmul %42, %43, %cst_41 {dimension_numbers = #tpu.dot_dimension_numbers<[1], [0], [0], [1], [0, 0, 1, 1], [], []>} : vector<128x64xbf16>, vector<64x32xbf16>, vector<128x32xf32> -> vector<128x32xf32>
    %c0_42 = arith.constant 0 : index
    %c0_43 = arith.constant 0 : index
    %45 = vector.load %arg9[%c0_42, %c0_43] : memref<1x32xf32, #tpu.memory_space<vmem>>, vector<1x32xf32>
    %46 = vector.broadcast %45 : vector<1x32xf32> to vector<128x32xf32>
    %47 = arith.addf %44, %46 : vector<128x32xf32>
    %cst_44 = arith.constant 0.000000e+00 : f32
    %48 = vector.broadcast %cst_44 : f32 to vector<128x32xf32>
    %49 = arith.cmpf ogt, %47, %48 : vector<128x32xf32>
    %cst_45 = arith.constant 1.000000e-01 : f32
    %50 = vector.broadcast %cst_45 : f32 to vector<128x32xf32>
    %51 = arith.mulf %50, %47 : vector<128x32xf32>
    %52 = arith.select %49, %47, %51 : vector<128x32xi1>, vector<128x32xf32>
    %cst_46 = arith.constant 0.000000e+00 : f32
    %53 = vector.broadcast %cst_46 : f32 to vector<8x32xf32>
    %c0_47 = arith.constant 0 : index
    %c0_48 = arith.constant 0 : index
    %54 = vector.load %arg15[%c0_47, %c0_48] : memref<144x32xf32, #tpu.memory_space<vmem>>, vector<8x32xf32>
    tpu.vector_store %arg15[%c0_47, %c0_48], %53 {strides = array<i32>} : memref<144x32xf32, #tpu.memory_space<vmem>>, vector<8x32xf32>,
    %c8_49 = arith.constant 8 : index
    %c0_50 = arith.constant 0 : index
    %55 = vector.load %arg15[%c8_49, %c0_50] : memref<144x32xf32, #tpu.memory_space<vmem>>, vector<128x32xf32>
    tpu.vector_store %arg15[%c8_49, %c0_50], %52 {strides = array<i32>} : memref<144x32xf32, #tpu.memory_space<vmem>>, vector<128x32xf32>,
    %c136 = arith.constant 136 : index
    %c0_51 = arith.constant 0 : index
    %56 = vector.load %arg15[%c136, %c0_51] : memref<144x32xf32, #tpu.memory_space<vmem>>, vector<8x32xf32>
    tpu.vector_store %arg15[%c136, %c0_51], %53 {strides = array<i32>} : memref<144x32xf32, #tpu.memory_space<vmem>>, vector<8x32xf32>,
    %c7_52 = arith.constant 7 : index
    %c0_53 = arith.constant 0 : index
    %57 = tpu.strided_load %arg15[%c7_52, %c0_53] {strides = array<i32: 2, 1>} : memref<144x32xf32, #tpu.memory_space<vmem>>, vector<64x32xf32>
    %c8_54 = arith.constant 8 : index
    %c0_55 = arith.constant 0 : index
    %58 = tpu.strided_load %arg15[%c8_54, %c0_55] {strides = array<i32: 2, 1>} : memref<144x32xf32, #tpu.memory_space<vmem>>, vector<64x32xf32>
    %c9_56 = arith.constant 9 : index
    %c0_57 = arith.constant 0 : index
    %59 = tpu.strided_load %arg15[%c9_56, %c0_57] {strides = array<i32: 2, 1>} : memref<144x32xf32, #tpu.memory_space<vmem>>, vector<64x32xf32>
    %c10_58 = arith.constant 10 : index
    %c0_59 = arith.constant 0 : index
    %60 = tpu.strided_load %arg15[%c10_58, %c0_59] {strides = array<i32: 2, 1>} : memref<144x32xf32, #tpu.memory_space<vmem>>, vector<64x32xf32>
    %61 = tpu.concatenate %57, %58, %59, %60 in 1 : vector<64x32xf32>, vector<64x32xf32>, vector<64x32xf32>, vector<64x32xf32> -> vector<64x128xf32>
    %62 = arith.truncf %61 : vector<64x128xf32> to vector<64x128xbf16>
    %c0_60 = arith.constant 0 : index
    %c0_61 = arith.constant 0 : index
    %63 = vector.load %arg5[%c0_60, %c0_61] : memref<128x64xbf16, #tpu.memory_space<vmem>>, vector<128x64xbf16>
    %cst_62 = arith.constant dense<0.000000e+00> : vector<64x64xf32>
    %64 = tpu.matmul %62, %63, %cst_62 {dimension_numbers = #tpu.dot_dimension_numbers<[1], [0], [0], [1], [0, 0, 1, 1], [], []>} : vector<64x128xbf16>, vector<128x64xbf16>, vector<64x64xf32> -> vector<64x64xf32>
    %c0_63 = arith.constant 0 : index
    %c0_64 = arith.constant 0 : index
    %65 = vector.load %arg10[%c0_63, %c0_64] : memref<1x64xf32, #tpu.memory_space<vmem>>, vector<1x64xf32>
    %66 = vector.broadcast %65 : vector<1x64xf32> to vector<64x64xf32>
    %67 = arith.addf %64, %66 : vector<64x64xf32>
    %cst_65 = arith.constant 0.000000e+00 : f32
    %68 = vector.broadcast %cst_65 : f32 to vector<64x64xf32>
    %69 = arith.cmpf ogt, %67, %68 : vector<64x64xf32>
    %cst_66 = arith.constant 1.000000e-01 : f32
    %70 = vector.broadcast %cst_66 : f32 to vector<64x64xf32>
    %71 = arith.mulf %70, %67 : vector<64x64xf32>
    %72 = arith.select %69, %67, %71 : vector<64x64xi1>, vector<64x64xf32>
    %cst_67 = arith.constant 0.000000e+00 : f32
    %73 = vector.broadcast %cst_67 : f32 to vector<8x64xf32>
    %c0_68 = arith.constant 0 : index
    %c0_69 = arith.constant 0 : index
    %74 = vector.load %arg16[%c0_68, %c0_69] : memref<80x64xf32, #tpu.memory_space<vmem>>, vector<8x64xf32>
    tpu.vector_store %arg16[%c0_68, %c0_69], %73 {strides = array<i32>} : memref<80x64xf32, #tpu.memory_space<vmem>>, vector<8x64xf32>,
    %c8_70 = arith.constant 8 : index
    %c0_71 = arith.constant 0 : index
    %75 = vector.load %arg16[%c8_70, %c0_71] : memref<80x64xf32, #tpu.memory_space<vmem>>, vector<64x64xf32>
    tpu.vector_store %arg16[%c8_70, %c0_71], %72 {strides = array<i32>} : memref<80x64xf32, #tpu.memory_space<vmem>>, vector<64x64xf32>,
    %c72 = arith.constant 72 : index
    %c0_72 = arith.constant 0 : index
    %76 = vector.load %arg16[%c72, %c0_72] : memref<80x64xf32, #tpu.memory_space<vmem>>, vector<8x64xf32>
    tpu.vector_store %arg16[%c72, %c0_72], %73 {strides = array<i32>} : memref<80x64xf32, #tpu.memory_space<vmem>>, vector<8x64xf32>,
    %c7_73 = arith.constant 7 : index
    %c0_74 = arith.constant 0 : index
    %77 = tpu.strided_load %arg16[%c7_73, %c0_74] {strides = array<i32: 2, 1>} : memref<80x64xf32, #tpu.memory_space<vmem>>, vector<32x64xf32>
    %c8_75 = arith.constant 8 : index
    %c0_76 = arith.constant 0 : index
    %78 = tpu.strided_load %arg16[%c8_75, %c0_76] {strides = array<i32: 2, 1>} : memref<80x64xf32, #tpu.memory_space<vmem>>, vector<32x64xf32>
    %c9_77 = arith.constant 9 : index
    %c0_78 = arith.constant 0 : index
    %79 = tpu.strided_load %arg16[%c9_77, %c0_78] {strides = array<i32: 2, 1>} : memref<80x64xf32, #tpu.memory_space<vmem>>, vector<32x64xf32>
    %c10_79 = arith.constant 10 : index
    %c0_80 = arith.constant 0 : index
    %80 = tpu.strided_load %arg16[%c10_79, %c0_80] {strides = array<i32: 2, 1>} : memref<80x64xf32, #tpu.memory_space<vmem>>, vector<32x64xf32>
    %81 = tpu.concatenate %77, %78, %79, %80 in 1 : vector<32x64xf32>, vector<32x64xf32>, vector<32x64xf32>, vector<32x64xf32> -> vector<32x256xf32>
    %82 = arith.truncf %81 : vector<32x256xf32> to vector<32x256xbf16>
    %c0_81 = arith.constant 0 : index
    %c0_82 = arith.constant 0 : index
    %83 = vector.load %arg6[%c0_81, %c0_82] : memref<256x128xbf16, #tpu.memory_space<vmem>>, vector<256x128xbf16>
    %cst_83 = arith.constant dense<0.000000e+00> : vector<32x128xf32>
    %84 = tpu.matmul %82, %83, %cst_83 {dimension_numbers = #tpu.dot_dimension_numbers<[1], [0], [0], [1], [0, 0, 1, 1], [], []>} : vector<32x256xbf16>, vector<256x128xbf16>, vector<32x128xf32> -> vector<32x128xf32>
    %c0_84 = arith.constant 0 : index
    %c0_85 = arith.constant 0 : index
    %85 = vector.load %arg11[%c0_84, %c0_85] : memref<1x128xf32, #tpu.memory_space<vmem>>, vector<1x128xf32>
    %86 = vector.broadcast %85 : vector<1x128xf32> to vector<32x128xf32>
    %87 = arith.addf %84, %86 : vector<32x128xf32>
    %cst_86 = arith.constant 0.000000e+00 : f32
    %88 = vector.broadcast %cst_86 : f32 to vector<32x128xf32>
    %89 = arith.cmpf ogt, %87, %88 : vector<32x128xf32>
    %cst_87 = arith.constant 1.000000e-01 : f32
    %90 = vector.broadcast %cst_87 : f32 to vector<32x128xf32>
    %91 = arith.mulf %90, %87 : vector<32x128xf32>
    %92 = arith.select %89, %87, %91 : vector<32x128xi1>, vector<32x128xf32>
    %93 = arith.truncf %92 : vector<32x128xf32> to vector<32x128xbf16>
    %c0_88 = arith.constant 0 : index
    %c0_89 = arith.constant 0 : index
    %c0_90 = arith.constant 0 : index
    %94 = vector.load %arg12[%c0_88, %c0_89, %c0_90] : memref<1x32x128xbf16, #tpu.memory_space<vmem>>, vector<1x32x128xbf16>
    %95 = vector.shape_cast %94 : vector<1x32x128xbf16> to vector<32x128xbf16>
    %96 = vector.shape_cast %93 : vector<32x128xbf16> to vector<1x32x128xbf16>
    tpu.vector_store %arg12[%c0_88, %c0_89, %c0_90], %96 {strides = array<i32>} : memref<1x32x128xbf16, #tpu.memory_space<vmem>>, vector<1x32x128xbf16>,
    return
  }
  func.func @transform_0(%arg0: i32) -> (i32, i32, i32) {
    %c0_i32 = arith.constant 0 : i32
    %c0_i32_0 = arith.constant 0 : i32
    %c0_i32_1 = arith.constant 0 : i32
    return %arg0, %c0_i32, %c0_i32_0 : i32, i32, i32
  }
  func.func @transform_1(%arg0: i32) -> (i32, i32) {
    %c0_i32 = arith.constant 0 : i32
    %c0_i32_0 = arith.constant 0 : i32
    %c0_i32_1 = arith.constant 0 : i32
    return %c0_i32, %c0_i32_0 : i32, i32
  }
  func.func @transform_2(%arg0: i32) -> (i32, i32) {
    %c0_i32 = arith.constant 0 : i32
    %c0_i32_0 = arith.constant 0 : i32
    %c0_i32_1 = arith.constant 0 : i32
    return %c0_i32, %c0_i32_0 : i32, i32
  }
  func.func @transform_3(%arg0: i32) -> (i32, i32) {
    %c0_i32 = arith.constant 0 : i32
    %c0_i32_0 = arith.constant 0 : i32
    %c0_i32_1 = arith.constant 0 : i32
    return %c0_i32, %c0_i32_0 : i32, i32
  }
  func.func @transform_4(%arg0: i32) -> (i32, i32) {
    %c0_i32 = arith.constant 0 : i32
    %c0_i32_0 = arith.constant 0 : i32
    %c0_i32_1 = arith.constant 0 : i32
    return %c0_i32, %c0_i32_0 : i32, i32
  }
  func.func @transform_5(%arg0: i32) -> (i32, i32) {
    %c0_i32 = arith.constant 0 : i32
    %c0_i32_0 = arith.constant 0 : i32
    %c0_i32_1 = arith.constant 0 : i32
    return %c0_i32, %c0_i32_0 : i32, i32
  }
  func.func @transform_6(%arg0: i32) -> (i32, i32) {
    %c0_i32 = arith.constant 0 : i32
    %c0_i32_0 = arith.constant 0 : i32
    %c0_i32_1 = arith.constant 0 : i32
    return %c0_i32, %c0_i32_0 : i32, i32
  }
  func.func @transform_7(%arg0: i32) -> (i32, i32) {
    %c0_i32 = arith.constant 0 : i32
    %c0_i32_0 = arith.constant 0 : i32
    %c0_i32_1 = arith.constant 0 : i32
    return %c0_i32, %c0_i32_0 : i32, i32
  }
  func.func @transform_8(%arg0: i32) -> (i32, i32) {
    %c0_i32 = arith.constant 0 : i32
    %c0_i32_0 = arith.constant 0 : i32
    %c0_i32_1 = arith.constant 0 : i32
    return %c0_i32, %c0_i32_0 : i32, i32
  }
  func.func @transform_9(%arg0: i32) -> (i32, i32) {
    %c0_i32 = arith.constant 0 : i32
    %c0_i32_0 = arith.constant 0 : i32
    %c0_i32_1 = arith.constant 0 : i32
    return %c0_i32, %c0_i32_0 : i32, i32
  }
  func.func @transform_10(%arg0: i32) -> (i32, i32) {
    %c0_i32 = arith.constant 0 : i32
    %c0_i32_0 = arith.constant 0 : i32
    %c0_i32_1 = arith.constant 0 : i32
    return %c0_i32, %c0_i32_0 : i32, i32
  }
  func.func @transform_11(%arg0: i32) -> (i32, i32, i32) {
    %c0_i32 = arith.constant 0 : i32
    %c0_i32_0 = arith.constant 0 : i32
    %c0_i32_1 = arith.constant 0 : i32
    return %arg0, %c0_i32, %c0_i32_0 : i32, i32, i32
  }
}

module attributes {stable_mosaic.version = 11 : i64} {
  func.func @_head_kernel(%arg0: i32, %arg1: memref<2x4096xbf16, #tpu.memory_space<vmem>>, %arg2: memref<4096x128xbf16, #tpu.memory_space<vmem>>, %arg3: memref<1x128xf32, #tpu.memory_space<vmem>>, %arg4: memref<2x128xf32, #tpu.memory_space<vmem>>) attributes {dimension_semantics = [#tpu.dimension_semantics<arbitrary>], iteration_bounds = array<i64: 1>, scalar_prefetch = 0 : i64, scratch_operands = 0 : i64, tpu.core_type = #tpu.core_type<tc>, window_params = [{pipeline_mode = #tpu.pipeline_mode<synchronous>, transform_indices = @transform_0, window_bounds = array<i64: 2, 4096>}, {pipeline_mode = #tpu.pipeline_mode<synchronous>, transform_indices = @transform_1, window_bounds = array<i64: 4096, 128>}, {pipeline_mode = #tpu.pipeline_mode<synchronous>, transform_indices = @transform_2, window_bounds = array<i64: 1, 128>}, {pipeline_mode = #tpu.pipeline_mode<synchronous>, transform_indices = @transform_3, window_bounds = array<i64: 2, 128>}]} {
    %c0 = arith.constant 0 : index
    %c0_0 = arith.constant 0 : index
    %0 = vector.load %arg1[%c0, %c0_0] : memref<2x4096xbf16, #tpu.memory_space<vmem>>, vector<2x4096xbf16>
    %c0_1 = arith.constant 0 : index
    %c0_2 = arith.constant 0 : index
    %1 = vector.load %arg2[%c0_1, %c0_2] : memref<4096x128xbf16, #tpu.memory_space<vmem>>, vector<4096x128xbf16>
    %cst = arith.constant dense<0.000000e+00> : vector<2x128xf32>
    %2 = tpu.matmul %0, %1, %cst {dimension_numbers = #tpu.dot_dimension_numbers<[1], [0], [0], [1], [0, 0, 1, 1], [], []>} : vector<2x4096xbf16>, vector<4096x128xbf16>, vector<2x128xf32> -> vector<2x128xf32>
    %c0_3 = arith.constant 0 : index
    %c0_4 = arith.constant 0 : index
    %3 = vector.load %arg3[%c0_3, %c0_4] : memref<1x128xf32, #tpu.memory_space<vmem>>, vector<1x128xf32>
    %4 = vector.broadcast %3 : vector<1x128xf32> to vector<2x128xf32>
    %5 = arith.addf %2, %4 : vector<2x128xf32>
    %c0_5 = arith.constant 0 : index
    %c0_6 = arith.constant 0 : index
    %6 = vector.load %arg4[%c0_5, %c0_6] : memref<2x128xf32, #tpu.memory_space<vmem>>, vector<2x128xf32>
    tpu.vector_store %arg4[%c0_5, %c0_6], %5 {strides = array<i32>} : memref<2x128xf32, #tpu.memory_space<vmem>>, vector<2x128xf32>,
    return
  }
  func.func @transform_0(%arg0: i32) -> (i32, i32) {
    %c0_i32 = arith.constant 0 : i32
    %c0_i32_0 = arith.constant 0 : i32
    %c0_i32_1 = arith.constant 0 : i32
    return %c0_i32, %c0_i32_0 : i32, i32
  }
  func.func @transform_1(%arg0: i32) -> (i32, i32) {
    %c0_i32 = arith.constant 0 : i32
    %c0_i32_0 = arith.constant 0 : i32
    %c0_i32_1 = arith.constant 0 : i32
    return %c0_i32, %c0_i32_0 : i32, i32
  }
  func.func @transform_2(%arg0: i32) -> (i32, i32) {
    %c0_i32 = arith.constant 0 : i32
    %c0_i32_0 = arith.constant 0 : i32
    %c0_i32_1 = arith.constant 0 : i32
    return %c0_i32, %c0_i32_0 : i32, i32
  }
  func.func @transform_3(%arg0: i32) -> (i32, i32) {
    %c0_i32 = arith.constant 0 : i32
    %c0_i32_0 = arith.constant 0 : i32
    %c0_i32_1 = arith.constant 0 : i32
    return %c0_i32, %c0_i32_0 : i32, i32
  }
}

</mosaic_0001>

<llo_original>
// kernel: filter_conv_forward.3
$region0: #{filter_conv_forward.3}
  #allocation0 [shape = 'u32[]', space=smem, size = 0x4, offset = 0x4, fixed_abs, tag = 'smem constant byte address 0x4 - core index']
  #allocation1 [shape = 'u32[144,128]{1,0:T(1,128)}', space=vmem, size = 0x12000, scoped, tag = 'internal scratch']
  %s0 = inlined_call_operand.vmem [shape: bf16[2,4096], index: 0, kind: input, shape index: {}]
  %s1 = inlined_call_operand.vmem [shape: bf16[4096,128], index: 1, kind: input, shape index: {}]
  %s2 = inlined_call_operand.vmem [shape: f32[1,128], index: 2, kind: input, shape index: {}]
  %s3 = inlined_call_operand.hbm [shape: f32[2,128], index: 3, kind: output, shape index: {}]
  %s4 = sld [smem:[#allocation0]]
  $region22: #{filter_conv_forward.3} parent=0
    _
  %s6 = ssub.s32 1, %s4
  %s7 = scalar_select 0, %s6, %s4
  $region1: #{filter_conv_forward.3} parent=0
    #allocation2 [shape = 'u8[1024]{0}', space=vmem, size = 0x400, scoped, tag = 'output window, operand 0, single buffered']
    #allocation3 [shape = 's32[1]{0}', space=sflag, size = 0x4, scoped, tag = 'scoped memory for filter_conv_forward.3']
    %8 = vsyncpa [#allocation3], 0
    // Predicated region
    $region2: #{filter_conv_forward.3} parent=1 // pred_check
      _
    $region3: #{filter_conv_forward.3} parent=1 // pred_check_branch
      %10 = sbr.rel (0) target = $region5
    $region4: #{filter_conv_forward.3} parent=1 // pred_region
      _
    $region5: #{filter_conv_forward.3} parent=1 // pred_fallthru
      _
    // Predicated region
    $region6: #{filter_conv_forward.3} parent=1 // pred_check
      _
    $region7: #{filter_conv_forward.3} parent=1 // pred_check_branch
      %12 = sbr.rel (0) target = $region9
    $region8: #{filter_conv_forward.3} parent=1 // pred_region
      _
    $region9: #{filter_conv_forward.3} parent=1 // pred_fallthru
      _
    // Predicated region
    $region10: #{filter_conv_forward.3} parent=1 // pred_check
      _
    $region11: #{filter_conv_forward.3} parent=1 // pred_check_branch
      %14 = sbr.rel (0) target = $region13
    $region12: #{filter_conv_forward.3} parent=1 // pred_region
      _
    $region13: #{filter_conv_forward.3} parent=1 // pred_fallthru
      _
    %v16 = vld [vmem:[%s0] sm:$0xff]
    %v17 = vld [vmem:[%s0 + $0x8] sm:$0xff]
    %v18 = vld [vmem:[%s0 + $0x10] sm:$0xff]
    %v19 = vld [vmem:[%s0 + $0x18] sm:$0xff]
    %v20 = vld [vmem:[%s1] sm:$0xf]
    %v21 = vld [vmem:[%s1 + $0x4] sm:$0xf]
    %v22 = vld [vmem:[%s1 + $0x8] sm:$0xf]
    %v23 = vld [vmem:[%s1 + $0xc] sm:$0xf]
    %v24 = vld [vmem:[%s1 + $0x10] sm:$0xf]
    %v25 = vld [vmem:[%s1 + $0x14] sm:$0xf]
    %v26 = vld [vmem:[%s1 + $0x18] sm:$0xf]
    %v27 = vld [vmem:[%s1 + $0x1c] sm:$0xf]
    %v28 = vld [vmem:[%s1 + $0x20] sm:$0xf]
    %v29 = vld [vmem:[%s1 + $0x24] sm:$0xf]
    %v30 = vld [vmem:[%s1 + $0x28] sm:$0xf]
    %v31 = vld [vmem:[%s1 + $0x2c] sm:$0xf]
    %v32 = vld [vmem:[%s1 + $0x30] sm:$0xf]
    %v33 = vld [vmem:[%s1 + $0x34] sm:$0xf]
    %v34 = vld [vmem:[%s1 + $0x38] sm:$0xf]
    %v35 = vld [vmem:[%s1 + $0x3c] sm:$0xf]
    %v36 = vld [vmem:[%s1 + $0x40] sm:$0xf]
    %v37 = vld [vmem:[%s1 + $0x44] sm:$0xf]
    %v38 = vld [vmem:[%s1 + $0x48] sm:$0xf]
    %v39 = vld [vmem:[%s1 + $0x4c] sm:$0xf]
    %v40 = vld [vmem:[%s1 + $0x50] sm:$0xf]
    %v41 = vld [vmem:[%s1 + $0x54] sm:$0xf]
    %v42 = vld [vmem:[%s1 + $0x58] sm:$0xf]
    %v43 = vld [vmem:[%s1 + $0x5c] sm:$0xf]
    %v44 = vld [vmem:[%s1 + $0x60] sm:$0xf]
    %v45 = vld [vmem:[%s1 + $0x64] sm:$0xf]
    %v46 = vld [vmem:[%s1 + $0x68] sm:$0xf]
    %v47 = vld [vmem:[%s1 + $0x6c] sm:$0xf]
    %v48 = vld [vmem:[%s1 + $0x70] sm:$0xf]
    %v49 = vld [vmem:[%s1 + $0x74] sm:$0xf]
    %v50 = vld [vmem:[%s1 + $0x78] sm:$0xf]
    %v51 = vld [vmem:[%s1 + $0x7c] sm:$0xf]
    %v52 = vld [vmem:[%s1 + $0x80] sm:$0xf]
    %v53 = vld [vmem:[%s1 + $0x84] sm:$0xf]
    %v54 = vld [vmem:[%s1 + $0x88] sm:$0xf]
    %v55 = vld [vmem:[%s1 + $0x8c] sm:$0xf]
    %v56 = vld [vmem:[%s1 + $0x90] sm:$0xf]
    %v57 = vld [vmem:[%s1 + $0x94] sm:$0xf]
    %v58 = vld [vmem:[%s1 + $0x98] sm:$0xf]
    %v59 = vld [vmem:[%s1 + $0x9c] sm:$0xf]
    %v60 = vld [vmem:[%s1 + $0xa0] sm:$0xf]
    %v61 = vld [vmem:[%s1 + $0xa4] sm:$0xf]
    %v62 = vld [vmem:[%s1 + $0xa8] sm:$0xf]
    %v63 = vld [vmem:[%s1 + $0xac] sm:$0xf]
    %v64 = vld [vmem:[%s1 + $0xb0] sm:$0xf]
    %v65 = vld [vmem:[%s1 + $0xb4] sm:$0xf]
    %v66 = vld [vmem:[%s1 + $0xb8] sm:$0xf]
    %v67 = vld [vmem:[%s1 + $0xbc] sm:$0xf]
    %v68 = vld [vmem:[%s1 + $0xc0] sm:$0xf]
    %v69 = vld [vmem:[%s1 + $0xc4] sm:$0xf]
    %v70 = vld [vmem:[%s1 + $0xc8] sm:$0xf]
    %v71 = vld [vmem:[%s1 + $0xcc] sm:$0xf]
    %v72 = vld [vmem:[%s1 + $0xd0] sm:$0xf]
    %v73 = vld [vmem:[%s1 + $0xd4] sm:$0xf]
    %v74 = vld [vmem:[%s1 + $0xd8] sm:$0xf]
    %v75 = vld [vmem:[%s1 + $0xdc] sm:$0xf]
    %v76 = vld [vmem:[%s1 + $0xe0] sm:$0xf]
    %v77 = vld [vmem:[%s1 + $0xe4] sm:$0xf]
    %v78 = vld [vmem:[%s1 + $0xe8] sm:$0xf]
    %v79 = vld [vmem:[%s1 + $0xec] sm:$0xf]
    %v80 = vld [vmem:[%s1 + $0xf0] sm:$0xf]
    %v81 = vld [vmem:[%s1 + $0xf4] sm:$0xf]
    %v82 = vld [vmem:[%s1 + $0xf8] sm:$0xf]
    %v83 = vld [vmem:[%s1 + $0xfc] sm:$0xf]
    %v84 = vld [vmem:[%s1 + $0x100] sm:$0xf]
    %v85 = vld [vmem:[%s1 + $0x104] sm:$0xf]
    %v86 = vld [vmem:[%s1 + $0x108] sm:$0xf]
    %v87 = vld [vmem:[%s1 + $0x10c] sm:$0xf]
    %v88 = vld [vmem:[%s1 + $0x110] sm:$0xf]
    %v89 = vld [vmem:[%s1 + $0x114] sm:$0xf]
    %v90 = vld [vmem:[%s1 + $0x118] sm:$0xf]
    %v91 = vld [vmem:[%s1 + $0x11c] sm:$0xf]
    %v92 = vld [vmem:[%s1 + $0x120] sm:$0xf]
    %v93 = vld [vmem:[%s1 + $0x124] sm:$0xf]
    %v94 = vld [vmem:[%s1 + $0x128] sm:$0xf]
    %v95 = vld [vmem:[%s1 + $0x12c] sm:$0xf]
    %v96 = vld [vmem:[%s1 + $0x130] sm:$0xf]
    %v97 = vld [vmem:[%s1 + $0x134] sm:$0xf]
    %v98 = vld [vmem:[%s1 + $0x138] sm:$0xf]
    %v99 = vld [vmem:[%s1 + $0x13c] sm:$0xf]
    %v100 = vld [vmem:[%s1 + $0x140] sm:$0xf]
    %v101 = vld [vmem:[%s1 + $0x144] sm:$0xf]
    %v102 = vld [vmem:[%s1 + $0x148] sm:$0xf]
    %v103 = vld [vmem:[%s1 + $0x14c] sm:$0xf]
    %v104 = vld [vmem:[%s1 + $0x150] sm:$0xf]
    %v105 = vld [vmem:[%s1 + $0x154] sm:$0xf]
    %v106 = vld [vmem:[%s1 + $0x158] sm:$0xf]
    %v107 = vld [vmem:[%s1 + $0x15c] sm:$0xf]
    %v108 = vld [vmem:[%s1 + $0x160] sm:$0xf]
    %v109 = vld [vmem:[%s1 + $0x164] sm:$0xf]
    %v110 = vld [vmem:[%s1 + $0x168] sm:$0xf]
    %v111 = vld [vmem:[%s1 + $0x16c] sm:$0xf]
    %v112 = vld [vmem:[%s1 + $0x170] sm:$0xf]
    %v113 = vld [vmem:[%s1 + $0x174] sm:$0xf]
    %v114 = vld [vmem:[%s1 + $0x178] sm:$0xf]
    %v115 = vld [vmem:[%s1 + $0x17c] sm:$0xf]
    %v116 = vld [vmem:[%s1 + $0x180] sm:$0xf]
    %v117 = vld [vmem:[%s1 + $0x184] sm:$0xf]
    %v118 = vld [vmem:[%s1 + $0x188] sm:$0xf]
    %v119 = vld [vmem:[%s1 + $0x18c] sm:$0xf]
    %v120 = vld [vmem:[%s1 + $0x190] sm:$0xf]
    %v121 = vld [vmem:[%s1 + $0x194] sm:$0xf]
    %v122 = vld [vmem:[%s1 + $0x198] sm:$0xf]
    %v123 = vld [vmem:[%s1 + $0x19c] sm:$0xf]
    %v124 = vld [vmem:[%s1 + $0x1a0] sm:$0xf]
    %v125 = vld [vmem:[%s1 + $0x1a4] sm:$0xf]
    %v126 = vld [vmem:[%s1 + $0x1a8] sm:$0xf]
    %v127 = vld [vmem:[%s1 + $0x1ac] sm:$0xf]
    %v128 = vld [vmem:[%s1 + $0x1b0] sm:$0xf]
    %v129 = vld [vmem:[%s1 + $0x1b4] sm:$0xf]
    %v130 = vld [vmem:[%s1 + $0x1b8] sm:$0xf]
    %v131 = vld [vmem:[%s1 + $0x1bc] sm:$0xf]
    %v132 = vld [vmem:[%s1 + $0x1c0] sm:$0xf]
    %v133 = vld [vmem:[%s1 + $0x1c4] sm:$0xf]
    %v134 = vld [vmem:[%s1 + $0x1c8] sm:$0xf]
    %v135 = vld [vmem:[%s1 + $0x1cc] sm:$0xf]
    %v136 = vld [vmem:[%s1 + $0x1d0] sm:$0xf]
    %v137 = vld [vmem:[%s1 + $0x1d4] sm:$0xf]
    %v138 = vld [vmem:[%s1 + $0x1d8] sm:$0xf]
    %v139 = vld [vmem:[%s1 + $0x1dc] sm:$0xf]
    %v140 = vld [vmem:[%s1 + $0x1e0] sm:$0xf]
    %v141 = vld [vmem:[%s1 + $0x1e4] sm:$0xf]
    %v142 = vld [vmem:[%s1 + $0x1e8] sm:$0xf]
    %v143 = vld [vmem:[%s1 + $0x1ec] sm:$0xf]
    %v144 = vld [vmem:[%s1 + $0x1f0] sm:$0xf]
    %v145 = vld [vmem:[%s1 + $0x1f4] sm:$0xf]
    %v146 = vld [vmem:[%s1 + $0x1f8] sm:$0xf]
    %v147 = vld [vmem:[%s1 + $0x1fc] sm:$0xf]
    %v148 = vld [vmem:[%s1 + $0x200] sm:$0xf]
    %v149 = vld [vmem:[%s1 + $0x204] sm:$0xf]
    %v150 = vld [vmem:[%s1 + $0x208] sm:$0xf]
    %v151 = vld [vmem:[%s1 + $0x20c] sm:$0xf]
    %v152 = vld [vmem:[%s1 + $0x210] sm:$0xf]
    %v153 = vld [vmem:[%s1 + $0x214] sm:$0xf]
    %v154 = vld [vmem:[%s1 + $0x218] sm:$0xf]
    %v155 = vld [vmem:[%s1 + $0x21c] sm:$0xf]
    %v156 = vld [vmem:[%s1 + $0x220] sm:$0xf]
    %v157 = vld [vmem:[%s1 + $0x224] sm:$0xf]
    %v158 = vld [vmem:[%s1 + $0x228] sm:$0xf]
    %v159 = vld [vmem:[%s1 + $0x22c] sm:$0xf]
    %v160 = vld [vmem:[%s1 + $0x230] sm:$0xf]
    %v161 = vld [vmem:[%s1 + $0x234] sm:$0xf]
    %v162 = vld [vmem:[%s1 + $0x238] sm:$0xf]
    %v163 = vld [vmem:[%s1 + $0x23c] sm:$0xf]
    %v164 = vld [vmem:[%s1 + $0x240] sm:$0xf]
    %v165 = vld [vmem:[%s1 + $0x244] sm:$0xf]
    %v166 = vld [vmem:[%s1 + $0x248] sm:$0xf]
    %v167 = vld [vmem:[%s1 + $0x24c] sm:$0xf]
    %v168 = vld [vmem:[%s1 + $0x250] sm:$0xf]
    %v169 = vld [vmem:[%s1 + $0x254] sm:$0xf]
    %v170 = vld [vmem:[%s1 + $0x258] sm:$0xf]
    %v171 = vld [vmem:[%s1 + $0x25c] sm:$0xf]
    %v172 = vld [vmem:[%s1 + $0x260] sm:$0xf]
    %v173 = vld [vmem:[%s1 + $0x264] sm:$0xf]
    %v174 = vld [vmem:[%s1 + $0x268] sm:$0xf]
    %v175 = vld [vmem:[%s1 + $0x26c] sm:$0xf]
    %v176 = vld [vmem:[%s1 + $0x270] sm:$0xf]
    %v177 = vld [vmem:[%s1 + $0x274] sm:$0xf]
    %v178 = vld [vmem:[%s1 + $0x278] sm:$0xf]
    %v179 = vld [vmem:[%s1 + $0x27c] sm:$0xf]
    %v180 = vld [vmem:[%s1 + $0x280] sm:$0xf]
    %v181 = vld [vmem:[%s1 + $0x284] sm:$0xf]
    %v182 = vld [vmem:[%s1 + $0x288] sm:$0xf]
    %v183 = vld [vmem:[%s1 + $0x28c] sm:$0xf]
    %v184 = vld [vmem:[%s1 + $0x290] sm:$0xf]
    %v185 = vld [vmem:[%s1 + $0x294] sm:$0xf]
    %v186 = vld [vmem:[%s1 + $0x298] sm:$0xf]
    %v187 = vld [vmem:[%s1 + $0x29c] sm:$0xf]
    %v188 = vld [vmem:[%s1 + $0x2a0] sm:$0xf]
    %v189 = vld [vmem:[%s1 + $0x2a4] sm:$0xf]
    %v190 = vld [vmem:[%s1 + $0x2a8] sm:$0xf]
    %v191 = vld [vmem:[%s1 + $0x2ac] sm:$0xf]
    %v192 = vld [vmem:[%s1 + $0x2b0] sm:$0xf]
    %v193 = vld [vmem:[%s1 + $0x2b4] sm:$0xf]
    %v194 = vld [vmem:[%s1 + $0x2b8] sm:$0xf]
    %v195 = vld [vmem:[%s1 + $0x2bc] sm:$0xf]
    %v196 = vld [vmem:[%s1 + $0x2c0] sm:$0xf]
    %v197 = vld [vmem:[%s1 + $0x2c4] sm:$0xf]
    %v198 = vld [vmem:[%s1 + $0x2c8] sm:$0xf]
    %v199 = vld [vmem:[%s1 + $0x2cc] sm:$0xf]
    %v200 = vld [vmem:[%s1 + $0x2d0] sm:$0xf]
    %v201 = vld [vmem:[%s1 + $0x2d4] sm:$0xf]
    %v202 = vld [vmem:[%s1 + $0x2d8] sm:$0xf]
    %v203 = vld [vmem:[%s1 + $0x2dc] sm:$0xf]
    %v204 = vld [vmem:[%s1 + $0x2e0] sm:$0xf]
    %v205 = vld [vmem:[%s1 + $0x2e4] sm:$0xf]
    %v206 = vld [vmem:[%s1 + $0x2e8] sm:$0xf]
    %v207 = vld [vmem:[%s1 + $0x2ec] sm:$0xf]
    %v208 = vld [vmem:[%s1 + $0x2f0] sm:$0xf]
    %v209 = vld [vmem:[%s1 + $0x2f4] sm:$0xf]
    %v210 = vld [vmem:[%s1 + $0x2f8] sm:$0xf]
    %v211 = vld [vmem:[%s1 + $0x2fc] sm:$0xf]
    %v212 = vld [vmem:[%s1 + $0x300] sm:$0xf]
    %v213 = vld [vmem:[%s1 + $0x304] sm:$0xf]
    %v214 = vld [vmem:[%s1 + $0x308] sm:$0xf]
    %v215 = vld [vmem:[%s1 + $0x30c] sm:$0xf]
    %v216 = vld [vmem:[%s1 + $0x310] sm:$0xf]
    %v217 = vld [vmem:[%s1 + $0x314] sm:$0xf]
    %v218 = vld [vmem:[%s1 + $0x318] sm:$0xf]
    %v219 = vld [vmem:[%s1 + $0x31c] sm:$0xf]
    %v220 = vld [vmem:[%s1 + $0x320] sm:$0xf]
    %v221 = vld [vmem:[%s1 + $0x324] sm:$0xf]
    %v222 = vld [vmem:[%s1 + $0x328] sm:$0xf]
    %v223 = vld [vmem:[%s1 + $0x32c] sm:$0xf]
    %v224 = vld [vmem:[%s1 + $0x330] sm:$0xf]
    %v225 = vld [vmem:[%s1 + $0x334] sm:$0xf]
    %v226 = vld [vmem:[%s1 + $0x338] sm:$0xf]
    %v227 = vld [vmem:[%s1 + $0x33c] sm:$0xf]
    %v228 = vld [vmem:[%s1 + $0x340] sm:$0xf]
    %v229 = vld [vmem:[%s1 + $0x344] sm:$0xf]
    %v230 = vld [vmem:[%s1 + $0x348] sm:$0xf]
    %v231 = vld [vmem:[%s1 + $0x34c] sm:$0xf]
    %v232 = vld [vmem:[%s1 + $0x350] sm:$0xf]
    %v233 = vld [vmem:[%s1 + $0x354] sm:$0xf]
    %v234 = vld [vmem:[%s1 + $0x358] sm:$0xf]
    %v235 = vld [vmem:[%s1 + $0x35c] sm:$0xf]
    %v236 = vld [vmem:[%s1 + $0x360] sm:$0xf]
    %v237 = vld [vmem:[%s1 + $0x364] sm:$0xf]
    %v238 = vld [vmem:[%s1 + $0x368] sm:$0xf]
    %v239 = vld [vmem:[%s1 + $0x36c] sm:$0xf]
    %v240 = vld [vmem:[%s1 + $0x370] sm:$0xf]
    %v241 = vld [vmem:[%s1 + $0x374] sm:$0xf]
    %v242 = vld [vmem:[%s1 + $0x378] sm:$0xf]
    %v243 = vld [vmem:[%s1 + $0x37c] sm:$0xf]
    %v244 = vld [vmem:[%s1 + $0x380] sm:$0xf]
    %v245 = vld [vmem:[%s1 + $0x384] sm:$0xf]
    %v246 = vld [vmem:[%s1 + $0x388] sm:$0xf]
    %v247 = vld [vmem:[%s1 + $0x38c] sm:$0xf]
    %v248 = vld [vmem:[%s1 + $0x390] sm:$0xf]
    %v249 = vld [vmem:[%s1 + $0x394] sm:$0xf]
    %v250 = vld [vmem:[%s1 + $0x398] sm:$0xf]
    %v251 = vld [vmem:[%s1 + $0x39c] sm:$0xf]
    %v252 = vld [vmem:[%s1 + $0x3a0] sm:$0xf]
    %v253 = vld [vmem:[%s1 + $0x3a4] sm:$0xf]
    %v254 = vld [vmem:[%s1 + $0x3a8] sm:$0xf]
    %v255 = vld [vmem:[%s1 + $0x3ac] sm:$0xf]
    %v256 = vld [vmem:[%s1 + $0x3b0] sm:$0xf]
    %v257 = vld [vmem:[%s1 + $0x3b4] sm:$0xf]
    %v258 = vld [vmem:[%s1 + $0x3b8] sm:$0xf]
    %v259 = vld [vmem:[%s1 + $0x3bc] sm:$0xf]
    %v260 = vld [vmem:[%s1 + $0x3c0] sm:$0xf]
    %v261 = vld [vmem:[%s1 + $0x3c4] sm:$0xf]
    %v262 = vld [vmem:[%s1 + $0x3c8] sm:$0xf]
    %v263 = vld [vmem:[%s1 + $0x3cc] sm:$0xf]
    %v264 = vld [vmem:[%s1 + $0x3d0] sm:$0xf]
    %v265 = vld [vmem:[%s1 + $0x3d4] sm:$0xf]
    %v266 = vld [vmem:[%s1 + $0x3d8] sm:$0xf]
    %v267 = vld [vmem:[%s1 + $0x3dc] sm:$0xf]
    %v268 = vld [vmem:[%s1 + $0x3e0] sm:$0xf]
    %v269 = vld [vmem:[%s1 + $0x3e4] sm:$0xf]
    %v270 = vld [vmem:[%s1 + $0x3e8] sm:$0xf]
    %v271 = vld [vmem:[%s1 + $0x3ec] sm:$0xf]
    %v272 = vld [vmem:[%s1 + $0x3f0] sm:$0xf]
    %v273 = vld [vmem:[%s1 + $0x3f4] sm:$0xf]
    %v274 = vld [vmem:[%s1 + $0x3f8] sm:$0xf]
    %v275 = vld [vmem:[%s1 + $0x3fc] sm:$0xf]
    %v276 = vld [vmem:[%s1 + $0x400] sm:$0xf]
    %v277 = vld [vmem:[%s1 + $0x404] sm:$0xf]
    %v278 = vld [vmem:[%s1 + $0x408] sm:$0xf]
    %v279 = vld [vmem:[%s1 + $0x40c] sm:$0xf]
    %v280 = vld [vmem:[%s1 + $0x410] sm:$0xf]
    %v281 = vld [vmem:[%s1 + $0x414] sm:$0xf]
    %v282 = vld [vmem:[%s1 + $0x418] sm:$0xf]
    %v283 = vld [vmem:[%s1 + $0x41c] sm:$0xf]
    %v284 = vld [vmem:[%s1 + $0x420] sm:$0xf]
    %v285 = vld [vmem:[%s1 + $0x424] sm:$0xf]
    %v286 = vld [vmem:[%s1 + $0x428] sm:$0xf]
    %v287 = vld [vmem:[%s1 + $0x42c] sm:$0xf]
    %v288 = vld [vmem:[%s1 + $0x430] sm:$0xf]
    %v289 = vld [vmem:[%s1 + $0x434] sm:$0xf]
    %v290 = vld [vmem:[%s1 + $0x438] sm:$0xf]
    %v291 = vld [vmem:[%s1 + $0x43c] sm:$0xf]
    %v292 = vld [vmem:[%s1 + $0x440] sm:$0xf]
    %v293 = vld [vmem:[%s1 + $0x444] sm:$0xf]
    %v294 = vld [vmem:[%s1 + $0x448] sm:$0xf]
    %v295 = vld [vmem:[%s1 + $0x44c] sm:$0xf]
    %v296 = vld [vmem:[%s1 + $0x450] sm:$0xf]
    %v297 = vld [vmem:[%s1 + $0x454] sm:$0xf]
    %v298 = vld [vmem:[%s1 + $0x458] sm:$0xf]
    %v299 = vld [vmem:[%s1 + $0x45c] sm:$0xf]
    %v300 = vld [vmem:[%s1 + $0x460] sm:$0xf]
    %v301 = vld [vmem:[%s1 + $0x464] sm:$0xf]
    %v302 = vld [vmem:[%s1 + $0x468] sm:$0xf]
    %v303 = vld [vmem:[%s1 + $0x46c] sm:$0xf]
    %v304 = vld [vmem:[%s1 + $0x470] sm:$0xf]
    %v305 = vld [vmem:[%s1 + $0x474] sm:$0xf]
    %v306 = vld [vmem:[%s1 + $0x478] sm:$0xf]
    %v307 = vld [vmem:[%s1 + $0x47c] sm:$0xf]
    %v308 = vld [vmem:[%s1 + $0x480] sm:$0xf]
    %v309 = vld [vmem:[%s1 + $0x484] sm:$0xf]
    %v310 = vld [vmem:[%s1 + $0x488] sm:$0xf]
    %v311 = vld [vmem:[%s1 + $0x48c] sm:$0xf]
    %v312 = vld [vmem:[%s1 + $0x490] sm:$0xf]
    %v313 = vld [vmem:[%s1 + $0x494] sm:$0xf]
    %v314 = vld [vmem:[%s1 + $0x498] sm:$0xf]
    %v315 = vld [vmem:[%s1 + $0x49c] sm:$0xf]
    %v316 = vld [vmem:[%s1 + $0x4a0] sm:$0xf]
    %v317 = vld [vmem:[%s1 + $0x4a4] sm:$0xf]
    %v318 = vld [vmem:[%s1 + $0x4a8] sm:$0xf]
    %v319 = vld [vmem:[%s1 + $0x4ac] sm:$0xf]
    %v320 = vld [vmem:[%s1 + $0x4b0] sm:$0xf]
    %v321 = vld [vmem:[%s1 + $0x4b4] sm:$0xf]
    %v322 = vld [vmem:[%s1 + $0x4b8] sm:$0xf]
    %v323 = vld [vmem:[%s1 + $0x4bc] sm:$0xf]
    %v324 = vld [vmem:[%s1 + $0x4c0] sm:$0xf]
    %v325 = vld [vmem:[%s1 + $0x4c4] sm:$0xf]
    %v326 = vld [vmem:[%s1 + $0x4c8] sm:$0xf]
    %v327 = vld [vmem:[%s1 + $0x4cc] sm:$0xf]
    %v328 = vld [vmem:[%s1 + $0x4d0] sm:$0xf]
    %v329 = vld [vmem:[%s1 + $0x4d4] sm:$0xf]
    %v330 = vld [vmem:[%s1 + $0x4d8] sm:$0xf]
    %v331 = vld [vmem:[%s1 + $0x4dc] sm:$0xf]
    %v332 = vld [vmem:[%s1 + $0x4e0] sm:$0xf]
    %v333 = vld [vmem:[%s1 + $0x4e4] sm:$0xf]
    %v334 = vld [vmem:[%s1 + $0x4e8] sm:$0xf]
    %v335 = vld [vmem:[%s1 + $0x4ec] sm:$0xf]
    %v336 = vld [vmem:[%s1 + $0x4f0] sm:$0xf]
    %v337 = vld [vmem:[%s1 + $0x4f4] sm:$0xf]
    %v338 = vld [vmem:[%s1 + $0x4f8] sm:$0xf]
    %v339 = vld [vmem:[%s1 + $0x4fc] sm:$0xf]
    %v340 = vld [vmem:[%s1 + $0x500] sm:$0xf]
    %v341 = vld [vmem:[%s1 + $0x504] sm:$0xf]
    %v342 = vld [vmem:[%s1 + $0x508] sm:$0xf]
    %v343 = vld [vmem:[%s1 + $0x50c] sm:$0xf]
    %v344 = vld [vmem:[%s1 + $0x510] sm:$0xf]
    %v345 = vld [vmem:[%s1 + $0x514] sm:$0xf]
    %v346 = vld [vmem:[%s1 + $0x518] sm:$0xf]
    %v347 = vld [vmem:[%s1 + $0x51c] sm:$0xf]
    %v348 = vld [vmem:[%s1 + $0x520] sm:$0xf]
    %v349 = vld [vmem:[%s1 + $0x524] sm:$0xf]
    %v350 = vld [vmem:[%s1 + $0x528] sm:$0xf]
    %v351 = vld [vmem:[%s1 + $0x52c] sm:$0xf]
    %v352 = vld [vmem:[%s1 + $0x530] sm:$0xf]
    %v353 = vld [vmem:[%s1 + $0x534] sm:$0xf]
    %v354 = vld [vmem:[%s1 + $0x538] sm:$0xf]
    %v355 = vld [vmem:[%s1 + $0x53c] sm:$0xf]
    %v356 = vld [vmem:[%s1 + $0x540] sm:$0xf]
    %v357 = vld [vmem:[%s1 + $0x544] sm:$0xf]
    %v358 = vld [vmem:[%s1 + $0x548] sm:$0xf]
    %v359 = vld [vmem:[%s1 + $0x54c] sm:$0xf]
    %v360 = vld [vmem:[%s1 + $0x550] sm:$0xf]
    %v361 = vld [vmem:[%s1 + $0x554] sm:$0xf]
    %v362 = vld [vmem:[%s1 + $0x558] sm:$0xf]
    %v363 = vld [vmem:[%s1 + $0x55c] sm:$0xf]
    %v364 = vld [vmem:[%s1 + $0x560] sm:$0xf]
    %v365 = vld [vmem:[%s1 + $0x564] sm:$0xf]
    %v366 = vld [vmem:[%s1 + $0x568] sm:$0xf]
    %v367 = vld [vmem:[%s1 + $0x56c] sm:$0xf]
    %v368 = vld [vmem:[%s1 + $0x570] sm:$0xf]
    %v369 = vld [vmem:[%s1 + $0x574] sm:$0xf]
    %v370 = vld [vmem:[%s1 + $0x578] sm:$0xf]
    %v371 = vld [vmem:[%s1 + $0x57c] sm:$0xf]
    %v372 = vld [vmem:[%s1 + $0x580] sm:$0xf]
    %v373 = vld [vmem:[%s1 + $0x584] sm:$0xf]
    %v374 = vld [vmem:[%s1 + $0x588] sm:$0xf]
    %v375 = vld [vmem:[%s1 + $0x58c] sm:$0xf]
    %v376 = vld [vmem:[%s1 + $0x590] sm:$0xf]
    %v377 = vld [vmem:[%s1 + $0x594] sm:$0xf]
    %v378 = vld [vmem:[%s1 + $0x598] sm:$0xf]
    %v379 = vld [vmem:[%s1 + $0x59c] sm:$0xf]
    %v380 = vld [vmem:[%s1 + $0x5a0] sm:$0xf]
    %v381 = vld [vmem:[%s1 + $0x5a4] sm:$0xf]
    %v382 = vld [vmem:[%s1 + $0x5a8] sm:$0xf]
    %v383 = vld [vmem:[%s1 + $0x5ac] sm:$0xf]
    %v384 = vld [vmem:[%s1 + $0x5b0] sm:$0xf]
    %v385 = vld [vmem:[%s1 + $0x5b4] sm:$0xf]
    %v386 = vld [vmem:[%s1 + $0x5b8] sm:$0xf]
    %v387 = vld [vmem:[%s1 + $0x5bc] sm:$0xf]
    %v388 = vld [vmem:[%s1 + $0x5c0] sm:$0xf]
    %v389 = vld [vmem:[%s1 + $0x5c4] sm:$0xf]
    %v390 = vld [vmem:[%s1 + $0x5c8] sm:$0xf]
    %v391 = vld [vmem:[%s1 + $0x5cc] sm:$0xf]
    %v392 = vld [vmem:[%s1 + $0x5d0] sm:$0xf]
    %v393 = vld [vmem:[%s1 + $0x5d4] sm:$0xf]
    %v394 = vld [vmem:[%s1 + $0x5d8] sm:$0xf]
    %v395 = vld [vmem:[%s1 + $0x5dc] sm:$0xf]
    %v396 = vld [vmem:[%s1 + $0x5e0] sm:$0xf]
    %v397 = vld [vmem:[%s1 + $0x5e4] sm:$0xf]
    %v398 = vld [vmem:[%s1 + $0x5e8] sm:$0xf]
    %v399 = vld [vmem:[%s1 + $0x5ec] sm:$0xf]
    %v400 = vld [vmem:[%s1 + $0x5f0] sm:$0xf]
    %v401 = vld [vmem:[%s1 + $0x5f4] sm:$0xf]
    %v402 = vld [vmem:[%s1 + $0x5f8] sm:$0xf]
    %v403 = vld [vmem:[%s1 + $0x5fc] sm:$0xf]
    %v404 = vld [vmem:[%s1 + $0x600] sm:$0xf]
    %v405 = vld [vmem:[%s1 + $0x604] sm:$0xf]
    %v406 = vld [vmem:[%s1 + $0x608] sm:$0xf]
    %v407 = vld [vmem:[%s1 + $0x60c] sm:$0xf]
    %v408 = vld [vmem:[%s1 + $0x610] sm:$0xf]
    %v409 = vld [vmem:[%s1 + $0x614] sm:$0xf]
    %v410 = vld [vmem:[%s1 + $0x618] sm:$0xf]
    %v411 = vld [vmem:[%s1 + $0x61c] sm:$0xf]
    %v412 = vld [vmem:[%s1 + $0x620] sm:$0xf]
    %v413 = vld [vmem:[%s1 + $0x624] sm:$0xf]
    %v414 = vld [vmem:[%s1 + $0x628] sm:$0xf]
    %v415 = vld [vmem:[%s1 + $0x62c] sm:$0xf]
    %v416 = vld [vmem:[%s1 + $0x630] sm:$0xf]
    %v417 = vld [vmem:[%s1 + $0x634] sm:$0xf]
    %v418 = vld [vmem:[%s1 + $0x638] sm:$0xf]
    %v419 = vld [vmem:[%s1 + $0x63c] sm:$0xf]
    %v420 = vld [vmem:[%s1 + $0x640] sm:$0xf]
    %v421 = vld [vmem:[%s1 + $0x644] sm:$0xf]
    %v422 = vld [vmem:[%s1 + $0x648] sm:$0xf]
    %v423 = vld [vmem:[%s1 + $0x64c] sm:$0xf]
    %v424 = vld [vmem:[%s1 + $0x650] sm:$0xf]
    %v425 = vld [vmem:[%s1 + $0x654] sm:$0xf]
    %v426 = vld [vmem:[%s1 + $0x658] sm:$0xf]
    %v427 = vld [vmem:[%s1 + $0x65c] sm:$0xf]
    %v428 = vld [vmem:[%s1 + $0x660] sm:$0xf]
    %v429 = vld [vmem:[%s1 + $0x664] sm:$0xf]
    %v430 = vld [vmem:[%s1 + $0x668] sm:$0xf]
    %v431 = vld [vmem:[%s1 + $0x66c] sm:$0xf]
    %v432 = vld [vmem:[%s1 + $0x670] sm:$0xf]
    %v433 = vld [vmem:[%s1 + $0x674] sm:$0xf]
    %v434 = vld [vmem:[%s1 + $0x678] sm:$0xf]
    %v435 = vld [vmem:[%s1 + $0x67c] sm:$0xf]
    %v436 = vld [vmem:[%s1 + $0x680] sm:$0xf]
    %v437 = vld [vmem:[%s1 + $0x684] sm:$0xf]
    %v438 = vld [vmem:[%s1 + $0x688] sm:$0xf]
    %v439 = vld [vmem:[%s1 + $0x68c] sm:$0xf]
    %v440 = vld [vmem:[%s1 + $0x690] sm:$0xf]
    %v441 = vld [vmem:[%s1 + $0x694] sm:$0xf]
    %v442 = vld [vmem:[%s1 + $0x698] sm:$0xf]
    %v443 = vld [vmem:[%s1 + $0x69c] sm:$0xf]
    %v444 = vld [vmem:[%s1 + $0x6a0] sm:$0xf]
    %v445 = vld [vmem:[%s1 + $0x6a4] sm:$0xf]
    %v446 = vld [vmem:[%s1 + $0x6a8] sm:$0xf]
    %v447 = vld [vmem:[%s1 + $0x6ac] sm:$0xf]
    %v448 = vld [vmem:[%s1 + $0x6b0] sm:$0xf]
    %v449 = vld [vmem:[%s1 + $0x6b4] sm:$0xf]
    %v450 = vld [vmem:[%s1 + $0x6b8] sm:$0xf]
    %v451 = vld [vmem:[%s1 + $0x6bc] sm:$0xf]
    %v452 = vld [vmem:[%s1 + $0x6c0] sm:$0xf]
    %v453 = vld [vmem:[%s1 + $0x6c4] sm:$0xf]
    %v454 = vld [vmem:[%s1 + $0x6c8] sm:$0xf]
    %v455 = vld [vmem:[%s1 + $0x6cc] sm:$0xf]
    %v456 = vld [vmem:[%s1 + $0x6d0] sm:$0xf]
    %v457 = vld [vmem:[%s1 + $0x6d4] sm:$0xf]
    %v458 = vld [vmem:[%s1 + $0x6d8] sm:$0xf]
    %v459 = vld [vmem:[%s1 + $0x6dc] sm:$0xf]
    %v460 = vld [vmem:[%s1 + $0x6e0] sm:$0xf]
    %v461 = vld [vmem:[%s1 + $0x6e4] sm:$0xf]
    %v462 = vld [vmem:[%s1 + $0x6e8] sm:$0xf]
    %v463 = vld [vmem:[%s1 + $0x6ec] sm:$0xf]
    %v464 = vld [vmem:[%s1 + $0x6f0] sm:$0xf]
    %v465 = vld [vmem:[%s1 + $0x6f4] sm:$0xf]
    %v466 = vld [vmem:[%s1 + $0x6f8] sm:$0xf]
    %v467 = vld [vmem:[%s1 + $0x6fc] sm:$0xf]
    %v468 = vld [vmem:[%s1 + $0x700] sm:$0xf]
    %v469 = vld [vmem:[%s1 + $0x704] sm:$0xf]
    %v470 = vld [vmem:[%s1 + $0x708] sm:$0xf]
    %v471 = vld [vmem:[%s1 + $0x70c] sm:$0xf]
    %v472 = vld [vmem:[%s1 + $0x710] sm:$0xf]
    %v473 = vld [vmem:[%s1 + $0x714] sm:$0xf]
    %v474 = vld [vmem:[%s1 + $0x718] sm:$0xf]
    %v475 = vld [vmem:[%s1 + $0x71c] sm:$0xf]
    %v476 = vld [vmem:[%s1 + $0x720] sm:$0xf]
    %v477 = vld [vmem:[%s1 + $0x724] sm:$0xf]
    %v478 = vld [vmem:[%s1 + $0x728] sm:$0xf]
    %v479 = vld [vmem:[%s1 + $0x72c] sm:$0xf]
    %v480 = vld [vmem:[%s1 + $0x730] sm:$0xf]
    %v481 = vld [vmem:[%s1 + $0x734] sm:$0xf]
    %v482 = vld [vmem:[%s1 + $0x738] sm:$0xf]
    %v483 = vld [vmem:[%s1 + $0x73c] sm:$0xf]
    %v484 = vld [vmem:[%s1 + $0x740] sm:$0xf]
    %v485 = vld [vmem:[%s1 + $0x744] sm:$0xf]
    %v486 = vld [vmem:[%s1 + $0x748] sm:$0xf]
    %v487 = vld [vmem:[%s1 + $0x74c] sm:$0xf]
    %v488 = vld [vmem:[%s1 + $0x750] sm:$0xf]
    %v489 = vld [vmem:[%s1 + $0x754] sm:$0xf]
    %v490 = vld [vmem:[%s1 + $0x758] sm:$0xf]
    %v491 = vld [vmem:[%s1 + $0x75c] sm:$0xf]
    %v492 = vld [vmem:[%s1 + $0x760] sm:$0xf]
    %v493 = vld [vmem:[%s1 + $0x764] sm:$0xf]
    %v494 = vld [vmem:[%s1 + $0x768] sm:$0xf]
    %v495 = vld [vmem:[%s1 + $0x76c] sm:$0xf]
    %v496 = vld [vmem:[%s1 + $0x770] sm:$0xf]
    %v497 = vld [vmem:[%s1 + $0x774] sm:$0xf]
    %v498 = vld [vmem:[%s1 + $0x778] sm:$0xf]
    %v499 = vld [vmem:[%s1 + $0x77c] sm:$0xf]
    %v500 = vld [vmem:[%s1 + $0x780] sm:$0xf]
    %v501 = vld [vmem:[%s1 + $0x784] sm:$0xf]
    %v502 = vld [vmem:[%s1 + $0x788] sm:$0xf]
    %v503 = vld [vmem:[%s1 + $0x78c] sm:$0xf]
    %v504 = vld [vmem:[%s1 + $0x790] sm:$0xf]
    %v505 = vld [vmem:[%s1 + $0x794] sm:$0xf]
    %v506 = vld [vmem:[%s1 + $0x798] sm:$0xf]
    %v507 = vld [vmem:[%s1 + $0x79c] sm:$0xf]
    %v508 = vld [vmem:[%s1 + $0x7a0] sm:$0xf]
    %v509 = vld [vmem:[%s1 + $0x7a4] sm:$0xf]
    %v510 = vld [vmem:[%s1 + $0x7a8] sm:$0xf]
    %v511 = vld [vmem:[%s1 + $0x7ac] sm:$0xf]
    %v512 = vld [vmem:[%s1 + $0x7b0] sm:$0xf]
    %v513 = vld [vmem:[%s1 + $0x7b4] sm:$0xf]
    %v514 = vld [vmem:[%s1 + $0x7b8] sm:$0xf]
    %v515 = vld [vmem:[%s1 + $0x7bc] sm:$0xf]
    %v516 = vld [vmem:[%s1 + $0x7c0] sm:$0xf]
    %v517 = vld [vmem:[%s1 + $0x7c4] sm:$0xf]
    %v518 = vld [vmem:[%s1 + $0x7c8] sm:$0xf]
    %v519 = vld [vmem:[%s1 + $0x7cc] sm:$0xf]
    %v520 = vld [vmem:[%s1 + $0x7d0] sm:$0xf]
    %v521 = vld [vmem:[%s1 + $0x7d4] sm:$0xf]
    %v522 = vld [vmem:[%s1 + $0x7d8] sm:$0xf]
    %v523 = vld [vmem:[%s1 + $0x7dc] sm:$0xf]
    %v524 = vld [vmem:[%s1 + $0x7e0] sm:$0xf]
    %v525 = vld [vmem:[%s1 + $0x7e4] sm:$0xf]
    %v526 = vld [vmem:[%s1 + $0x7e8] sm:$0xf]
    %v527 = vld [vmem:[%s1 + $0x7ec] sm:$0xf]
    %v528 = vld [vmem:[%s1 + $0x7f0] sm:$0xf]
    %v529 = vld [vmem:[%s1 + $0x7f4] sm:$0xf]
    %v530 = vld [vmem:[%s1 + $0x7f8] sm:$0xf]
    %v531 = vld [vmem:[%s1 + $0x7fc] sm:$0xf]
    %v532 = vld [vmem:[%s2] sm:$0x1]
    %v534 = vlaneseq
    %v535 = vshrl.u32 %v534, 7
    %v536 = vsub.s32 0, %v535
    %v537 = vrot.slane %v532, %v536
    %v543 = vcombine.high %v16, %v16
    %v545 = vunpack.c.l.s4 1966171168
    %v546 = vunpack.c.0.s8 %v545
    %v547 = vlaneseq
    %v548 = vshrl.u32 %v547, 7
    %v549 = vsub.s32 %v546, %v548
    %v550 = vrot.slane %v16, %v549
    %v552 = vunpack.c.l.s4 1966171168
    %v553 = vunpack.c.0.s8 %v552
    %v554 = vlaneseq
    %v555 = vshrl.u32 %v554, 7
    %v556 = vsub.s32 %v553, %v555
    %v557 = vrot.slane %v543, %v556
    %v558 = vcombine.high %v550, %v550
    %v559 = vcombine.high %v557, %v557
    %v561 = vunpack.c.l.s4 1966171168
    %v562 = vunpack.c.0.s8 %v561
    %v563 = vlaneseq
    %v564 = vshrl.u32 %v563, 7
    %v565 = vsub.s32 %v562, %v564
    %v566 = vrot.slane %v550, %v565
    %v568 = vunpack.c.l.s4 1966171168
    %v569 = vunpack.c.0.s8 %v568
    %v570 = vlaneseq
    %v571 = vshrl.u32 %v570, 7
    %v572 = vsub.s32 %v569, %v571
    %v573 = vrot.slane %v557, %v572
    %v575 = vunpack.c.l.s4 1966171168
    %v576 = vunpack.c.0.s8 %v575
    %v577 = vlaneseq
    %v578 = vshrl.u32 %v577, 7
    %v579 = vsub.s32 %v576, %v578
    %v580 = vrot.slane %v558, %v579
    %v582 = vunpack.c.l.s4 1966171168
    %v583 = vunpack.c.0.s8 %v582
    %v584 = vlaneseq
    %v585 = vshrl.u32 %v584, 7
    %v586 = vsub.s32 %v583, %v585
    %v587 = vrot.slane %v559, %v586
    %v588 = vcombine.high %v566, %v566
    %v589 = vcombine.high %v573, %v573
    %v590 = vcombine.high %v580, %v580
    %v591 = vcombine.high %v587, %v587
    %v592 = vcombine.high %v17, %v17
    %v594 = vunpack.c.l.s4 1966171168
    %v595 = vunpack.c.0.s8 %v594
    %v596 = vlaneseq
    %v597 = vshrl.u32 %v596, 7
    %v598 = vsub.s32 %v595, %v597
    %v599 = vrot.slane %v17, %v598
    %v601 = vunpack.c.l.s4 1966171168
    %v602 = vunpack.c.0.s8 %v601
    %v603 = vlaneseq
    %v604 = vshrl.u32 %v603, 7
    %v605 = vsub.s32 %v602, %v604
    %v606 = vrot.slane %v592, %v605
    %v607 = vcombine.high %v599, %v599
    %v608 = vcombine.high %v606, %v606
    %v610 = vunpack.c.l.s4 1966171168
    %v611 = vunpack.c.0.s8 %v610
    %v612 = vlaneseq
    %v613 = vshrl.u32 %v612, 7
    %v614 = vsub.s32 %v611, %v613
    %v615 = vrot.slane %v599, %v614
    %v617 = vunpack.c.l.s4 1966171168
    %v618 = vunpack.c.0.s8 %v617
    %v619 = vlaneseq
    %v620 = vshrl.u32 %v619, 7
    %v621 = vsub.s32 %v618, %v620
    %v622 = vrot.slane %v606, %v621
    %v624 = vunpack.c.l.s4 1966171168
    %v625 = vunpack.c.0.s8 %v624
    %v626 = vlaneseq
    %v627 = vshrl.u32 %v626, 7
    %v628 = vsub.s32 %v625, %v627
    %v629 = vrot.slane %v607, %v628
    %v631 = vunpack.c.l.s4 1966171168
    %v632 = vunpack.c.0.s8 %v631
    %v633 = vlaneseq
    %v634 = vshrl.u32 %v633, 7
    %v635 = vsub.s32 %v632, %v634
    %v636 = vrot.slane %v608, %v635
    %v637 = vcombine.high %v615, %v615
    %v638 = vcombine.high %v622, %v622
    %v639 = vcombine.high %v629, %v629
    %v640 = vcombine.high %v636, %v636
    %v641 = vcombine.high %v18, %v18
    %v643 = vunpack.c.l.s4 1966171168
    %v644 = vunpack.c.0.s8 %v643
    %v645 = vlaneseq
    %v646 = vshrl.u32 %v645, 7
    %v647 = vsub.s32 %v644, %v646
    %v648 = vrot.slane %v18, %v647
    %v650 = vunpack.c.l.s4 1966171168
    %v651 = vunpack.c.0.s8 %v650
    %v652 = vlaneseq
    %v653 = vshrl.u32 %v652, 7
    %v654 = vsub.s32 %v651, %v653
    %v655 = vrot.slane %v641, %v654
    %v656 = vcombine.high %v648, %v648
    %v657 = vcombine.high %v655, %v655
    %v659 = vunpack.c.l.s4 1966171168
    %v660 = vunpack.c.0.s8 %v659
    %v661 = vlaneseq
    %v662 = vshrl.u32 %v661, 7
    %v663 = vsub.s32 %v660, %v662
    %v664 = vrot.slane %v648, %v663
    %v666 = vunpack.c.l.s4 1966171168
    %v667 = vunpack.c.0.s8 %v666
    %v668 = vlaneseq
    %v669 = vshrl.u32 %v668, 7
    %v670 = vsub.s32 %v667, %v669
    %v671 = vrot.slane %v655, %v670
    %v673 = vunpack.c.l.s4 1966171168
    %v674 = vunpack.c.0.s8 %v673
    %v675 = vlaneseq
    %v676 = vshrl.u32 %v675, 7
    %v677 = vsub.s32 %v674, %v676
    %v678 = vrot.slane %v656, %v677
    %v680 = vunpack.c.l.s4 1966171168
    %v681 = vunpack.c.0.s8 %v680
    %v682 = vlaneseq
    %v683 = vshrl.u32 %v682, 7
    %v684 = vsub.s32 %v681, %v683
    %v685 = vrot.slane %v657, %v684
    %v686 = vcombine.high %v664, %v664
    %v687 = vcombine.high %v671, %v671
    %v688 = vcombine.high %v678, %v678
    %v689 = vcombine.high %v685, %v685
    %v690 = vcombine.high %v19, %v19
    %v692 = vunpack.c.l.s4 1966171168
    %v693 = vunpack.c.0.s8 %v692
    %v694 = vlaneseq
    %v695 = vshrl.u32 %v694, 7
    %v696 = vsub.s32 %v693, %v695
    %v697 = vrot.slane %v19, %v696
    %v699 = vunpack.c.l.s4 1966171168
    %v700 = vunpack.c.0.s8 %v699
    %v701 = vlaneseq
    %v702 = vshrl.u32 %v701, 7
    %v703 = vsub.s32 %v700, %v702
    %v704 = vrot.slane %v690, %v703
    %v705 = vcombine.high %v697, %v697
    %v706 = vcombine.high %v704, %v704
    %v708 = vunpack.c.l.s4 1966171168
    %v709 = vunpack.c.0.s8 %v708
    %v710 = vlaneseq
    %v711 = vshrl.u32 %v710, 7
    %v712 = vsub.s32 %v709, %v711
    %v713 = vrot.slane %v697, %v712
    %v715 = vunpack.c.l.s4 1966171168
    %v716 = vunpack.c.0.s8 %v715
    %v717 = vlaneseq
    %v718 = vshrl.u32 %v717, 7
    %v719 = vsub.s32 %v716, %v718
    %v720 = vrot.slane %v704, %v719
    %v722 = vunpack.c.l.s4 1966171168
    %v723 = vunpack.c.0.s8 %v722
    %v724 = vlaneseq
    %v725 = vshrl.u32 %v724, 7
    %v726 = vsub.s32 %v723, %v725
    %v727 = vrot.slane %v705, %v726
    %v729 = vunpack.c.l.s4 1966171168
    %v730 = vunpack.c.0.s8 %v729
    %v731 = vlaneseq
    %v732 = vshrl.u32 %v731, 7
    %v733 = vsub.s32 %v730, %v732
    %v734 = vrot.slane %v706, %v733
    %v735 = vcombine.high %v713, %v713
    %v736 = vcombine.high %v720, %v720
    %v737 = vcombine.high %v727, %v727
    %v738 = vcombine.high %v734, %v734
    %v1283 = vunpack.c.l.b16 %v20
    %v1284 = vunpack.c.l.b16 %v21
    %v1285 = vunpack.c.l.b16 %v22
    %v1286 = vunpack.c.l.b16 %v23
    %v1287 = vunpack.c.l.b16 %v24
    %v1288 = vunpack.c.l.b16 %v25
    %v1289 = vunpack.c.l.b16 %v26
    %v1290 = vunpack.c.l.b16 %v27
    %v1291 = vunpack.c.l.b16 %v28
    %v1292 = vunpack.c.l.b16 %v29
    %v1293 = vunpack.c.l.b16 %v30
    %v1294 = vunpack.c.l.b16 %v31
    %v1295 = vunpack.c.l.b16 %v32
    %v1296 = vunpack.c.l.b16 %v33
    %v1297 = vunpack.c.l.b16 %v34
    %v1298 = vunpack.c.l.b16 %v35
    %v1299 = vunpack.c.l.b16 %v36
    %v1300 = vunpack.c.l.b16 %v37
    %v1301 = vunpack.c.l.b16 %v38
    %v1302 = vunpack.c.l.b16 %v39
    %v1303 = vunpack.c.l.b16 %v40
    %v1304 = vunpack.c.l.b16 %v41
    %v1305 = vunpack.c.l.b16 %v42
    %v1306 = vunpack.c.l.b16 %v43
    %v1307 = vunpack.c.l.b16 %v44
    %v1308 = vunpack.c.l.b16 %v45
    %v1309 = vunpack.c.l.b16 %v46
    %v1310 = vunpack.c.l.b16 %v47
    %v1311 = vunpack.c.l.b16 %v48
    %v1312 = vunpack.c.l.b16 %v49
    %v1313 = vunpack.c.l.b16 %v50
    %v1314 = vunpack.c.l.b16 %v51
    %v1315 = vunpack.c.l.b16 %v52
    %v1316 = vunpack.c.l.b16 %v53
    %v1317 = vunpack.c.l.b16 %v54
    %v1318 = vunpack.c.l.b16 %v55
    %v1319 = vunpack.c.l.b16 %v56
    %v1320 = vunpack.c.l.b16 %v57
    %v1321 = vunpack.c.l.b16 %v58
    %v1322 = vunpack.c.l.b16 %v59
    %v1323 = vunpack.c.l.b16 %v60
    %v1324 = vunpack.c.l.b16 %v61
    %v1325 = vunpack.c.l.b16 %v62
    %v1326 = vunpack.c.l.b16 %v63
    %v1327 = vunpack.c.l.b16 %v64
    %v1328 = vunpack.c.l.b16 %v65
    %v1329 = vunpack.c.l.b16 %v66
    %v1330 = vunpack.c.l.b16 %v67
    %v1331 = vunpack.c.l.b16 %v68
    %v1332 = vunpack.c.l.b16 %v69
    %v1333 = vunpack.c.l.b16 %v70
    %v1334 = vunpack.c.l.b16 %v71
    %v1335 = vunpack.c.l.b16 %v72
    %v1336 = vunpack.c.l.b16 %v73
    %v1337 = vunpack.c.l.b16 %v74
    %v1338 = vunpack.c.l.b16 %v75
    %v1339 = vunpack.c.l.b16 %v76
    %v1340 = vunpack.c.l.b16 %v77
    %v1341 = vunpack.c.l.b16 %v78
    %v1342 = vunpack.c.l.b16 %v79
    %v1343 = vunpack.c.l.b16 %v80
    %v1344 = vunpack.c.l.b16 %v81
    %v1345 = vunpack.c.l.b16 %v82
    %v1346 = vunpack.c.l.b16 %v83
    %v1347 = vunpack.c.l.b16 %v84
    %v1348 = vunpack.c.l.b16 %v85
    %v1349 = vunpack.c.l.b16 %v86
    %v1350 = vunpack.c.l.b16 %v87
    %v1351 = vunpack.c.l.b16 %v88
    %v1352 = vunpack.c.l.b16 %v89
    %v1353 = vunpack.c.l.b16 %v90
    %v1354 = vunpack.c.l.b16 %v91
    %v1355 = vunpack.c.l.b16 %v92
    %v1356 = vunpack.c.l.b16 %v93
    %v1357 = vunpack.c.l.b16 %v94
    %v1358 = vunpack.c.l.b16 %v95
    %v1359 = vunpack.c.l.b16 %v96
    %v1360 = vunpack.c.l.b16 %v97
    %v1361 = vunpack.c.l.b16 %v98
    %v1362 = vunpack.c.l.b16 %v99
    %v1363 = vunpack.c.l.b16 %v100
    %v1364 = vunpack.c.l.b16 %v101
    %v1365 = vunpack.c.l.b16 %v102
    %v1366 = vunpack.c.l.b16 %v103
    %v1367 = vunpack.c.l.b16 %v104
    %v1368 = vunpack.c.l.b16 %v105
    %v1369 = vunpack.c.l.b16 %v106
    %v1370 = vunpack.c.l.b16 %v107
    %v1371 = vunpack.c.l.b16 %v108
    %v1372 = vunpack.c.l.b16 %v109
    %v1373 = vunpack.c.l.b16 %v110
    %v1374 = vunpack.c.l.b16 %v111
    %v1375 = vunpack.c.l.b16 %v112
    %v1376 = vunpack.c.l.b16 %v113
    %v1377 = vunpack.c.l.b16 %v114
    %v1378 = vunpack.c.l.b16 %v115
    %v1379 = vunpack.c.l.b16 %v116
    %v1380 = vunpack.c.l.b16 %v117
    %v1381 = vunpack.c.l.b16 %v118
    %v1382 = vunpack.c.l.b16 %v119
    %v1383 = vunpack.c.l.b16 %v120
    %v1384 = vunpack.c.l.b16 %v121
    %v1385 = vunpack.c.l.b16 %v122
    %v1386 = vunpack.c.l.b16 %v123
    %v1387 = vunpack.c.l.b16 %v124
    %v1388 = vunpack.c.l.b16 %v125
    %v1389 = vunpack.c.l.b16 %v126
    %v1390 = vunpack.c.l.b16 %v127
    %v1391 = vunpack.c.l.b16 %v128
    %v1392 = vunpack.c.l.b16 %v129
    %v1393 = vunpack.c.l.b16 %v130
    %v1394 = vunpack.c.l.b16 %v131
    %v1395 = vunpack.c.l.b16 %v132
    %v1396 = vunpack.c.l.b16 %v133
    %v1397 = vunpack.c.l.b16 %v134
    %v1398 = vunpack.c.l.b16 %v135
    %v1399 = vunpack.c.l.b16 %v136
    %v1400 = vunpack.c.l.b16 %v137
    %v1401 = vunpack.c.l.b16 %v138
    %v1402 = vunpack.c.l.b16 %v139
    %v1403 = vunpack.c.l.b16 %v140
    %v1404 = vunpack.c.l.b16 %v141
    %v1405 = vunpack.c.l.b16 %v142
    %v1406 = vunpack.c.l.b16 %v143
    %v1407 = vunpack.c.l.b16 %v144
    %v1408 = vunpack.c.l.b16 %v145
    %v1409 = vunpack.c.l.b16 %v146
    %v1410 = vunpack.c.l.b16 %v147
    %v1411 = vunpack.c.l.b16 %v148
    %v1412 = vunpack.c.l.b16 %v149
    %v1413 = vunpack.c.l.b16 %v150
    %v1414 = vunpack.c.l.b16 %v151
    %v1415 = vunpack.c.l.b16 %v152
    %v1416 = vunpack.c.l.b16 %v153
    %v1417 = vunpack.c.l.b16 %v154
    %v1418 = vunpack.c.l.b16 %v155
    %v1419 = vunpack.c.l.b16 %v156
    %v1420 = vunpack.c.l.b16 %v157
    %v1421 = vunpack.c.l.b16 %v158
    %v1422 = vunpack.c.l.b16 %v159
    %v1423 = vunpack.c.l.b16 %v160
    %v1424 = vunpack.c.l.b16 %v161
    %v1425 = vunpack.c.l.b16 %v162
    %v1426 = vunpack.c.l.b16 %v163
    %v1427 = vunpack.c.l.b16 %v164
    %v1428 = vunpack.c.l.b16 %v165
    %v1429 = vunpack.c.l.b16 %v166
    %v1430 = vunpack.c.l.b16 %v167
    %v1431 = vunpack.c.l.b16 %v168
    %v1432 = vunpack.c.l.b16 %v169
    %v1433 = vunpack.c.l.b16 %v170
    %v1434 = vunpack.c.l.b16 %v171
    %v1435 = vunpack.c.l.b16 %v172
    %v1436 = vunpack.c.l.b16 %v173
    %v1437 = vunpack.c.l.b16 %v174
    %v1438 = vunpack.c.l.b16 %v175
    %v1439 = vunpack.c.l.b16 %v176
    %v1440 = vunpack.c.l.b16 %v177
    %v1441 = vunpack.c.l.b16 %v178
    %v1442 = vunpack.c.l.b16 %v179
    %v1443 = vunpack.c.l.b16 %v180
    %v1444 = vunpack.c.l.b16 %v181
    %v1445 = vunpack.c.l.b16 %v182
    %v1446 = vunpack.c.l.b16 %v183
    %v1447 = vunpack.c.l.b16 %v184
    %v1448 = vunpack.c.l.b16 %v185
    %v1449 = vunpack.c.l.b16 %v186
    %v1450 = vunpack.c.l.b16 %v187
    %v1451 = vunpack.c.l.b16 %v188
    %v1452 = vunpack.c.l.b16 %v189
    %v1453 = vunpack.c.l.b16 %v190
    %v1454 = vunpack.c.l.b16 %v191
    %v1455 = vunpack.c.l.b16 %v192
    %v1456 = vunpack.c.l.b16 %v193
    %v1457 = vunpack.c.l.b16 %v194
    %v1458 = vunpack.c.l.b16 %v195
    %v1459 = vunpack.c.l.b16 %v196
    %v1460 = vunpack.c.l.b16 %v197
    %v1461 = vunpack.c.l.b16 %v198
    %v1462 = vunpack.c.l.b16 %v199
    %v1463 = vunpack.c.l.b16 %v200
    %v1464 = vunpack.c.l.b16 %v201
    %v1465 = vunpack.c.l.b16 %v202
    %v1466 = vunpack.c.l.b16 %v203
    %v1467 = vunpack.c.l.b16 %v204
    %v1468 = vunpack.c.l.b16 %v205
    %v1469 = vunpack.c.l.b16 %v206
    %v1470 = vunpack.c.l.b16 %v207
    %v1471 = vunpack.c.l.b16 %v208
    %v1472 = vunpack.c.l.b16 %v209
    %v1473 = vunpack.c.l.b16 %v210
    %v1474 = vunpack.c.l.b16 %v211
    %v1475 = vunpack.c.l.b16 %v212
    %v1476 = vunpack.c.l.b16 %v213
    %v1477 = vunpack.c.l.b16 %v214
    %v1478 = vunpack.c.l.b16 %v215
    %v1479 = vunpack.c.l.b16 %v216
    %v1480 = vunpack.c.l.b16 %v217
    %v1481 = vunpack.c.l.b16 %v218
    %v1482 = vunpack.c.l.b16 %v219
    %v1483 = vunpack.c.l.b16 %v220
    %v1484 = vunpack.c.l.b16 %v221
    %v1485 = vunpack.c.l.b16 %v222
    %v1486 = vunpack.c.l.b16 %v223
    %v1487 = vunpack.c.l.b16 %v224
    %v1488 = vunpack.c.l.b16 %v225
    %v1489 = vunpack.c.l.b16 %v226
    %v1490 = vunpack.c.l.b16 %v227
    %v1491 = vunpack.c.l.b16 %v228
    %v1492 = vunpack.c.l.b16 %v229
    %v1493 = vunpack.c.l.b16 %v230
    %v1494 = vunpack.c.l.b16 %v231
    %v1495 = vunpack.c.l.b16 %v232
    %v1496 = vunpack.c.l.b16 %v233
    %v1497 = vunpack.c.l.b16 %v234
    %v1498 = vunpack.c.l.b16 %v235
    %v1499 = vunpack.c.l.b16 %v236
    %v1500 = vunpack.c.l.b16 %v237
    %v1501 = vunpack.c.l.b16 %v238
    %v1502 = vunpack.c.l.b16 %v239
    %v1503 = vunpack.c.l.b16 %v240
    %v1504 = vunpack.c.l.b16 %v241
    %v1505 = vunpack.c.l.b16 %v242
    %v1506 = vunpack.c.l.b16 %v243
    %v1507 = vunpack.c.l.b16 %v244
    %v1508 = vunpack.c.l.b16 %v245
    %v1509 = vunpack.c.l.b16 %v246
    %v1510 = vunpack.c.l.b16 %v247
    %v1511 = vunpack.c.l.b16 %v248
    %v1512 = vunpack.c.l.b16 %v249
    %v1513 = vunpack.c.l.b16 %v250
    %v1514 = vunpack.c.l.b16 %v251
    %v1515 = vunpack.c.l.b16 %v252
    %v1516 = vunpack.c.l.b16 %v253
    %v1517 = vunpack.c.l.b16 %v254
    %v1518 = vunpack.c.l.b16 %v255
    %v1519 = vunpack.c.l.b16 %v256
    %v1520 = vunpack.c.l.b16 %v257
    %v1521 = vunpack.c.l.b16 %v258
    %v1522 = vunpack.c.l.b16 %v259
    %v1523 = vunpack.c.l.b16 %v260
    %v1524 = vunpack.c.l.b16 %v261
    %v1525 = vunpack.c.l.b16 %v262
    %v1526 = vunpack.c.l.b16 %v263
    %v1527 = vunpack.c.l.b16 %v264
    %v1528 = vunpack.c.l.b16 %v265
    %v1529 = vunpack.c.l.b16 %v266
    %v1530 = vunpack.c.l.b16 %v267
    %v1531 = vunpack.c.l.b16 %v268
    %v1532 = vunpack.c.l.b16 %v269
    %v1533 = vunpack.c.l.b16 %v270
    %v1534 = vunpack.c.l.b16 %v271
    %v1535 = vunpack.c.l.b16 %v272
    %v1536 = vunpack.c.l.b16 %v273
    %v1537 = vunpack.c.l.b16 %v274
    %v1538 = vunpack.c.l.b16 %v275
    %v1539 = vunpack.c.l.b16 %v276
    %v1540 = vunpack.c.l.b16 %v277
    %v1541 = vunpack.c.l.b16 %v278
    %v1542 = vunpack.c.l.b16 %v279
    %v1543 = vunpack.c.l.b16 %v280
    %v1544 = vunpack.c.l.b16 %v281
    %v1545 = vunpack.c.l.b16 %v282
    %v1546 = vunpack.c.l.b16 %v283
    %v1547 = vunpack.c.l.b16 %v284
    %v1548 = vunpack.c.l.b16 %v285
    %v1549 = vunpack.c.l.b16 %v286
    %v1550 = vunpack.c.l.b16 %v287
    %v1551 = vunpack.c.l.b16 %v288
    %v1552 = vunpack.c.l.b16 %v289
    %v1553 = vunpack.c.l.b16 %v290
    %v1554 = vunpack.c.l.b16 %v291
    %v1555 = vunpack.c.l.b16 %v292
    %v1556 = vunpack.c.l.b16 %v293
    %v1557 = vunpack.c.l.b16 %v294
    %v1558 = vunpack.c.l.b16 %v295
    %v1559 = vunpack.c.l.b16 %v296
    %v1560 = vunpack.c.l.b16 %v297
    %v1561 = vunpack.c.l.b16 %v298
    %v1562 = vunpack.c.l.b16 %v299
    %v1563 = vunpack.c.l.b16 %v300
    %v1564 = vunpack.c.l.b16 %v301
    %v1565 = vunpack.c.l.b16 %v302
    %v1566 = vunpack.c.l.b16 %v303
    %v1567 = vunpack.c.l.b16 %v304
    %v1568 = vunpack.c.l.b16 %v305
    %v1569 = vunpack.c.l.b16 %v306
    %v1570 = vunpack.c.l.b16 %v307
    %v1571 = vunpack.c.l.b16 %v308
    %v1572 = vunpack.c.l.b16 %v309
    %v1573 = vunpack.c.l.b16 %v310
    %v1574 = vunpack.c.l.b16 %v311
    %v1575 = vunpack.c.l.b16 %v312
    %v1576 = vunpack.c.l.b16 %v313
    %v1577 = vunpack.c.l.b16 %v314
    %v1578 = vunpack.c.l.b16 %v315
    %v1579 = vunpack.c.l.b16 %v316
    %v1580 = vunpack.c.l.b16 %v317
    %v1581 = vunpack.c.l.b16 %v318
    %v1582 = vunpack.c.l.b16 %v319
    %v1583 = vunpack.c.l.b16 %v320
    %v1584 = vunpack.c.l.b16 %v321
    %v1585 = vunpack.c.l.b16 %v322
    %v1586 = vunpack.c.l.b16 %v323
    %v1587 = vunpack.c.l.b16 %v324
    %v1588 = vunpack.c.l.b16 %v325
    %v1589 = vunpack.c.l.b16 %v326
    %v1590 = vunpack.c.l.b16 %v327
    %v1591 = vunpack.c.l.b16 %v328
    %v1592 = vunpack.c.l.b16 %v329
    %v1593 = vunpack.c.l.b16 %v330
    %v1594 = vunpack.c.l.b16 %v331
    %v1595 = vunpack.c.l.b16 %v332
    %v1596 = vunpack.c.l.b16 %v333
    %v1597 = vunpack.c.l.b16 %v334
    %v1598 = vunpack.c.l.b16 %v335
    %v1599 = vunpack.c.l.b16 %v336
    %v1600 = vunpack.c.l.b16 %v337
    %v1601 = vunpack.c.l.b16 %v338
    %v1602 = vunpack.c.l.b16 %v339
    %v1603 = vunpack.c.l.b16 %v340
    %v1604 = vunpack.c.l.b16 %v341
    %v1605 = vunpack.c.l.b16 %v342
    %v1606 = vunpack.c.l.b16 %v343
    %v1607 = vunpack.c.l.b16 %v344
    %v1608 = vunpack.c.l.b16 %v345
    %v1609 = vunpack.c.l.b16 %v346
    %v1610 = vunpack.c.l.b16 %v347
    %v1611 = vunpack.c.l.b16 %v348
    %v1612 = vunpack.c.l.b16 %v349
    %v1613 = vunpack.c.l.b16 %v350
    %v1614 = vunpack.c.l.b16 %v351
    %v1615 = vunpack.c.l.b16 %v352
    %v1616 = vunpack.c.l.b16 %v353
    %v1617 = vunpack.c.l.b16 %v354
    %v1618 = vunpack.c.l.b16 %v355
    %v1619 = vunpack.c.l.b16 %v356
    %v1620 = vunpack.c.l.b16 %v357
    %v1621 = vunpack.c.l.b16 %v358
    %v1622 = vunpack.c.l.b16 %v359
    %v1623 = vunpack.c.l.b16 %v360
    %v1624 = vunpack.c.l.b16 %v361
    %v1625 = vunpack.c.l.b16 %v362
    %v1626 = vunpack.c.l.b16 %v363
    %v1627 = vunpack.c.l.b16 %v364
    %v1628 = vunpack.c.l.b16 %v365
    %v1629 = vunpack.c.l.b16 %v366
    %v1630 = vunpack.c.l.b16 %v367
    %v1631 = vunpack.c.l.b16 %v368
    %v1632 = vunpack.c.l.b16 %v369
    %v1633 = vunpack.c.l.b16 %v370
    %v1634 = vunpack.c.l.b16 %v371
    %v1635 = vunpack.c.l.b16 %v372
    %v1636 = vunpack.c.l.b16 %v373
    %v1637 = vunpack.c.l.b16 %v374
    %v1638 = vunpack.c.l.b16 %v375
    %v1639 = vunpack.c.l.b16 %v376
    %v1640 = vunpack.c.l.b16 %v377
    %v1641 = vunpack.c.l.b16 %v378
    %v1642 = vunpack.c.l.b16 %v379
    %v1643 = vunpack.c.l.b16 %v380
    %v1644 = vunpack.c.l.b16 %v381
    %v1645 = vunpack.c.l.b16 %v382
    %v1646 = vunpack.c.l.b16 %v383
    %v1647 = vunpack.c.l.b16 %v384
    %v1648 = vunpack.c.l.b16 %v385
    %v1649 = vunpack.c.l.b16 %v386
    %v1650 = vunpack.c.l.b16 %v387
    %v1651 = vunpack.c.l.b16 %v388
    %v1652 = vunpack.c.l.b16 %v389
    %v1653 = vunpack.c.l.b16 %v390
    %v1654 = vunpack.c.l.b16 %v391
    %v1655 = vunpack.c.l.b16 %v392
    %v1656 = vunpack.c.l.b16 %v393
    %v1657 = vunpack.c.l.b16 %v394
    %v1658 = vunpack.c.l.b16 %v395
    %v1659 = vunpack.c.l.b16 %v396
    %v1660 = vunpack.c.l.b16 %v397
    %v1661 = vunpack.c.l.b16 %v398
    %v1662 = vunpack.c.l.b16 %v399
    %v1663 = vunpack.c.l.b16 %v400
    %v1664 = vunpack.c.l.b16 %v401
    %v1665 = vunpack.c.l.b16 %v402
    %v1666 = vunpack.c.l.b16 %v403
    %v1667 = vunpack.c.l.b16 %v404
    %v1668 = vunpack.c.l.b16 %v405
    %v1669 = vunpack.c.l.b16 %v406
    %v1670 = vunpack.c.l.b16 %v407
    %v1671 = vunpack.c.l.b16 %v408
    %v1672 = vunpack.c.l.b16 %v409
    %v1673 = vunpack.c.l.b16 %v410
    %v1674 = vunpack.c.l.b16 %v411
    %v1675 = vunpack.c.l.b16 %v412
    %v1676 = vunpack.c.l.b16 %v413
    %v1677 = vunpack.c.l.b16 %v414
    %v1678 = vunpack.c.l.b16 %v415
    %v1679 = vunpack.c.l.b16 %v416
    %v1680 = vunpack.c.l.b16 %v417
    %v1681 = vunpack.c.l.b16 %v418
    %v1682 = vunpack.c.l.b16 %v419
    %v1683 = vunpack.c.l.b16 %v420
    %v1684 = vunpack.c.l.b16 %v421
    %v1685 = vunpack.c.l.b16 %v422
    %v1686 = vunpack.c.l.b16 %v423
    %v1687 = vunpack.c.l.b16 %v424
    %v1688 = vunpack.c.l.b16 %v425
    %v1689 = vunpack.c.l.b16 %v426
    %v1690 = vunpack.c.l.b16 %v427
    %v1691 = vunpack.c.l.b16 %v428
    %v1692 = vunpack.c.l.b16 %v429
    %v1693 = vunpack.c.l.b16 %v430
    %v1694 = vunpack.c.l.b16 %v431
    %v1695 = vunpack.c.l.b16 %v432
    %v1696 = vunpack.c.l.b16 %v433
    %v1697 = vunpack.c.l.b16 %v434
    %v1698 = vunpack.c.l.b16 %v435
    %v1699 = vunpack.c.l.b16 %v436
    %v1700 = vunpack.c.l.b16 %v437
    %v1701 = vunpack.c.l.b16 %v438
    %v1702 = vunpack.c.l.b16 %v439
    %v1703 = vunpack.c.l.b16 %v440
    %v1704 = vunpack.c.l.b16 %v441
    %v1705 = vunpack.c.l.b16 %v442
    %v1706 = vunpack.c.l.b16 %v443
    %v1707 = vunpack.c.l.b16 %v444
    %v1708 = vunpack.c.l.b16 %v445
    %v1709 = vunpack.c.l.b16 %v446
    %v1710 = vunpack.c.l.b16 %v447
    %v1711 = vunpack.c.l.b16 %v448
    %v1712 = vunpack.c.l.b16 %v449
    %v1713 = vunpack.c.l.b16 %v450
    %v1714 = vunpack.c.l.b16 %v451
    %v1715 = vunpack.c.l.b16 %v452
    %v1716 = vunpack.c.l.b16 %v453
    %v1717 = vunpack.c.l.b16 %v454
    %v1718 = vunpack.c.l.b16 %v455
    %v1719 = vunpack.c.l.b16 %v456
    %v1720 = vunpack.c.l.b16 %v457
    %v1721 = vunpack.c.l.b16 %v458
    %v1722 = vunpack.c.l.b16 %v459
    %v1723 = vunpack.c.l.b16 %v460
    %v1724 = vunpack.c.l.b16 %v461
    %v1725 = vunpack.c.l.b16 %v462
    %v1726 = vunpack.c.l.b16 %v463
    %v1727 = vunpack.c.l.b16 %v464
    %v1728 = vunpack.c.l.b16 %v465
    %v1729 = vunpack.c.l.b16 %v466
    %v1730 = vunpack.c.l.b16 %v467
    %v1731 = vunpack.c.l.b16 %v468
    %v1732 = vunpack.c.l.b16 %v469
    %v1733 = vunpack.c.l.b16 %v470
    %v1734 = vunpack.c.l.b16 %v471
    %v1735 = vunpack.c.l.b16 %v472
    %v1736 = vunpack.c.l.b16 %v473
    %v1737 = vunpack.c.l.b16 %v474
    %v1738 = vunpack.c.l.b16 %v475
    %v1739 = vunpack.c.l.b16 %v476
    %v1740 = vunpack.c.l.b16 %v477
    %v1741 = vunpack.c.l.b16 %v478
    %v1742 = vunpack.c.l.b16 %v479
    %v1743 = vunpack.c.l.b16 %v480
    %v1744 = vunpack.c.l.b16 %v481
    %v1745 = vunpack.c.l.b16 %v482
    %v1746 = vunpack.c.l.b16 %v483
    %v1747 = vunpack.c.l.b16 %v484
    %v1748 = vunpack.c.l.b16 %v485
    %v1749 = vunpack.c.l.b16 %v486
    %v1750 = vunpack.c.l.b16 %v487
    %v1751 = vunpack.c.l.b16 %v488
    %v1752 = vunpack.c.l.b16 %v489
    %v1753 = vunpack.c.l.b16 %v490
    %v1754 = vunpack.c.l.b16 %v491
    %v1755 = vunpack.c.l.b16 %v492
    %v1756 = vunpack.c.l.b16 %v493
    %v1757 = vunpack.c.l.b16 %v494
    %v1758 = vunpack.c.l.b16 %v495
    %v1759 = vunpack.c.l.b16 %v496
    %v1760 = vunpack.c.l.b16 %v497
    %v1761 = vunpack.c.l.b16 %v498
    %v1762 = vunpack.c.l.b16 %v499
    %v1763 = vunpack.c.l.b16 %v500
    %v1764 = vunpack.c.l.b16 %v501
    %v1765 = vunpack.c.l.b16 %v502
    %v1766 = vunpack.c.l.b16 %v503
    %v1767 = vunpack.c.l.b16 %v504
    %v1768 = vunpack.c.l.b16 %v505
    %v1769 = vunpack.c.l.b16 %v506
    %v1770 = vunpack.c.l.b16 %v507
    %v1771 = vunpack.c.l.b16 %v508
    %v1772 = vunpack.c.l.b16 %v509
    %v1773 = vunpack.c.l.b16 %v510
    %v1774 = vunpack.c.l.b16 %v511
    %v1775 = vunpack.c.l.b16 %v512
    %v1776 = vunpack.c.l.b16 %v513
    %v1777 = vunpack.c.l.b16 %v514
    %v1778 = vunpack.c.l.b16 %v515
    %v1779 = vunpack.c.l.b16 %v516
    %v1780 = vunpack.c.l.b16 %v517
    %v1781 = vunpack.c.l.b16 %v518
    %v1782 = vunpack.c.l.b16 %v519
    %v1783 = vunpack.c.l.b16 %v520
    %v1784 = vunpack.c.l.b16 %v521
    %v1785 = vunpack.c.l.b16 %v522
    %v1786 = vunpack.c.l.b16 %v523
    %v1787 = vunpack.c.l.b16 %v524
    %v1788 = vunpack.c.l.b16 %v525
    %v1789 = vunpack.c.l.b16 %v526
    %v1790 = vunpack.c.l.b16 %v527
    %v1791 = vunpack.c.l.b16 %v528
    %v1792 = vunpack.c.l.b16 %v529
    %v1793 = vunpack.c.l.b16 %v530
    %v1794 = vunpack.c.l.b16 %v531
    %v1795 = vpack.c.b16 %v1284, %v1283
    %v1796 = vpack.c.b16 %v1286, %v1285
    %v1797 = vpack.c.b16 %v1288, %v1287
    %v1798 = vpack.c.b16 %v1290, %v1289
    %v1799 = vpack.c.b16 %v1292, %v1291
    %v1800 = vpack.c.b16 %v1294, %v1293
    %v1801 = vpack.c.b16 %v1296, %v1295
    %v1802 = vpack.c.b16 %v1298, %v1297
    %v1803 = vpack.c.b16 %v1300, %v1299
    %v1804 = vpack.c.b16 %v1302, %v1301
    %v1805 = vpack.c.b16 %v1304, %v1303
    %v1806 = vpack.c.b16 %v1306, %v1305
    %v1807 = vpack.c.b16 %v1308, %v1307
    %v1808 = vpack.c.b16 %v1310, %v1309
    %v1809 = vpack.c.b16 %v1312, %v1311
    %v1810 = vpack.c.b16 %v1314, %v1313
    %v1811 = vpack.c.b16 %v1316, %v1315
    %v1812 = vpack.c.b16 %v1318, %v1317
    %v1813 = vpack.c.b16 %v1320, %v1319
    %v1814 = vpack.c.b16 %v1322, %v1321
    %v1815 = vpack.c.b16 %v1324, %v1323
    %v1816 = vpack.c.b16 %v1326, %v1325
    %v1817 = vpack.c.b16 %v1328, %v1327
    %v1818 = vpack.c.b16 %v1330, %v1329
    %v1819 = vpack.c.b16 %v1332, %v1331
    %v1820 = vpack.c.b16 %v1334, %v1333
    %v1821 = vpack.c.b16 %v1336, %v1335
    %v1822 = vpack.c.b16 %v1338, %v1337
    %v1823 = vpack.c.b16 %v1340, %v1339
    %v1824 = vpack.c.b16 %v1342, %v1341
    %v1825 = vpack.c.b16 %v1344, %v1343
    %v1826 = vpack.c.b16 %v1346, %v1345
    %v1827 = vpack.c.b16 %v1348, %v1347
    %v1828 = vpack.c.b16 %v1350, %v1349
    %v1829 = vpack.c.b16 %v1352, %v1351
    %v1830 = vpack.c.b16 %v1354, %v1353
    %v1831 = vpack.c.b16 %v1356, %v1355
    %v1832 = vpack.c.b16 %v1358, %v1357
    %v1833 = vpack.c.b16 %v1360, %v1359
    %v1834 = vpack.c.b16 %v1362, %v1361
    %v1835 = vpack.c.b16 %v1364, %v1363
    %v1836 = vpack.c.b16 %v1366, %v1365
    %v1837 = vpack.c.b16 %v1368, %v1367
    %v1838 = vpack.c.b16 %v1370, %v1369
    %v1839 = vpack.c.b16 %v1372, %v1371
    %v1840 = vpack.c.b16 %v1374, %v1373
    %v1841 = vpack.c.b16 %v1376, %v1375
    %v1842 = vpack.c.b16 %v1378, %v1377
    %v1843 = vpack.c.b16 %v1380, %v1379
    %v1844 = vpack.c.b16 %v1382, %v1381
    %v1845 = vpack.c.b16 %v1384, %v1383
    %v1846 = vpack.c.b16 %v1386, %v1385
    %v1847 = vpack.c.b16 %v1388, %v1387
    %v1848 = vpack.c.b16 %v1390, %v1389
    %v1849 = vpack.c.b16 %v1392, %v1391
    %v1850 = vpack.c.b16 %v1394, %v1393
    %v1851 = vpack.c.b16 %v1396, %v1395
    %v1852 = vpack.c.b16 %v1398, %v1397
    %v1853 = vpack.c.b16 %v1400, %v1399
    %v1854 = vpack.c.b16 %v1402, %v1401
    %v1855 = vpack.c.b16 %v1404, %v1403
    %v1856 = vpack.c.b16 %v1406, %v1405
    %v1857 = vpack.c.b16 %v1408, %v1407
    %v1858 = vpack.c.b16 %v1410, %v1409
    %v1859 = vpack.c.b16 %v1412, %v1411
    %v1860 = vpack.c.b16 %v1414, %v1413
    %v1861 = vpack.c.b16 %v1416, %v1415
    %v1862 = vpack.c.b16 %v1418, %v1417
    %v1863 = vpack.c.b16 %v1420, %v1419
    %v1864 = vpack.c.b16 %v1422, %v1421
    %v1865 = vpack.c.b16 %v1424, %v1423
    %v1866 = vpack.c.b16 %v1426, %v1425
    %v1867 = vpack.c.b16 %v1428, %v1427
    %v1868 = vpack.c.b16 %v1430, %v1429
    %v1869 = vpack.c.b16 %v1432, %v1431
    %v1870 = vpack.c.b16 %v1434, %v1433
    %v1871 = vpack.c.b16 %v1436, %v1435
    %v1872 = vpack.c.b16 %v1438, %v1437
    %v1873 = vpack.c.b16 %v1440, %v1439
    %v1874 = vpack.c.b16 %v1442, %v1441
    %v1875 = vpack.c.b16 %v1444, %v1443
    %v1876 = vpack.c.b16 %v1446, %v1445
    %v1877 = vpack.c.b16 %v1448, %v1447
    %v1878 = vpack.c.b16 %v1450, %v1449
    %v1879 = vpack.c.b16 %v1452, %v1451
    %v1880 = vpack.c.b16 %v1454, %v1453
    %v1881 = vpack.c.b16 %v1456, %v1455
    %v1882 = vpack.c.b16 %v1458, %v1457
    %v1883 = vpack.c.b16 %v1460, %v1459
    %v1884 = vpack.c.b16 %v1462, %v1461
    %v1885 = vpack.c.b16 %v1464, %v1463
    %v1886 = vpack.c.b16 %v1466, %v1465
    %v1887 = vpack.c.b16 %v1468, %v1467
    %v1888 = vpack.c.b16 %v1470, %v1469
    %v1889 = vpack.c.b16 %v1472, %v1471
    %v1890 = vpack.c.b16 %v1474, %v1473
    %v1891 = vpack.c.b16 %v1476, %v1475
    %v1892 = vpack.c.b16 %v1478, %v1477
    %v1893 = vpack.c.b16 %v1480, %v1479
    %v1894 = vpack.c.b16 %v1482, %v1481
    %v1895 = vpack.c.b16 %v1484, %v1483
    %v1896 = vpack.c.b16 %v1486, %v1485
    %v1897 = vpack.c.b16 %v1488, %v1487
    %v1898 = vpack.c.b16 %v1490, %v1489
    %v1899 = vpack.c.b16 %v1492, %v1491
    %v1900 = vpack.c.b16 %v1494, %v1493
    %v1901 = vpack.c.b16 %v1496, %v1495
    %v1902 = vpack.c.b16 %v1498, %v1497
    %v1903 = vpack.c.b16 %v1500, %v1499
    %v1904 = vpack.c.b16 %v1502, %v1501
    %v1905 = vpack.c.b16 %v1504, %v1503
    %v1906 = vpack.c.b16 %v1506, %v1505
    %v1907 = vpack.c.b16 %v1508, %v1507
    %v1908 = vpack.c.b16 %v1510, %v1509
    %v1909 = vpack.c.b16 %v1512, %v1511
    %v1910 = vpack.c.b16 %v1514, %v1513
    %v1911 = vpack.c.b16 %v1516, %v1515
    %v1912 = vpack.c.b16 %v1518, %v1517
    %v1913 = vpack.c.b16 %v1520, %v1519
    %v1914 = vpack.c.b16 %v1522, %v1521
    %v1915 = vpack.c.b16 %v1524, %v1523
    %v1916 = vpack.c.b16 %v1526, %v1525
    %v1917 = vpack.c.b16 %v1528, %v1527
    %v1918 = vpack.c.b16 %v1530, %v1529
    %v1919 = vpack.c.b16 %v1532, %v1531
    %v1920 = vpack.c.b16 %v1534, %v1533
    %v1921 = vpack.c.b16 %v1536, %v1535
    %v1922 = vpack.c.b16 %v1538, %v1537
    %v1923 = vpack.c.b16 %v1540, %v1539
    %v1924 = vpack.c.b16 %v1542, %v1541
    %v1925 = vpack.c.b16 %v1544, %v1543
    %v1926 = vpack.c.b16 %v1546, %v1545
    %v1927 = vpack.c.b16 %v1548, %v1547
    %v1928 = vpack.c.b16 %v1550, %v1549
    %v1929 = vpack.c.b16 %v1552, %v1551
    %v1930 = vpack.c.b16 %v1554, %v1553
    %v1931 = vpack.c.b16 %v1556, %v1555
    %v1932 = vpack.c.b16 %v1558, %v1557
    %v1933 = vpack.c.b16 %v1560, %v1559
    %v1934 = vpack.c.b16 %v1562, %v1561
    %v1935 = vpack.c.b16 %v1564, %v1563
    %v1936 = vpack.c.b16 %v1566, %v1565
    %v1937 = vpack.c.b16 %v1568, %v1567
    %v1938 = vpack.c.b16 %v1570, %v1569
    %v1939 = vpack.c.b16 %v1572, %v1571
    %v1940 = vpack.c.b16 %v1574, %v1573
    %v1941 = vpack.c.b16 %v1576, %v1575
    %v1942 = vpack.c.b16 %v1578, %v1577
    %v1943 = vpack.c.b16 %v1580, %v1579
    %v1944 = vpack.c.b16 %v1582, %v1581
    %v1945 = vpack.c.b16 %v1584, %v1583
    %v1946 = vpack.c.b16 %v1586, %v1585
    %v1947 = vpack.c.b16 %v1588, %v1587
    %v1948 = vpack.c.b16 %v1590, %v1589
    %v1949 = vpack.c.b16 %v1592, %v1591
    %v1950 = vpack.c.b16 %v1594, %v1593
    %v1951 = vpack.c.b16 %v1596, %v1595
    %v1952 = vpack.c.b16 %v1598, %v1597
    %v1953 = vpack.c.b16 %v1600, %v1599
    %v1954 = vpack.c.b16 %v1602, %v1601
    %v1955 = vpack.c.b16 %v1604, %v1603
    %v1956 = vpack.c.b16 %v1606, %v1605
    %v1957 = vpack.c.b16 %v1608, %v1607
    %v1958 = vpack.c.b16 %v1610, %v1609
    %v1959 = vpack.c.b16 %v1612, %v1611
    %v1960 = vpack.c.b16 %v1614, %v1613
    %v1961 = vpack.c.b16 %v1616, %v1615
    %v1962 = vpack.c.b16 %v1618, %v1617
    %v1963 = vpack.c.b16 %v1620, %v1619
    %v1964 = vpack.c.b16 %v1622, %v1621
    %v1965 = vpack.c.b16 %v1624, %v1623
    %v1966 = vpack.c.b16 %v1626, %v1625
    %v1967 = vpack.c.b16 %v1628, %v1627
    %v1968 = vpack.c.b16 %v1630, %v1629
    %v1969 = vpack.c.b16 %v1632, %v1631
    %v1970 = vpack.c.b16 %v1634, %v1633
    %v1971 = vpack.c.b16 %v1636, %v1635
    %v1972 = vpack.c.b16 %v1638, %v1637
    %v1973 = vpack.c.b16 %v1640, %v1639
    %v1974 = vpack.c.b16 %v1642, %v1641
    %v1975 = vpack.c.b16 %v1644, %v1643
    %v1976 = vpack.c.b16 %v1646, %v1645
    %v1977 = vpack.c.b16 %v1648, %v1647
    %v1978 = vpack.c.b16 %v1650, %v1649
    %v1979 = vpack.c.b16 %v1652, %v1651
    %v1980 = vpack.c.b16 %v1654, %v1653
    %v1981 = vpack.c.b16 %v1656, %v1655
    %v1982 = vpack.c.b16 %v1658, %v1657
    %v1983 = vpack.c.b16 %v1660, %v1659
    %v1984 = vpack.c.b16 %v1662, %v1661
    %v1985 = vpack.c.b16 %v1664, %v1663
    %v1986 = vpack.c.b16 %v1666, %v1665
    %v1987 = vpack.c.b16 %v1668, %v1667
    %v1988 = vpack.c.b16 %v1670, %v1669
    %v1989 = vpack.c.b16 %v1672, %v1671
    %v1990 = vpack.c.b16 %v1674, %v1673
    %v1991 = vpack.c.b16 %v1676, %v1675
    %v1992 = vpack.c.b16 %v1678, %v1677
    %v1993 = vpack.c.b16 %v1680, %v1679
    %v1994 = vpack.c.b16 %v1682, %v1681
    %v1995 = vpack.c.b16 %v1684, %v1683
    %v1996 = vpack.c.b16 %v1686, %v1685
    %v1997 = vpack.c.b16 %v1688, %v1687
    %v1998 = vpack.c.b16 %v1690, %v1689
    %v1999 = vpack.c.b16 %v1692, %v1691
    %v2000 = vpack.c.b16 %v1694, %v1693
    %v2001 = vpack.c.b16 %v1696, %v1695
    %v2002 = vpack.c.b16 %v1698, %v1697
    %v2003 = vpack.c.b16 %v1700, %v1699
    %v2004 = vpack.c.b16 %v1702, %v1701
    %v2005 = vpack.c.b16 %v1704, %v1703
    %v2006 = vpack.c.b16 %v1706, %v1705
    %v2007 = vpack.c.b16 %v1708, %v1707
    %v2008 = vpack.c.b16 %v1710, %v1709
    %v2009 = vpack.c.b16 %v1712, %v1711
    %v2010 = vpack.c.b16 %v1714, %v1713
    %v2011 = vpack.c.b16 %v1716, %v1715
    %v2012 = vpack.c.b16 %v1718, %v1717
    %v2013 = vpack.c.b16 %v1720, %v1719
    %v2014 = vpack.c.b16 %v1722, %v1721
    %v2015 = vpack.c.b16 %v1724, %v1723
    %v2016 = vpack.c.b16 %v1726, %v1725
    %v2017 = vpack.c.b16 %v1728, %v1727
    %v2018 = vpack.c.b16 %v1730, %v1729
    %v2019 = vpack.c.b16 %v1732, %v1731
    %v2020 = vpack.c.b16 %v1734, %v1733
    %v2021 = vpack.c.b16 %v1736, %v1735
    %v2022 = vpack.c.b16 %v1738, %v1737
    %v2023 = vpack.c.b16 %v1740, %v1739
    %v2024 = vpack.c.b16 %v1742, %v1741
    %v2025 = vpack.c.b16 %v1744, %v1743
    %v2026 = vpack.c.b16 %v1746, %v1745
    %v2027 = vpack.c.b16 %v1748, %v1747
    %v2028 = vpack.c.b16 %v1750, %v1749
    %v2029 = vpack.c.b16 %v1752, %v1751
    %v2030 = vpack.c.b16 %v1754, %v1753
    %v2031 = vpack.c.b16 %v1756, %v1755
    %v2032 = vpack.c.b16 %v1758, %v1757
    %v2033 = vpack.c.b16 %v1760, %v1759
    %v2034 = vpack.c.b16 %v1762, %v1761
    %v2035 = vpack.c.b16 %v1764, %v1763
    %v2036 = vpack.c.b16 %v1766, %v1765
    %v2037 = vpack.c.b16 %v1768, %v1767
    %v2038 = vpack.c.b16 %v1770, %v1769
    %v2039 = vpack.c.b16 %v1772, %v1771
    %v2040 = vpack.c.b16 %v1774, %v1773
    %v2041 = vpack.c.b16 %v1776, %v1775
    %v2042 = vpack.c.b16 %v1778, %v1777
    %v2043 = vpack.c.b16 %v1780, %v1779
    %v2044 = vpack.c.b16 %v1782, %v1781
    %v2045 = vpack.c.b16 %v1784, %v1783
    %v2046 = vpack.c.b16 %v1786, %v1785
    %v2047 = vpack.c.b16 %v1788, %v1787
    %v2048 = vpack.c.b16 %v1790, %v1789
    %v2049 = vpack.c.b16 %v1792, %v1791
    %v2050 = vpack.c.b16 %v1794, %v1793
    %2307 = vmatprep.subr.bf16.mxu0 0
    %2308 = vmatpush1.bf16.msra.mxu0 %v1802
    %2309 = vmatprep.subr.bf16.mxu0 0
    %2310 = vmatpush1.bf16.msra.mxu0 %v1801
    %2311 = vmatprep.subr.bf16.mxu0 0
    %2312 = vmatpush1.bf16.msra.mxu0 %v1800
    %2313 = vmatprep.subr.bf16.mxu0 0
    %2314 = vmatpush1.bf16.msra.mxu0 %v1799
    %2315 = vmatprep.subr.bf16.mxu0 0
    %2316 = vmatpush1.bf16.msra.mxu0 %v1798
    %2317 = vmatprep.subr.bf16.mxu0 0
    %2318 = vmatpush1.bf16.msra.mxu0 %v1797
    %2319 = vmatprep.subr.bf16.mxu0 0
    %2320 = vmatpush1.bf16.msra.mxu0 %v1796
    %2321 = vmatprep.subr.bf16.mxu0 0
    %2322 = vmatpush1.bf16.msra.mxu0 %v1795
    %2323 = vmatprep.subr.bf16.mxu0 0
    %2324 = vmatpush2.bf16.msra.mxu0 %v1810
    %2325 = vmatprep.subr.bf16.mxu0 0
    %2326 = vmatpush2.bf16.msra.mxu0 %v1809
    %2327 = vmatprep.subr.bf16.mxu0 0
    %2328 = vmatpush2.bf16.msra.mxu0 %v1808
    %2329 = vmatprep.subr.bf16.mxu0 0
    %2330 = vmatpush2.bf16.msra.mxu0 %v1807
    %2331 = vmatprep.subr.bf16.mxu0 0
    %2332 = vmatpush2.bf16.msra.mxu0 %v1806
    %2333 = vmatprep.subr.bf16.mxu0 0
    %2334 = vmatpush2.bf16.msra.mxu0 %v1805
    %2335 = vmatprep.subr.bf16.mxu0 0
    %2336 = vmatpush2.bf16.msra.mxu0 %v1804
    %2337 = vmatprep.subr.bf16.mxu0 0
    %2338 = vmatpush2.bf16.msra.mxu0 %v1803
    %2339 = vmatprep.mubr.bf16.mxu0 %v580
    %2340 = vmatmul.mubr.bf16.gmra.mxu0 %v566
    %v2341 = vpop.f32.mrf.mxu0
    %v2342 = vadd.f32 %v537, %v2341
    %v2343 = vpop.f32.mrf.mxu0
    %v2344 = vpop.f32.mrf.mxu0
    %v2345 = vpop.f32.mrf.mxu0
    %2346 = vdwg.mxu0
    %2347 = vmatprep.subr.bf16.mxu0 0
    %2348 = vmatpush1.bf16.msra.mxu0 %v1818
    %2349 = vmatprep.subr.bf16.mxu0 0
    %2350 = vmatpush1.bf16.msra.mxu0 %v1817
    %2351 = vmatprep.subr.bf16.mxu0 0
    %2352 = vmatpush1.bf16.msra.mxu0 %v1816
    %2353 = vmatprep.subr.bf16.mxu0 0
    %2354 = vmatpush1.bf16.msra.mxu0 %v1815
    %2355 = vmatprep.subr.bf16.mxu0 0
    %2356 = vmatpush1.bf16.msra.mxu0 %v1814
    %2357 = vmatprep.subr.bf16.mxu0 0
    %2358 = vmatpush1.bf16.msra.mxu0 %v1813
    %2359 = vmatprep.subr.bf16.mxu0 0
    %2360 = vmatpush1.bf16.msra.mxu0 %v1812
    %2361 = vmatprep.subr.bf16.mxu0 0
    %2362 = vmatpush1.bf16.msra.mxu0 %v1811
    %2363 = vmatprep.subr.bf16.mxu0 0
    %2364 = vmatpush2.bf16.msra.mxu0 %v1826
    %2365 = vmatprep.subr.bf16.mxu0 0
    %2366 = vmatpush2.bf16.msra.mxu0 %v1825
    %2367 = vmatprep.subr.bf16.mxu0 0
    %2368 = vmatpush2.bf16.msra.mxu0 %v1824
    %2369 = vmatprep.subr.bf16.mxu0 0
    %2370 = vmatpush2.bf16.msra.mxu0 %v1823
    %2371 = vmatprep.subr.bf16.mxu0 0
    %2372 = vmatpush2.bf16.msra.mxu0 %v1822
    %2373 = vmatprep.subr.bf16.mxu0 0
    %2374 = vmatpush2.bf16.msra.mxu0 %v1821
    %2375 = vmatprep.subr.bf16.mxu0 0
    %2376 = vmatpush2.bf16.msra.mxu0 %v1820
    %2377 = vmatprep.subr.bf16.mxu0 0
    %2378 = vmatpush2.bf16.msra.mxu0 %v1819
    %2379 = vmatprep.mubr.bf16.mxu0 %v590
    %2380 = vmatmul.mubr.bf16.gmra.mxu0 %v588
    %v2381 = vpop.f32.mrf.mxu0
    %v2382 = vadd.f32 %v2342, %v2381
    %v2383 = vpop.f32.mrf.mxu0
    %v2384 = vpop.f32.mrf.mxu0
    %v2385 = vpop.f32.mrf.mxu0
    %2386 = vdwg.mxu0
    %2387 = vmatprep.subr.bf16.mxu0 0
    %2388 = vmatpush1.bf16.msra.mxu0 %v1834
    %2389 = vmatprep.subr.bf16.mxu0 0
    %2390 = vmatpush1.bf16.msra.mxu0 %v1833
    %2391 = vmatprep.subr.bf16.mxu0 0
    %2392 = vmatpush1.bf16.msra.mxu0 %v1832
    %2393 = vmatprep.subr.bf16.mxu0 0
    %2394 = vmatpush1.bf16.msra.mxu0 %v1831
    %2395 = vmatprep.subr.bf16.mxu0 0
    %2396 = vmatpush1.bf16.msra.mxu0 %v1830
    %2397 = vmatprep.subr.bf16.mxu0 0
    %2398 = vmatpush1.bf16.msra.mxu0 %v1829
    %2399 = vmatprep.subr.bf16.mxu0 0
    %2400 = vmatpush1.bf16.msra.mxu0 %v1828
    %2401 = vmatprep.subr.bf16.mxu0 0
    %2402 = vmatpush1.bf16.msra.mxu0 %v1827
    %2403 = vmatprep.subr.bf16.mxu0 0
    %2404 = vmatpush2.bf16.msra.mxu0 %v1842
    %2405 = vmatprep.subr.bf16.mxu0 0
    %2406 = vmatpush2.bf16.msra.mxu0 %v1841
    %2407 = vmatprep.subr.bf16.mxu0 0
    %2408 = vmatpush2.bf16.msra.mxu0 %v1840
    %2409 = vmatprep.subr.bf16.mxu0 0
    %2410 = vmatpush2.bf16.msra.mxu0 %v1839
    %2411 = vmatprep.subr.bf16.mxu0 0
    %2412 = vmatpush2.bf16.msra.mxu0 %v1838
    %2413 = vmatprep.subr.bf16.mxu0 0
    %2414 = vmatpush2.bf16.msra.mxu0 %v1837
    %2415 = vmatprep.subr.bf16.mxu0 0
    %2416 = vmatpush2.bf16.msra.mxu0 %v1836
    %2417 = vmatprep.subr.bf16.mxu0 0
    %2418 = vmatpush2.bf16.msra.mxu0 %v1835
    %2419 = vmatprep.mubr.bf16.mxu0 %v587
    %2420 = vmatmul.mubr.bf16.gmra.mxu0 %v573
    %v2421 = vpop.f32.mrf.mxu0
    %v2422 = vadd.f32 %v2382, %v2421
    %v2423 = vpop.f32.mrf.mxu0
    %v2424 = vpop.f32.mrf.mxu0
    %v2425 = vpop.f32.mrf.mxu0
    %2426 = vdwg.mxu0
    %2427 = vmatprep.subr.bf16.mxu0 0
    %2428 = vmatpush1.bf16.msra.mxu0 %v1850
    %2429 = vmatprep.subr.bf16.mxu0 0
    %2430 = vmatpush1.bf16.msra.mxu0 %v1849
    %2431 = vmatprep.subr.bf16.mxu0 0
    %2432 = vmatpush1.bf16.msra.mxu0 %v1848
    %2433 = vmatprep.subr.bf16.mxu0 0
    %2434 = vmatpush1.bf16.msra.mxu0 %v1847
    %2435 = vmatprep.subr.bf16.mxu0 0
    %2436 = vmatpush1.bf16.msra.mxu0 %v1846
    %2437 = vmatprep.subr.bf16.mxu0 0
    %2438 = vmatpush1.bf16.msra.mxu0 %v1845
    %2439 = vmatprep.subr.bf16.mxu0 0
    %2440 = vmatpush1.bf16.msra.mxu0 %v1844
    %2441 = vmatprep.subr.bf16.mxu0 0
    %2442 = vmatpush1.bf16.msra.mxu0 %v1843
    %2443 = vmatprep.subr.bf16.mxu0 0
    %2444 = vmatpush2.bf16.msra.mxu0 %v1858
    %2445 = vmatprep.subr.bf16.mxu0 0
    %2446 = vmatpush2.bf16.msra.mxu0 %v1857
    %2447 = vmatprep.subr.bf16.mxu0 0
    %2448 = vmatpush2.bf16.msra.mxu0 %v1856
    %2449 = vmatprep.subr.bf16.mxu0 0
    %2450 = vmatpush2.bf16.msra.mxu0 %v1855
    %2451 = vmatprep.subr.bf16.mxu0 0
    %2452 = vmatpush2.bf16.msra.mxu0 %v1854
    %2453 = vmatprep.subr.bf16.mxu0 0
    %2454 = vmatpush2.bf16.msra.mxu0 %v1853
    %2455 = vmatprep.subr.bf16.mxu0 0
    %2456 = vmatpush2.bf16.msra.mxu0 %v1852
    %2457 = vmatprep.subr.bf16.mxu0 0
    %2458 = vmatpush2.bf16.msra.mxu0 %v1851
    %2459 = vmatprep.mubr.bf16.mxu0 %v591
    %2460 = vmatmul.mubr.bf16.gmra.mxu0 %v589
    %v2461 = vpop.f32.mrf.mxu0
    %v2462 = vadd.f32 %v2422, %v2461
    %v2463 = vpop.f32.mrf.mxu0
    %v2464 = vpop.f32.mrf.mxu0
    %v2465 = vpop.f32.mrf.mxu0
    %2466 = vdwg.mxu0
    %2467 = vmatprep.subr.bf16.mxu0 0
    %2468 = vmatpush1.bf16.msra.mxu0 %v1866
    %2469 = vmatprep.subr.bf16.mxu0 0
    %2470 = vmatpush1.bf16.msra.mxu0 %v1865
    %2471 = vmatprep.subr.bf16.mxu0 0
    %2472 = vmatpush1.bf16.msra.mxu0 %v1864
    %2473 = vmatprep.subr.bf16.mxu0 0
    %2474 = vmatpush1.bf16.msra.mxu0 %v1863
    %2475 = vmatprep.subr.bf16.mxu0 0
    %2476 = vmatpush1.bf16.msra.mxu0 %v1862
    %2477 = vmatprep.subr.bf16.mxu0 0
    %2478 = vmatpush1.bf16.msra.mxu0 %v1861
    %2479 = vmatprep.subr.bf16.mxu0 0
    %2480 = vmatpush1.bf16.msra.mxu0 %v1860
    %2481 = vmatprep.subr.bf16.mxu0 0
    %2482 = vmatpush1.bf16.msra.mxu0 %v1859
    %2483 = vmatprep.subr.bf16.mxu0 0
    %2484 = vmatpush2.bf16.msra.mxu0 %v1874
    %2485 = vmatprep.subr.bf16.mxu0 0
    %2486 = vmatpush2.bf16.msra.mxu0 %v1873
    %2487 = vmatprep.subr.bf16.mxu0 0
    %2488 = vmatpush2.bf16.msra.mxu0 %v1872
    %2489 = vmatprep.subr.bf16.mxu0 0
    %2490 = vmatpush2.bf16.msra.mxu0 %v1871
    %2491 = vmatprep.subr.bf16.mxu0 0
    %2492 = vmatpush2.bf16.msra.mxu0 %v1870
    %2493 = vmatprep.subr.bf16.mxu0 0
    %2494 = vmatpush2.bf16.msra.mxu0 %v1869
    %2495 = vmatprep.subr.bf16.mxu0 0
    %2496 = vmatpush2.bf16.msra.mxu0 %v1868
    %2497 = vmatprep.subr.bf16.mxu0 0
    %2498 = vmatpush2.bf16.msra.mxu0 %v1867
    %2499 = vmatprep.mubr.bf16.mxu0 %v629
    %2500 = vmatmul.mubr.bf16.gmra.mxu0 %v615
    %v2501 = vpop.f32.mrf.mxu0
    %v2502 = vadd.f32 %v2462, %v2501
    %v2503 = vpop.f32.mrf.mxu0
    %v2504 = vpop.f32.mrf.mxu0
    %v2505 = vpop.f32.mrf.mxu0
    %2506 = vdwg.mxu0
    %2507 = vmatprep.subr.bf16.mxu0 0
    %2508 = vmatpush1.bf16.msra.mxu0 %v1882
    %2509 = vmatprep.subr.bf16.mxu0 0
    %2510 = vmatpush1.bf16.msra.mxu0 %v1881
    %2511 = vmatprep.subr.bf16.mxu0 0
    %2512 = vmatpush1.bf16.msra.mxu0 %v1880
    %2513 = vmatprep.subr.bf16.mxu0 0
    %2514 = vmatpush1.bf16.msra.mxu0 %v1879
    %2515 = vmatprep.subr.bf16.mxu0 0
    %2516 = vmatpush1.bf16.msra.mxu0 %v1878
    %2517 = vmatprep.subr.bf16.mxu0 0
    %2518 = vmatpush1.bf16.msra.mxu0 %v1877
    %2519 = vmatprep.subr.bf16.mxu0 0
    %2520 = vmatpush1.bf16.msra.mxu0 %v1876
    %2521 = vmatprep.subr.bf16.mxu0 0
    %2522 = vmatpush1.bf16.msra.mxu0 %v1875
    %2523 = vmatprep.subr.bf16.mxu0 0
    %2524 = vmatpush2.bf16.msra.mxu0 %v1890
    %2525 = vmatprep.subr.bf16.mxu0 0
    %2526 = vmatpush2.bf16.msra.mxu0 %v1889
    %2527 = vmatprep.subr.bf16.mxu0 0
    %2528 = vmatpush2.bf16.msra.mxu0 %v1888
    %2529 = vmatprep.subr.bf16.mxu0 0
    %2530 = vmatpush2.bf16.msra.mxu0 %v1887
    %2531 = vmatprep.subr.bf16.mxu0 0
    %2532 = vmatpush2.bf16.msra.mxu0 %v1886
    %2533 = vmatprep.subr.bf16.mxu0 0
    %2534 = vmatpush2.bf16.msra.mxu0 %v1885
    %2535 = vmatprep.subr.bf16.mxu0 0
    %2536 = vmatpush2.bf16.msra.mxu0 %v1884
    %2537 = vmatprep.subr.bf16.mxu0 0
    %2538 = vmatpush2.bf16.msra.mxu0 %v1883
    %2539 = vmatprep.mubr.bf16.mxu0 %v639
    %2540 = vmatmul.mubr.bf16.gmra.mxu0 %v637
    %v2541 = vpop.f32.mrf.mxu0
    %v2542 = vadd.f32 %v2502, %v2541
    %v2543 = vpop.f32.mrf.mxu0
    %v2544 = vpop.f32.mrf.mxu0
    %v2545 = vpop.f32.mrf.mxu0
    %2546 = vdwg.mxu0
    %2547 = vmatprep.subr.bf16.mxu0 0
    %2548 = vmatpush1.bf16.msra.mxu0 %v1898
    %2549 = vmatprep.subr.bf16.mxu0 0
    %2550 = vmatpush1.bf16.msra.mxu0 %v1897
    %2551 = vmatprep.subr.bf16.mxu0 0
    %2552 = vmatpush1.bf16.msra.mxu0 %v1896
    %2553 = vmatprep.subr.bf16.mxu0 0
    %2554 = vmatpush1.bf16.msra.mxu0 %v1895
    %2555 = vmatprep.subr.bf16.mxu0 0
    %2556 = vmatpush1.bf16.msra.mxu0 %v1894
    %2557 = vmatprep.subr.bf16.mxu0 0
    %2558 = vmatpush1.bf16.msra.mxu0 %v1893
    %2559 = vmatprep.subr.bf16.mxu0 0
    %2560 = vmatpush1.bf16.msra.mxu0 %v1892
    %2561 = vmatprep.subr.bf16.mxu0 0
    %2562 = vmatpush1.bf16.msra.mxu0 %v1891
    %2563 = vmatprep.subr.bf16.mxu0 0
    %2564 = vmatpush2.bf16.msra.mxu0 %v1906
    %2565 = vmatprep.subr.bf16.mxu0 0
    %2566 = vmatpush2.bf16.msra.mxu0 %v1905
    %2567 = vmatprep.subr.bf16.mxu0 0
    %2568 = vmatpush2.bf16.msra.mxu0 %v1904
    %2569 = vmatprep.subr.bf16.mxu0 0
    %2570 = vmatpush2.bf16.msra.mxu0 %v1903
    %2571 = vmatprep.subr.bf16.mxu0 0
    %2572 = vmatpush2.bf16.msra.mxu0 %v1902
    %2573 = vmatprep.subr.bf16.mxu0 0
    %2574 = vmatpush2.bf16.msra.mxu0 %v1901
    %2575 = vmatprep.subr.bf16.mxu0 0
    %2576 = vmatpush2.bf16.msra.mxu0 %v1900
    %2577 = vmatprep.subr.bf16.mxu0 0
    %2578 = vmatpush2.bf16.msra.mxu0 %v1899
    %2579 = vmatprep.mubr.bf16.mxu0 %v636
    %2580 = vmatmul.mubr.bf16.gmra.mxu0 %v622
    %v2581 = vpop.f32.mrf.mxu0
    %v2582 = vadd.f32 %v2542, %v2581
    %v2583 = vpop.f32.mrf.mxu0
    %v2584 = vpop.f32.mrf.mxu0
    %v2585 = vpop.f32.mrf.mxu0
    %2586 = vdwg.mxu0
    %2587 = vmatprep.subr.bf16.mxu0 0
    %2588 = vmatpush1.bf16.msra.mxu0 %v1914
    %2589 = vmatprep.subr.bf16.mxu0 0
    %2590 = vmatpush1.bf16.msra.mxu0 %v1913
    %2591 = vmatprep.subr.bf16.mxu0 0
    %2592 = vmatpush1.bf16.msra.mxu0 %v1912
    %2593 = vmatprep.subr.bf16.mxu0 0
    %2594 = vmatpush1.bf16.msra.mxu0 %v1911
    %2595 = vmatprep.subr.bf16.mxu0 0
    %2596 = vmatpush1.bf16.msra.mxu0 %v1910
    %2597 = vmatprep.subr.bf16.mxu0 0
    %2598 = vmatpush1.bf16.msra.mxu0 %v1909
    %2599 = vmatprep.subr.bf16.mxu0 0
    %2600 = vmatpush1.bf16.msra.mxu0 %v1908
    %2601 = vmatprep.subr.bf16.mxu0 0
    %2602 = vmatpush1.bf16.msra.mxu0 %v1907
    %2603 = vmatprep.subr.bf16.mxu0 0
    %2604 = vmatpush2.bf16.msra.mxu0 %v1922
    %2605 = vmatprep.subr.bf16.mxu0 0
    %2606 = vmatpush2.bf16.msra.mxu0 %v1921
    %2607 = vmatprep.subr.bf16.mxu0 0
    %2608 = vmatpush2.bf16.msra.mxu0 %v1920
    %2609 = vmatprep.subr.bf16.mxu0 0
    %2610 = vmatpush2.bf16.msra.mxu0 %v1919
    %2611 = vmatprep.subr.bf16.mxu0 0
    %2612 = vmatpush2.bf16.msra.mxu0 %v1918
    %2613 = vmatprep.subr.bf16.mxu0 0
    %2614 = vmatpush2.bf16.msra.mxu0 %v1917
    %2615 = vmatprep.subr.bf16.mxu0 0
    %2616 = vmatpush2.bf16.msra.mxu0 %v1916
    %2617 = vmatprep.subr.bf16.mxu0 0
    %2618 = vmatpush2.bf16.msra.mxu0 %v1915
    %2619 = vmatprep.mubr.bf16.mxu0 %v640
    %2620 = vmatmul.mubr.bf16.gmra.mxu0 %v638
    %v2621 = vpop.f32.mrf.mxu0
    %v2622 = vadd.f32 %v2582, %v2621
    %v2623 = vpop.f32.mrf.mxu0
    %v2624 = vpop.f32.mrf.mxu0
    %v2625 = vpop.f32.mrf.mxu0
    %2626 = vdwg.mxu0
    %2627 = vmatprep.subr.bf16.mxu0 0
    %2628 = vmatpush1.bf16.msra.mxu0 %v1930
    %2629 = vmatprep.subr.bf16.mxu0 0
    %2630 = vmatpush1.bf16.msra.mxu0 %v1929
    %2631 = vmatprep.subr.bf16.mxu0 0
    %2632 = vmatpush1.bf16.msra.mxu0 %v1928
    %2633 = vmatprep.subr.bf16.mxu0 0
    %2634 = vmatpush1.bf16.msra.mxu0 %v1927
    %2635 = vmatprep.subr.bf16.mxu0 0
    %2636 = vmatpush1.bf16.msra.mxu0 %v1926
    %2637 = vmatprep.subr.bf16.mxu0 0
    %2638 = vmatpush1.bf16.msra.mxu0 %v1925
    %2639 = vmatprep.subr.bf16.mxu0 0
    %2640 = vmatpush1.bf16.msra.mxu0 %v1924
    %2641 = vmatprep.subr.bf16.mxu0 0
    %2642 = vmatpush1.bf16.msra.mxu0 %v1923
    %2643 = vmatprep.subr.bf16.mxu0 0
    %2644 = vmatpush2.bf16.msra.mxu0 %v1938
    %2645 = vmatprep.subr.bf16.mxu0 0
    %2646 = vmatpush2.bf16.msra.mxu0 %v1937
    %2647 = vmatprep.subr.bf16.mxu0 0
    %2648 = vmatpush2.bf16.msra.mxu0 %v1936
    %2649 = vmatprep.subr.bf16.mxu0 0
    %2650 = vmatpush2.bf16.msra.mxu0 %v1935
    %2651 = vmatprep.subr.bf16.mxu0 0
    %2652 = vmatpush2.bf16.msra.mxu0 %v1934
    %2653 = vmatprep.subr.bf16.mxu0 0
    %2654 = vmatpush2.bf16.msra.mxu0 %v1933
    %2655 = vmatprep.subr.bf16.mxu0 0
    %2656 = vmatpush2.bf16.msra.mxu0 %v1932
    %2657 = vmatprep.subr.bf16.mxu0 0
    %2658 = vmatpush2.bf16.msra.mxu0 %v1931
    %2659 = vmatprep.mubr.bf16.mxu0 %v678
    %2660 = vmatmul.mubr.bf16.gmra.mxu0 %v664
    %v2661 = vpop.f32.mrf.mxu0
    %v2662 = vadd.f32 %v2622, %v2661
    %v2663 = vpop.f32.mrf.mxu0
    %v2664 = vpop.f32.mrf.mxu0
    %v2665 = vpop.f32.mrf.mxu0
    %2666 = vdwg.mxu0
    %2667 = vmatprep.subr.bf16.mxu0 0
    %2668 = vmatpush1.bf16.msra.mxu0 %v1946
    %2669 = vmatprep.subr.bf16.mxu0 0
    %2670 = vmatpush1.bf16.msra.mxu0 %v1945
    %2671 = vmatprep.subr.bf16.mxu0 0
    %2672 = vmatpush1.bf16.msra.mxu0 %v1944
    %2673 = vmatprep.subr.bf16.mxu0 0
    %2674 = vmatpush1.bf16.msra.mxu0 %v1943
    %2675 = vmatprep.subr.bf16.mxu0 0
    %2676 = vmatpush1.bf16.msra.mxu0 %v1942
    %2677 = vmatprep.subr.bf16.mxu0 0
    %2678 = vmatpush1.bf16.msra.mxu0 %v1941
    %2679 = vmatprep.subr.bf16.mxu0 0
    %2680 = vmatpush1.bf16.msra.mxu0 %v1940
    %2681 = vmatprep.subr.bf16.mxu0 0
    %2682 = vmatpush1.bf16.msra.mxu0 %v1939
    %2683 = vmatprep.subr.bf16.mxu0 0
    %2684 = vmatpush2.bf16.msra.mxu0 %v1954
    %2685 = vmatprep.subr.bf16.mxu0 0
    %2686 = vmatpush2.bf16.msra.mxu0 %v1953
    %2687 = vmatprep.subr.bf16.mxu0 0
    %2688 = vmatpush2.bf16.msra.mxu0 %v1952
    %2689 = vmatprep.subr.bf16.mxu0 0
    %2690 = vmatpush2.bf16.msra.mxu0 %v1951
    %2691 = vmatprep.subr.bf16.mxu0 0
    %2692 = vmatpush2.bf16.msra.mxu0 %v1950
    %2693 = vmatprep.subr.bf16.mxu0 0
    %2694 = vmatpush2.bf16.msra.mxu0 %v1949
    %2695 = vmatprep.subr.bf16.mxu0 0
    %2696 = vmatpush2.bf16.msra.mxu0 %v1948
    %2697 = vmatprep.subr.bf16.mxu0 0
    %2698 = vmatpush2.bf16.msra.mxu0 %v1947
    %2699 = vmatprep.mubr.bf16.mxu0 %v688
    %2700 = vmatmul.mubr.bf16.gmra.mxu0 %v686
    %v2701 = vpop.f32.mrf.mxu0
    %v2702 = vadd.f32 %v2662, %v2701
    %v2703 = vpop.f32.mrf.mxu0
    %v2704 = vpop.f32.mrf.mxu0
    %v2705 = vpop.f32.mrf.mxu0
    %2706 = vdwg.mxu0
    %2707 = vmatprep.subr.bf16.mxu0 0
    %2708 = vmatpush1.bf16.msra.mxu0 %v1962
    %2709 = vmatprep.subr.bf16.mxu0 0
    %2710 = vmatpush1.bf16.msra.mxu0 %v1961
    %2711 = vmatprep.subr.bf16.mxu0 0
    %2712 = vmatpush1.bf16.msra.mxu0 %v1960
    %2713 = vmatprep.subr.bf16.mxu0 0
    %2714 = vmatpush1.bf16.msra.mxu0 %v1959
    %2715 = vmatprep.subr.bf16.mxu0 0
    %2716 = vmatpush1.bf16.msra.mxu0 %v1958
    %2717 = vmatprep.subr.bf16.mxu0 0
    %2718 = vmatpush1.bf16.msra.mxu0 %v1957
    %2719 = vmatprep.subr.bf16.mxu0 0
    %2720 = vmatpush1.bf16.msra.mxu0 %v1956
    %2721 = vmatprep.subr.bf16.mxu0 0
    %2722 = vmatpush1.bf16.msra.mxu0 %v1955
    %2723 = vmatprep.subr.bf16.mxu0 0
    %2724 = vmatpush2.bf16.msra.mxu0 %v1970
    %2725 = vmatprep.subr.bf16.mxu0 0
    %2726 = vmatpush2.bf16.msra.mxu0 %v1969
    %2727 = vmatprep.subr.bf16.mxu0 0
    %2728 = vmatpush2.bf16.msra.mxu0 %v1968
    %2729 = vmatprep.subr.bf16.mxu0 0
    %2730 = vmatpush2.bf16.msra.mxu0 %v1967
    %2731 = vmatprep.subr.bf16.mxu0 0
    %2732 = vmatpush2.bf16.msra.mxu0 %v1966
    %2733 = vmatprep.subr.bf16.mxu0 0
    %2734 = vmatpush2.bf16.msra.mxu0 %v1965
    %2735 = vmatprep.subr.bf16.mxu0 0
    %2736 = vmatpush2.bf16.msra.mxu0 %v1964
    %2737 = vmatprep.subr.bf16.mxu0 0
    %2738 = vmatpush2.bf16.msra.mxu0 %v1963
    %2739 = vmatprep.mubr.bf16.mxu0 %v685
    %2740 = vmatmul.mubr.bf16.gmra.mxu0 %v671
    %v2741 = vpop.f32.mrf.mxu0
    %v2742 = vadd.f32 %v2702, %v2741
    %v2743 = vpop.f32.mrf.mxu0
    %v2744 = vpop.f32.mrf.mxu0
    %v2745 = vpop.f32.mrf.mxu0
    %2746 = vdwg.mxu0
    %2747 = vmatprep.subr.bf16.mxu0 0
    %2748 = vmatpush1.bf16.msra.mxu0 %v1978
    %2749 = vmatprep.subr.bf16.mxu0 0
    %2750 = vmatpush1.bf16.msra.mxu0 %v1977
    %2751 = vmatprep.subr.bf16.mxu0 0
    %2752 = vmatpush1.bf16.msra.mxu0 %v1976
    %2753 = vmatprep.subr.bf16.mxu0 0
    %2754 = vmatpush1.bf16.msra.mxu0 %v1975
    %2755 = vmatprep.subr.bf16.mxu0 0
    %2756 = vmatpush1.bf16.msra.mxu0 %v1974
    %2757 = vmatprep.subr.bf16.mxu0 0
    %2758 = vmatpush1.bf16.msra.mxu0 %v1973
    %2759 = vmatprep.subr.bf16.mxu0 0
    %2760 = vmatpush1.bf16.msra.mxu0 %v1972
    %2761 = vmatprep.subr.bf16.mxu0 0
    %2762 = vmatpush1.bf16.msra.mxu0 %v1971
    %2763 = vmatprep.subr.bf16.mxu0 0
    %2764 = vmatpush2.bf16.msra.mxu0 %v1986
    %2765 = vmatprep.subr.bf16.mxu0 0
    %2766 = vmatpush2.bf16.msra.mxu0 %v1985
    %2767 = vmatprep.subr.bf16.mxu0 0
    %2768 = vmatpush2.bf16.msra.mxu0 %v1984
    %2769 = vmatprep.subr.bf16.mxu0 0
    %2770 = vmatpush2.bf16.msra.mxu0 %v1983
    %2771 = vmatprep.subr.bf16.mxu0 0
    %2772 = vmatpush2.bf16.msra.mxu0 %v1982
    %2773 = vmatprep.subr.bf16.mxu0 0
    %2774 = vmatpush2.bf16.msra.mxu0 %v1981
    %2775 = vmatprep.subr.bf16.mxu0 0
    %2776 = vmatpush2.bf16.msra.mxu0 %v1980
    %2777 = vmatprep.subr.bf16.mxu0 0
    %2778 = vmatpush2.bf16.msra.mxu0 %v1979
    %2779 = vmatprep.mubr.bf16.mxu0 %v689
    %2780 = vmatmul.mubr.bf16.gmra.mxu0 %v687
    %v2781 = vpop.f32.mrf.mxu0
    %v2782 = vadd.f32 %v2742, %v2781
    %v2783 = vpop.f32.mrf.mxu0
    %v2784 = vpop.f32.mrf.mxu0
    %v2785 = vpop.f32.mrf.mxu0
    %2786 = vdwg.mxu0
    %2787 = vmatprep.subr.bf16.mxu0 0
    %2788 = vmatpush1.bf16.msra.mxu0 %v1994
    %2789 = vmatprep.subr.bf16.mxu0 0
    %2790 = vmatpush1.bf16.msra.mxu0 %v1993
    %2791 = vmatprep.subr.bf16.mxu0 0
    %2792 = vmatpush1.bf16.msra.mxu0 %v1992
    %2793 = vmatprep.subr.bf16.mxu0 0
    %2794 = vmatpush1.bf16.msra.mxu0 %v1991
    %2795 = vmatprep.subr.bf16.mxu0 0
    %2796 = vmatpush1.bf16.msra.mxu0 %v1990
    %2797 = vmatprep.subr.bf16.mxu0 0
    %2798 = vmatpush1.bf16.msra.mxu0 %v1989
    %2799 = vmatprep.subr.bf16.mxu0 0
    %2800 = vmatpush1.bf16.msra.mxu0 %v1988
    %2801 = vmatprep.subr.bf16.mxu0 0
    %2802 = vmatpush1.bf16.msra.mxu0 %v1987
    %2803 = vmatprep.subr.bf16.mxu0 0
    %2804 = vmatpush2.bf16.msra.mxu0 %v2002
    %2805 = vmatprep.subr.bf16.mxu0 0
    %2806 = vmatpush2.bf16.msra.mxu0 %v2001
    %2807 = vmatprep.subr.bf16.mxu0 0
    %2808 = vmatpush2.bf16.msra.mxu0 %v2000
    %2809 = vmatprep.subr.bf16.mxu0 0
    %2810 = vmatpush2.bf16.msra.mxu0 %v1999
    %2811 = vmatprep.subr.bf16.mxu0 0
    %2812 = vmatpush2.bf16.msra.mxu0 %v1998
    %2813 = vmatprep.subr.bf16.mxu0 0
    %2814 = vmatpush2.bf16.msra.mxu0 %v1997
    %2815 = vmatprep.subr.bf16.mxu0 0
    %2816 = vmatpush2.bf16.msra.mxu0 %v1996
    %2817 = vmatprep.subr.bf16.mxu0 0
    %2818 = vmatpush2.bf16.msra.mxu0 %v1995
    %2819 = vmatprep.mubr.bf16.mxu0 %v727
    %2820 = vmatmul.mubr.bf16.gmra.mxu0 %v713
    %v2821 = vpop.f32.mrf.mxu0
    %v2822 = vadd.f32 %v2782, %v2821
    %v2823 = vpop.f32.mrf.mxu0
    %v2824 = vpop.f32.mrf.mxu0
    %v2825 = vpop.f32.mrf.mxu0
    %2826 = vdwg.mxu0
    %2827 = vmatprep.subr.bf16.mxu0 0
    %2828 = vmatpush1.bf16.msra.mxu0 %v2010
    %2829 = vmatprep.subr.bf16.mxu0 0
    %2830 = vmatpush1.bf16.msra.mxu0 %v2009
    %2831 = vmatprep.subr.bf16.mxu0 0
    %2832 = vmatpush1.bf16.msra.mxu0 %v2008
    %2833 = vmatprep.subr.bf16.mxu0 0
    %2834 = vmatpush1.bf16.msra.mxu0 %v2007
    %2835 = vmatprep.subr.bf16.mxu0 0
    %2836 = vmatpush1.bf16.msra.mxu0 %v2006
    %2837 = vmatprep.subr.bf16.mxu0 0
    %2838 = vmatpush1.bf16.msra.mxu0 %v2005
    %2839 = vmatprep.subr.bf16.mxu0 0
    %2840 = vmatpush1.bf16.msra.mxu0 %v2004
    %2841 = vmatprep.subr.bf16.mxu0 0
    %2842 = vmatpush1.bf16.msra.mxu0 %v2003
    %2843 = vmatprep.subr.bf16.mxu0 0
    %2844 = vmatpush2.bf16.msra.mxu0 %v2018
    %2845 = vmatprep.subr.bf16.mxu0 0
    %2846 = vmatpush2.bf16.msra.mxu0 %v2017
    %2847 = vmatprep.subr.bf16.mxu0 0
    %2848 = vmatpush2.bf16.msra.mxu0 %v2016
    %2849 = vmatprep.subr.bf16.mxu0 0
    %2850 = vmatpush2.bf16.msra.mxu0 %v2015
    %2851 = vmatprep.subr.bf16.mxu0 0
    %2852 = vmatpush2.bf16.msra.mxu0 %v2014
    %2853 = vmatprep.subr.bf16.mxu0 0
    %2854 = vmatpush2.bf16.msra.mxu0 %v2013
    %2855 = vmatprep.subr.bf16.mxu0 0
    %2856 = vmatpush2.bf16.msra.mxu0 %v2012
    %2857 = vmatprep.subr.bf16.mxu0 0
    %2858 = vmatpush2.bf16.msra.mxu0 %v2011
    %2859 = vmatprep.mubr.bf16.mxu0 %v737
    %2860 = vmatmul.mubr.bf16.gmra.mxu0 %v735
    %v2861 = vpop.f32.mrf.mxu0
    %v2862 = vadd.f32 %v2822, %v2861
    %v2863 = vpop.f32.mrf.mxu0
    %v2864 = vpop.f32.mrf.mxu0
    %v2865 = vpop.f32.mrf.mxu0
    %2866 = vdwg.mxu0
    %2867 = vmatprep.subr.bf16.mxu0 0
    %2868 = vmatpush1.bf16.msra.mxu0 %v2026
    %2869 = vmatprep.subr.bf16.mxu0 0
    %2870 = vmatpush1.bf16.msra.mxu0 %v2025
    %2871 = vmatprep.subr.bf16.mxu0 0
    %2872 = vmatpush1.bf16.msra.mxu0 %v2024
    %2873 = vmatprep.subr.bf16.mxu0 0
    %2874 = vmatpush1.bf16.msra.mxu0 %v2023
    %2875 = vmatprep.subr.bf16.mxu0 0
    %2876 = vmatpush1.bf16.msra.mxu0 %v2022
    %2877 = vmatprep.subr.bf16.mxu0 0
    %2878 = vmatpush1.bf16.msra.mxu0 %v2021
    %2879 = vmatprep.subr.bf16.mxu0 0
    %2880 = vmatpush1.bf16.msra.mxu0 %v2020
    %2881 = vmatprep.subr.bf16.mxu0 0
    %2882 = vmatpush1.bf16.msra.mxu0 %v2019
    %2883 = vmatprep.subr.bf16.mxu0 0
    %2884 = vmatpush2.bf16.msra.mxu0 %v2034
    %2885 = vmatprep.subr.bf16.mxu0 0
    %2886 = vmatpush2.bf16.msra.mxu0 %v2033
    %2887 = vmatprep.subr.bf16.mxu0 0
    %2888 = vmatpush2.bf16.msra.mxu0 %v2032
    %2889 = vmatprep.subr.bf16.mxu0 0
    %2890 = vmatpush2.bf16.msra.mxu0 %v2031
    %2891 = vmatprep.subr.bf16.mxu0 0
    %2892 = vmatpush2.bf16.msra.mxu0 %v2030
    %2893 = vmatprep.subr.bf16.mxu0 0
    %2894 = vmatpush2.bf16.msra.mxu0 %v2029
    %2895 = vmatprep.subr.bf16.mxu0 0
    %2896 = vmatpush2.bf16.msra.mxu0 %v2028
    %2897 = vmatprep.subr.bf16.mxu0 0
    %2898 = vmatpush2.bf16.msra.mxu0 %v2027
    %2899 = vmatprep.mubr.bf16.mxu0 %v734
    %2900 = vmatmul.mubr.bf16.gmra.mxu0 %v720
    %v2901 = vpop.f32.mrf.mxu0
    %v2902 = vadd.f32 %v2862, %v2901
    %v2903 = vpop.f32.mrf.mxu0
    %v2904 = vpop.f32.mrf.mxu0
    %v2905 = vpop.f32.mrf.mxu0
    %2906 = vdwg.mxu0
    %2907 = vmatprep.subr.bf16.mxu0 0
    %2908 = vmatpush1.bf16.msra.mxu0 %v2042
    %2909 = vmatprep.subr.bf16.mxu0 0
    %2910 = vmatpush1.bf16.msra.mxu0 %v2041
    %2911 = vmatprep.subr.bf16.mxu0 0
    %2912 = vmatpush1.bf16.msra.mxu0 %v2040
    %2913 = vmatprep.subr.bf16.mxu0 0
    %2914 = vmatpush1.bf16.msra.mxu0 %v2039
    %2915 = vmatprep.subr.bf16.mxu0 0
    %2916 = vmatpush1.bf16.msra.mxu0 %v2038
    %2917 = vmatprep.subr.bf16.mxu0 0
    %2918 = vmatpush1.bf16.msra.mxu0 %v2037
    %2919 = vmatprep.subr.bf16.mxu0 0
    %2920 = vmatpush1.bf16.msra.mxu0 %v2036
    %2921 = vmatprep.subr.bf16.mxu0 0
    %2922 = vmatpush1.bf16.msra.mxu0 %v2035
    %2923 = vmatprep.subr.bf16.mxu0 0
    %2924 = vmatpush2.bf16.msra.mxu0 %v2050
    %2925 = vmatprep.subr.bf16.mxu0 0
    %2926 = vmatpush2.bf16.msra.mxu0 %v2049
    %2927 = vmatprep.subr.bf16.mxu0 0
    %2928 = vmatpush2.bf16.msra.mxu0 %v2048
    %2929 = vmatprep.subr.bf16.mxu0 0
    %2930 = vmatpush2.bf16.msra.mxu0 %v2047
    %2931 = vmatprep.subr.bf16.mxu0 0
    %2932 = vmatpush2.bf16.msra.mxu0 %v2046
    %2933 = vmatprep.subr.bf16.mxu0 0
    %2934 = vmatpush2.bf16.msra.mxu0 %v2045
    %2935 = vmatprep.subr.bf16.mxu0 0
    %2936 = vmatpush2.bf16.msra.mxu0 %v2044
    %2937 = vmatprep.subr.bf16.mxu0 0
    %2938 = vmatpush2.bf16.msra.mxu0 %v2043
    %2939 = vmatprep.mubr.bf16.mxu0 %v738
    %2940 = vmatmul.mubr.bf16.gmra.mxu0 %v736
    %v2941 = vpop.f32.mrf.mxu0
    %v2942 = vadd.f32 %v2902, %v2941
    %v2943 = vpop.f32.mrf.mxu0
    %v2944 = vpop.f32.mrf.mxu0
    %v2945 = vpop.f32.mrf.mxu0
    %2946 = vdwg.mxu0
    %2947 = vst [vmem:[#allocation2] sm:$0x3] %v2942
    // Predicated region
    $region14: #{filter_conv_forward.3} parent=1 // pred_check
      _
    $region15: #{filter_conv_forward.3} parent=1 // pred_check_branch
      %2949 = sbr.rel (0) target = $region17
    $region16: #{filter_conv_forward.3} parent=1 // pred_region
      %s2951 = ssub.s32 32, 32
      %2952 = vsyncadd [#allocation3], %s2951
      %s2954 = sshll.u32 [#allocation2], 4
      %s2955 = int_to_ptr.vmem [resolvable:$true] %s2954
      %2957 = dma.vmem_to_hbm [thread:$0]  %s2955, 32, %s3, [#allocation3]
    $region17: #{filter_conv_forward.3} parent=1 // pred_fallthru
      _
    // Predicated region
    $region18: #{filter_conv_forward.3} parent=1 // pred_check
      _
    $region19: #{filter_conv_forward.3} parent=1 // pred_check_branch
      %2959 = sbr.rel (0) target = $region21
    $region20: #{filter_conv_forward.3} parent=1 // pred_region
      %2960 = dma.done [#allocation3], 32
    $region21: #{filter_conv_forward.3} parent=1 // pred_fallthru
      _
    %2961 = vsyncpa [#allocation3], 1

// kernel: filter_conv_forward.2
$region0: #{filter_conv_forward.2}
  #allocation0 [shape = 'u32[]', space=smem, size = 0x4, offset = 0x4, fixed_abs, tag = 'smem constant byte address 0x4 - core index']
  #allocation1 [shape = 'u32[144,128]{1,0:T(1,128)}', space=vmem, size = 0x12000, scoped, tag = 'internal scratch']
  #allocation2 [shape = 'f32[528,8]{1,0:T(8,128)}', space=vmem, size = 0x42000, scoped, tag = 'scratch operand']
  #allocation3 [shape = 'f32[272,16]{1,0:T(8,128)}', space=vmem, size = 0x22000, scoped, tag = 'scratch operand']
  #allocation4 [shape = 'f32[144,32]{1,0:T(8,128)}', space=vmem, size = 0x12000, scoped, tag = 'scratch operand']
  #allocation5 [shape = 'f32[80,64]{1,0:T(8,128)}', space=vmem, size = 0xa000, scoped, tag = 'scratch operand']
  %s0 = inlined_call_operand.vmem [shape: f32[2,512,12], index: 0, kind: input, shape index: {}]
  %s1 = inlined_call_operand.vmem [shape: bf16[12,8], index: 1, kind: input, shape index: {}]
  %s2 = inlined_call_operand.vmem [shape: bf16[32,16], index: 2, kind: input, shape index: {}]
  %s3 = inlined_call_operand.vmem [shape: bf16[64,32], index: 3, kind: input, shape index: {}]
  %s4 = inlined_call_operand.vmem [shape: bf16[128,64], index: 4, kind: input, shape index: {}]
  %s5 = inlined_call_operand.hbm [shape: bf16[256,128], index: 5, kind: input, shape index: {}]
  %s6 = inlined_call_operand.hbm [shape: f32[1,8], index: 6, kind: input, shape index: {}]
  %s7 = inlined_call_operand.hbm [shape: f32[1,16], index: 7, kind: input, shape index: {}]
  %s8 = inlined_call_operand.hbm [shape: f32[1,32], index: 8, kind: input, shape index: {}]
  %s9 = inlined_call_operand.hbm [shape: f32[1,64], index: 9, kind: input, shape index: {}]
  %s10 = inlined_call_operand.hbm [shape: f32[1,128], index: 10, kind: input, shape index: {}]
  %s11 = inlined_call_operand.vmem [shape: bf16[2,32,128], index: 11, kind: output, shape index: {}]
  %s12 = sld [smem:[#allocation0]]
  $region101: #{filter_conv_forward.2} parent=0
    _
  %s14 = ssub.s32 1, %s12
  %s15 = scalar_select 0, %s14, %s12
  $region1: #{filter_conv_forward.2} parent=0
    #allocation6 [shape = 'u8[65536]{0}', space=vmem, size = 0x10000, scoped, tag = 'input window, operand 5, single buffered']
    #allocation7 [shape = 's32[2]{0}', space=sflag, size = 0x8, scoped, tag = 'scoped memory for filter_conv_forward.2']
    #allocation8 [shape = 'u8[512]{0}', space=vmem, size = 0x400, scoped, tag = 'input window, operand 6, single buffered']
    #allocation9 [shape = 's32[1]{0}', space=sflag, size = 0x4, scoped, tag = 'scoped memory for filter_conv_forward.2']
    #allocation10 [shape = 'u8[512]{0}', space=vmem, size = 0x400, scoped, tag = 'input window, operand 7, single buffered']
    #allocation11 [shape = 'u8[512]{0}', space=vmem, size = 0x400, scoped, tag = 'input window, operand 8, single buffered']
    #allocation12 [shape = 's32[1]{0}', space=sflag, size = 0x4, scoped, tag = 'scoped memory for filter_conv_forward.2']
    #allocation13 [shape = 'u8[512]{0}', space=vmem, size = 0x400, scoped, tag = 'input window, operand 9, single buffered']
    #allocation14 [shape = 'u8[512]{0}', space=vmem, size = 0x400, scoped, tag = 'input window, operand 10, single buffered']
    #allocation15 [shape = 's32[1]{0}', space=sflag, size = 0x4, scoped, tag = 'scoped memory for filter_conv_forward.2']
    %16 = vsyncpa [#allocation7], 0
    %17 = vsyncpa [#allocation9], 0
    %18 = vsyncpa [#allocation12], 0
    %19 = vsyncpa [#allocation15], 0
    loop: start=0, step=1, limit=4
    $region2: #{filter_conv_forward.2} parent=1 // loop_pre_header
      _
    $region3: #{filter_conv_forward.2} parent=1 // loop_header
      %s21 = sphi 0, %s25
      %p22 = scmp.ge.s32.totalorder %s21, 4
      %s31 = sphi 0, %s33
      %s34 = sphi 0, %s31
      %s35 = sphi 0, %s34
      %s51 = sphi 0, %s35
      %s55 = sphi 0, %s55
      %s57 = sphi 0, %s55
      %s58 = sphi 0, %s57
      %s72 = sphi 0, %s58
      %s76 = sphi 0, %s76
      %s78 = sphi 0, %s76
      %s79 = sphi 0, %s78
      %s93 = sphi 0, %s79
      %s97 = sphi 0, %s97
      %s99 = sphi 0, %s97
      %s100 = sphi 0, %s99
      %s114 = sphi 0, %s100
      %s118 = sphi 0, %s118
      %s120 = sphi 0, %s118
      %s121 = sphi 0, %s120
      %s135 = sphi 0, %s121
      %s139 = sphi 0, %s139
      %s141 = sphi 0, %s139
      %s142 = sphi 0, %s141
      %s156 = sphi 0, %s142
      %s160 = sphi 0, %s160
      %s162 = sphi 0, %s160
      %s163 = sphi 0, %s162
      %s177 = sphi 0, %s163
      %s181 = sphi 0, %s181
      %s183 = sphi 0, %s181
      %s184 = sphi 0, %s183
      %s198 = sphi 0, %s184
      %s202 = sphi 0, %s202
      %s204 = sphi 0, %s202
      %s205 = sphi 0, %s204
      %s219 = sphi 0, %s205
      %s223 = sphi 0, %s223
      %s225 = sphi 0, %s223
      %s226 = sphi 0, %s225
      %s240 = sphi 0, %s226
      %s244 = sphi 0, %s244
      %s246 = sphi 0, %s244
      %s247 = sphi 0, %s246
      %s261 = sphi 0, %s247
      %s267 = sphi 0, %s269
      %s270 = sphi 0, %s267
      %s271 = sphi 0, %s270
      %s287 = sphi 0, %s271
    $region4: #{filter_conv_forward.2} parent=1 // loop_header_branch
      %24 = sbr.rel (%p22) target = $region8
    $region5: #{filter_conv_forward.2} parent=1 // loop_body
      %s26 = ssub.s32 %s21, 1
      %s27 = ssub.s32 %s21, 2
      %s28 = sadd.s32 %s21, 1
      %s29 = ssub.s32 %s21, %s28
      %p30 = scmp.eq.s32.totalorder %s29, 0
      %s32 = sadd.s32 %s31, 1
      %s33 = scalar_select %p30, %s31, %s32
      %p36 = pneg %p30
      %p37 = scmp.eq.s32.totalorder %s21, 1
      %p38 = por %p36, %p37
      %p39 = scmp.ne.s32.totalorder %s31, %s34
      %p40 = scmp.eq.s32.totalorder %s21, 0
      %p41 = por %p39, %p40
      %p42 = scmp.ne.s32.totalorder %s31, %s34
      %p43 = scmp.eq.s32.totalorder %s26, 1
      %p44 = por %p42, %p43
      %p45 = scmp.ne.s32.totalorder %s34, %s35
      %p46 = scmp.eq.s32.totalorder %s26, 0
      %p47 = por %p45, %p46
      %p48 = scmp.ne.s32.totalorder %s34, %s35
      %p49 = scmp.eq.s32.totalorder %s27, 1
      %p50 = por %p48, %p49
      %p52 = scmp.ne.s32.totalorder %s35, %s51
      %p53 = scmp.eq.s32.totalorder %s27, 0
      %p54 = por %p52, %p53
      %s56 = sadd.s32 %s55, 1
      %p59 = scmp.eq.s32.totalorder %s21, 1
      %p60 = scmp.ne.s32.totalorder %s55, %s57
      %p61 = scmp.eq.s32.totalorder %s21, 0
      %p62 = por %p60, %p61
      %p63 = scmp.ne.s32.totalorder %s55, %s57
      %p64 = scmp.eq.s32.totalorder %s26, 1
      %p65 = por %p63, %p64
      %p66 = scmp.ne.s32.totalorder %s57, %s58
      %p67 = scmp.eq.s32.totalorder %s26, 0
      %p68 = por %p66, %p67
      %p69 = scmp.ne.s32.totalorder %s57, %s58
      %p70 = scmp.eq.s32.totalorder %s27, 1
      %p71 = por %p69, %p70
      %p73 = scmp.ne.s32.totalorder %s58, %s72
      %p74 = scmp.eq.s32.totalorder %s27, 0
      %p75 = por %p73, %p74
      %s77 = sadd.s32 %s76, 1
      %p80 = scmp.eq.s32.totalorder %s21, 1
      %p81 = scmp.ne.s32.totalorder %s76, %s78
      %p82 = scmp.eq.s32.totalorder %s21, 0
      %p83 = por %p81, %p82
      %p84 = scmp.ne.s32.totalorder %s76, %s78
      %p85 = scmp.eq.s32.totalorder %s26, 1
      %p86 = por %p84, %p85
      %p87 = scmp.ne.s32.totalorder %s78, %s79
      %p88 = scmp.eq.s32.totalorder %s26, 0
      %p89 = por %p87, %p88
      %p90 = scmp.ne.s32.totalorder %s78, %s79
      %p91 = scmp.eq.s32.totalorder %s27, 1
      %p92 = por %p90, %p91
      %p94 = scmp.ne.s32.totalorder %s79, %s93
      %p95 = scmp.eq.s32.totalorder %s27, 0
      %p96 = por %p94, %p95
      %s98 = sadd.s32 %s97, 1
      %p101 = scmp.eq.s32.totalorder %s21, 1
      %p102 = scmp.ne.s32.totalorder %s97, %s99
      %p103 = scmp.eq.s32.totalorder %s21, 0
      %p104 = por %p102, %p103
      %p105 = scmp.ne.s32.totalorder %s97, %s99
      %p106 = scmp.eq.s32.totalorder %s26, 1
      %p107 = por %p105, %p106
      %p108 = scmp.ne.s32.totalorder %s99, %s100
      %p109 = scmp.eq.s32.totalorder %s26, 0
      %p110 = por %p108, %p109
      %p111 = scmp.ne.s32.totalorder %s99, %s100
      %p112 = scmp.eq.s32.totalorder %s27, 1
      %p113 = por %p111, %p112
      %p115 = scmp.ne.s32.totalorder %s100, %s114
      %p116 = scmp.eq.s32.totalorder %s27, 0
      %p117 = por %p115, %p116
      %s119 = sadd.s32 %s118, 1
      %p122 = scmp.eq.s32.totalorder %s21, 1
      %p123 = scmp.ne.s32.totalorder %s118, %s120
      %p124 = scmp.eq.s32.totalorder %s21, 0
      %p125 = por %p123, %p124
      %p126 = scmp.ne.s32.totalorder %s118, %s120
      %p127 = scmp.eq.s32.totalorder %s26, 1
      %p128 = por %p126, %p127
      %p129 = scmp.ne.s32.totalorder %s120, %s121
      %p130 = scmp.eq.s32.totalorder %s26, 0
      %p131 = por %p129, %p130
      %p132 = scmp.ne.s32.totalorder %s120, %s121
      %p133 = scmp.eq.s32.totalorder %s27, 1
      %p134 = por %p132, %p133
      %p136 = scmp.ne.s32.totalorder %s121, %s135
      %p137 = scmp.eq.s32.totalorder %s27, 0
      %p138 = por %p136, %p137
      %s140 = sadd.s32 %s139, 1
      %p143 = scmp.eq.s32.totalorder %s21, 1
      %p144 = scmp.ne.s32.totalorder %s139, %s141
      %p145 = scmp.eq.s32.totalorder %s21, 0
      %p146 = por %p144, %p145
      %p147 = scmp.ne.s32.totalorder %s139, %s141
      %p148 = scmp.eq.s32.totalorder %s26, 1
      %p149 = por %p147, %p148
      %p150 = scmp.ne.s32.totalorder %s141, %s142
      %p151 = scmp.eq.s32.totalorder %s26, 0
      %p152 = por %p150, %p151
      %p153 = scmp.ne.s32.totalorder %s141, %s142
      %p154 = scmp.eq.s32.totalorder %s27, 1
      %p155 = por %p153, %p154
      %p157 = scmp.ne.s32.totalorder %s142, %s156
      %p158 = scmp.eq.s32.totalorder %s27, 0
      %p159 = por %p157, %p158
      %s161 = sadd.s32 %s160, 1
      %p164 = scmp.eq.s32.totalorder %s21, 1
      %p165 = scmp.ne.s32.totalorder %s160, %s162
      %p166 = scmp.eq.s32.totalorder %s21, 0
      %p167 = por %p165, %p166
      %p168 = scmp.ne.s32.totalorder %s160, %s162
      %p169 = scmp.eq.s32.totalorder %s26, 1
      %p170 = por %p168, %p169
      %p171 = scmp.ne.s32.totalorder %s162, %s163
      %p172 = scmp.eq.s32.totalorder %s26, 0
      %p173 = por %p171, %p172
      %p174 = scmp.ne.s32.totalorder %s162, %s163
      %p175 = scmp.eq.s32.totalorder %s27, 1
      %p176 = por %p174, %p175
      %p178 = scmp.ne.s32.totalorder %s163, %s177
      %p179 = scmp.eq.s32.totalorder %s27, 0
      %p180 = por %p178, %p179
      %s182 = sadd.s32 %s181, 1
      %p185 = scmp.eq.s32.totalorder %s21, 1
      %p186 = scmp.ne.s32.totalorder %s181, %s183
      %p187 = scmp.eq.s32.totalorder %s21, 0
      %p188 = por %p186, %p187
      %p189 = scmp.ne.s32.totalorder %s181, %s183
      %p190 = scmp.eq.s32.totalorder %s26, 1
      %p191 = por %p189, %p190
      %p192 = scmp.ne.s32.totalorder %s183, %s184
      %p193 = scmp.eq.s32.totalorder %s26, 0
      %p194 = por %p192, %p193
      %p195 = scmp.ne.s32.totalorder %s183, %s184
      %p196 = scmp.eq.s32.totalorder %s27, 1
      %p197 = por %p195, %p196
      %p199 = scmp.ne.s32.totalorder %s184, %s198
      %p200 = scmp.eq.s32.totalorder %s27, 0
      %p201 = por %p199, %p200
      %s203 = sadd.s32 %s202, 1
      %p206 = scmp.eq.s32.totalorder %s21, 1
      %p207 = scmp.ne.s32.totalorder %s202, %s204
      %p208 = scmp.eq.s32.totalorder %s21, 0
      %p209 = por %p207, %p208
      %p210 = scmp.ne.s32.totalorder %s202, %s204
      %p211 = scmp.eq.s32.totalorder %s26, 1
      %p212 = por %p210, %p211
      %p213 = scmp.ne.s32.totalorder %s204, %s205
      %p214 = scmp.eq.s32.totalorder %s26, 0
      %p215 = por %p213, %p214
      %p216 = scmp.ne.s32.totalorder %s204, %s205
      %p217 = scmp.eq.s32.totalorder %s27, 1
      %p218 = por %p216, %p217
      %p220 = scmp.ne.s32.totalorder %s205, %s219
      %p221 = scmp.eq.s32.totalorder %s27, 0
      %p222 = por %p220, %p221
      %s224 = sadd.s32 %s223, 1
      %p227 = scmp.eq.s32.totalorder %s21, 1
      %p228 = scmp.ne.s32.totalorder %s223, %s225
      %p229 = scmp.eq.s32.totalorder %s21, 0
      %p230 = por %p228, %p229
      %p231 = scmp.ne.s32.totalorder %s223, %s225
      %p232 = scmp.eq.s32.totalorder %s26, 1
      %p233 = por %p231, %p232
      %p234 = scmp.ne.s32.totalorder %s225, %s226
      %p235 = scmp.eq.s32.totalorder %s26, 0
      %p236 = por %p234, %p235
      %p237 = scmp.ne.s32.totalorder %s225, %s226
      %p238 = scmp.eq.s32.totalorder %s27, 1
      %p239 = por %p237, %p238
      %p241 = scmp.ne.s32.totalorder %s226, %s240
      %p242 = scmp.eq.s32.totalorder %s27, 0
      %p243 = por %p241, %p242
      %s245 = sadd.s32 %s244, 1
      %p248 = scmp.eq.s32.totalorder %s21, 1
      %p249 = scmp.ne.s32.totalorder %s244, %s246
      %p250 = scmp.eq.s32.totalorder %s21, 0
      %p251 = por %p249, %p250
      %p252 = scmp.ne.s32.totalorder %s244, %s246
      %p253 = scmp.eq.s32.totalorder %s26, 1
      %p254 = por %p252, %p253
      %p255 = scmp.ne.s32.totalorder %s246, %s247
      %p256 = scmp.eq.s32.totalorder %s26, 0
      %p257 = por %p255, %p256
      %p258 = scmp.ne.s32.totalorder %s246, %s247
      %p259 = scmp.eq.s32.totalorder %s27, 1
      %p260 = por %p258, %p259
      %p262 = scmp.ne.s32.totalorder %s247, %s261
      %p263 = scmp.eq.s32.totalorder %s27, 0
      %p264 = por %p262, %p263
      %s265 = ssub.s32 %s21, %s28
      %p266 = scmp.eq.s32.totalorder %s265, 0
      %s268 = sadd.s32 %s267, 1
      %s269 = scalar_select %p266, %s267, %s268
      %p272 = pneg %p266
      %p273 = scmp.eq.s32.totalorder %s21, 1
      %p274 = por %p272, %p273
      %p275 = scmp.ne.s32.totalorder %s267, %s270
      %p276 = scmp.eq.s32.totalorder %s21, 0
      %p277 = por %p275, %p276
      %p278 = scmp.ne.s32.totalorder %s267, %s270
      %p279 = scmp.eq.s32.totalorder %s26, 1
      %p280 = por %p278, %p279
      %p281 = scmp.ne.s32.totalorder %s270, %s271
      %p282 = scmp.eq.s32.totalorder %s26, 0
      %p283 = por %p281, %p282
      %p284 = scmp.ne.s32.totalorder %s270, %s271
      %p285 = scmp.eq.s32.totalorder %s27, 1
      %p286 = por %p284, %p285
      %p288 = scmp.ne.s32.totalorder %s271, %s287
      %p289 = scmp.eq.s32.totalorder %s27, 0
      %p290 = por %p288, %p289
      %p291 = scmp.le.s32.totalorder 1, %s21
      %p292 = scmp.lt.s32.totalorder %s21, 3
      %p293 = pnand %p291, %p292
      %p294 = pneg %p293
      // Predicated region
      $region9: #{filter_conv_forward.2} parent=5 // pred_check
        _
      $region10: #{filter_conv_forward.2} parent=5 // pred_check_branch
        %296 = sbr.rel (%p293) target = $region12
      $region11: #{filter_conv_forward.2} parent=5 // pred_region
        %s297 = ssub.s32 %s21, 1
        // Predicated region
        $region13: #{filter_conv_forward.2} parent=11 // pred_check
          %p298 = pneg %p68
        $region14: #{filter_conv_forward.2} parent=11 // pred_check_branch
          %300 = sbr.rel (%p298) target = $region16
        $region15: #{filter_conv_forward.2} parent=11 // pred_region
          _
        $region16: #{filter_conv_forward.2} parent=11 // pred_fallthru
          _
        // Predicated region
        $region17: #{filter_conv_forward.2} parent=11 // pred_check
          %p301 = pneg %p89
        $region18: #{filter_conv_forward.2} parent=11 // pred_check_branch
          %303 = sbr.rel (%p301) target = $region20
        $region19: #{filter_conv_forward.2} parent=11 // pred_region
          _
        $region20: #{filter_conv_forward.2} parent=11 // pred_fallthru
          _
        // Predicated region
        $region21: #{filter_conv_forward.2} parent=11 // pred_check
          %p304 = pneg %p110
        $region22: #{filter_conv_forward.2} parent=11 // pred_check_branch
          %306 = sbr.rel (%p304) target = $region24
        $region23: #{filter_conv_forward.2} parent=11 // pred_region
          _
        $region24: #{filter_conv_forward.2} parent=11 // pred_fallthru
          _
        // Predicated region
        $region25: #{filter_conv_forward.2} parent=11 // pred_check
          %p307 = pneg %p131
        $region26: #{filter_conv_forward.2} parent=11 // pred_check_branch
          %309 = sbr.rel (%p307) target = $region28
        $region27: #{filter_conv_forward.2} parent=11 // pred_region
          _
        $region28: #{filter_conv_forward.2} parent=11 // pred_fallthru
          _
        // Predicated region
        $region29: #{filter_conv_forward.2} parent=11 // pred_check
          %p310 = pneg %p152
        $region30: #{filter_conv_forward.2} parent=11 // pred_check_branch
          %312 = sbr.rel (%p310) target = $region32
        $region31: #{filter_conv_forward.2} parent=11 // pred_region
          %s314 = ssub.s32 2048, 2048
          %315 = vsyncadd [#allocation7], %s314
          %s316 = sshll.u32 [#allocation6], 4
          %s317 = int_to_ptr.vmem [resolvable:$true] %s316
          %322 = dma.hbm_to_vmem [thread:$0]  %s5, 2048, %s317, [#allocation7], 64, 64, 4
        $region32: #{filter_conv_forward.2} parent=11 // pred_fallthru
          _
        // Predicated region
        $region33: #{filter_conv_forward.2} parent=11 // pred_check
          %p323 = pneg %p173
        $region34: #{filter_conv_forward.2} parent=11 // pred_check_branch
          %325 = sbr.rel (%p323) target = $region36
        $region35: #{filter_conv_forward.2} parent=11 // pred_region
          %s327 = ssub.s32 16, 16
          %328 = vsyncadd [#allocation9], %s327
          %s330 = sshll.u32 [#allocation8], 4
          %s331 = int_to_ptr.vmem [resolvable:$true] %s330
          %333 = dma.hbm_to_vmem [thread:$0]  %s6, 16, %s331, [#allocation9]
        $region36: #{filter_conv_forward.2} parent=11 // pred_fallthru
          _
        // Predicated region
        $region37: #{filter_conv_forward.2} parent=11 // pred_check
          %p334 = pneg %p194
        $region38: #{filter_conv_forward.2} parent=11 // pred_check_branch
          %336 = sbr.rel (%p334) target = $region40
        $region39: #{filter_conv_forward.2} parent=11 // pred_region
          %s338 = ssub.s32 16, 16
          %339 = vsyncadd [#allocation9], %s338
          %s341 = sshll.u32 [#allocation10], 4
          %s342 = int_to_ptr.vmem [resolvable:$true] %s341
          %344 = dma.hbm_to_vmem [thread:$0]  %s7, 16, %s342, [#allocation9]
        $region40: #{filter_conv_forward.2} parent=11 // pred_fallthru
          _
        // Predicated region
        $region41: #{filter_conv_forward.2} parent=11 // pred_check
          %p345 = pneg %p215
        $region42: #{filter_conv_forward.2} parent=11 // pred_check_branch
          %347 = sbr.rel (%p345) target = $region44
        $region43: #{filter_conv_forward.2} parent=11 // pred_region
          %s349 = ssub.s32 16, 16
          %350 = vsyncadd [#allocation12], %s349
          %s352 = sshll.u32 [#allocation11], 4
          %s353 = int_to_ptr.vmem [resolvable:$true] %s352
          %355 = dma.hbm_to_vmem [thread:$0]  %s8, 16, %s353, [#allocation12]
        $region44: #{filter_conv_forward.2} parent=11 // pred_fallthru
          _
        // Predicated region
        $region45: #{filter_conv_forward.2} parent=11 // pred_check
          %p356 = pneg %p236
        $region46: #{filter_conv_forward.2} parent=11 // pred_check_branch
          %358 = sbr.rel (%p356) target = $region48
        $region47: #{filter_conv_forward.2} parent=11 // pred_region
          %s360 = ssub.s32 16, 16
          %361 = vsyncadd [#allocation12], %s360
          %s363 = sshll.u32 [#allocation13], 4
          %s364 = int_to_ptr.vmem [resolvable:$true] %s363
          %366 = dma.hbm_to_vmem [thread:$0]  %s9, 16, %s364, [#allocation12]
        $region48: #{filter_conv_forward.2} parent=11 // pred_fallthru
          _
        // Predicated region
        $region49: #{filter_conv_forward.2} parent=11 // pred_check
          %p367 = pneg %p257
        $region50: #{filter_conv_forward.2} parent=11 // pred_check_branch
          %369 = sbr.rel (%p367) target = $region52
        $region51: #{filter_conv_forward.2} parent=11 // pred_region
          %s371 = ssub.s32 16, 16
          %372 = vsyncadd [#allocation15], %s371
          %s374 = sshll.u32 [#allocation14], 4
          %s375 = int_to_ptr.vmem [resolvable:$true] %s374
          %377 = dma.hbm_to_vmem [thread:$0]  %s10, 16, %s375, [#allocation15]
        $region52: #{filter_conv_forward.2} parent=11 // pred_fallthru
          _
      $region12: #{filter_conv_forward.2} parent=5 // pred_fallthru
        _
      %p378 = scmp.lt.s32.totalorder %s21, 2
      // Predicated region
      $region53: #{filter_conv_forward.2} parent=5 // pred_check
        %p379 = pneg %p378
      $region54: #{filter_conv_forward.2} parent=5 // pred_check_branch
        %381 = sbr.rel (%p379) target = $region56
      $region55: #{filter_conv_forward.2} parent=5 // pred_region
        // Predicated region
        $region57: #{filter_conv_forward.2} parent=55 // pred_check
          %p382 = pneg %p41
        $region58: #{filter_conv_forward.2} parent=55 // pred_check_branch
          %384 = sbr.rel (%p382) target = $region60
        $region59: #{filter_conv_forward.2} parent=55 // pred_region
          %p385 = scmp.lt.s32.totalorder %s21, 1
          %s386 = scalar_select %p385, %s21, 1
          %s387 = smul.addr %s386, 64
          %s388 = smul.addr %s387, 8
          %s389 = scalar_lea.vmem %s0, %s388
        $region60: #{filter_conv_forward.2} parent=55 // pred_fallthru
          _
      $region56: #{filter_conv_forward.2} parent=5 // pred_fallthru
        _
      %p390 = scmp.le.s32.totalorder 1, %s21
      %p391 = scmp.lt.s32.totalorder %s21, 3
      %p392 = pnand %p390, %p391
      %p393 = pneg %p392
      // Predicated region
      $region61: #{filter_conv_forward.2} parent=5 // pred_check
        _
      $region62: #{filter_conv_forward.2} parent=5 // pred_check_branch
        %395 = sbr.rel (%p392) target = $region64
      $region63: #{filter_conv_forward.2} parent=5 // pred_region
        %s396 = ssub.s32 %s21, 1
        // Predicated region
        $region65: #{filter_conv_forward.2} parent=63 // pred_check
          %p397 = pneg %p152
        $region66: #{filter_conv_forward.2} parent=63 // pred_check_branch
          %399 = sbr.rel (%p397) target = $region68
        $region67: #{filter_conv_forward.2} parent=63 // pred_region
          %400 = dma.done [#allocation7], 2048
        $region68: #{filter_conv_forward.2} parent=63 // pred_fallthru
          _
        // Predicated region
        $region69: #{filter_conv_forward.2} parent=63 // pred_check
          %p401 = pneg %p173
        $region70: #{filter_conv_forward.2} parent=63 // pred_check_branch
          %403 = sbr.rel (%p401) target = $region72
        $region71: #{filter_conv_forward.2} parent=63 // pred_region
          %404 = dma.done [#allocation9], 16
        $region72: #{filter_conv_forward.2} parent=63 // pred_fallthru
          _
        // Predicated region
        $region73: #{filter_conv_forward.2} parent=63 // pred_check
          %p405 = pneg %p194
        $region74: #{filter_conv_forward.2} parent=63 // pred_check_branch
          %407 = sbr.rel (%p405) target = $region76
        $region75: #{filter_conv_forward.2} parent=63 // pred_region
          %408 = dma.done [#allocation9], 16
        $region76: #{filter_conv_forward.2} parent=63 // pred_fallthru
          _
        // Predicated region
        $region77: #{filter_conv_forward.2} parent=63 // pred_check
          %p409 = pneg %p215
        $region78: #{filter_conv_forward.2} parent=63 // pred_check_branch
          %411 = sbr.rel (%p409) target = $region80
        $region79: #{filter_conv_forward.2} parent=63 // pred_region
          %412 = dma.done [#allocation12], 16
        $region80: #{filter_conv_forward.2} parent=63 // pred_fallthru
          _
        // Predicated region
        $region81: #{filter_conv_forward.2} parent=63 // pred_check
          %p413 = pneg %p236
        $region82: #{filter_conv_forward.2} parent=63 // pred_check_branch
          %415 = sbr.rel (%p413) target = $region84
        $region83: #{filter_conv_forward.2} parent=63 // pred_region
          %416 = dma.done [#allocation12], 16
        $region84: #{filter_conv_forward.2} parent=63 // pred_fallthru
          _
        // Predicated region
        $region85: #{filter_conv_forward.2} parent=63 // pred_check
          %p417 = pneg %p257
        $region86: #{filter_conv_forward.2} parent=63 // pred_check_branch
          %419 = sbr.rel (%p417) target = $region88
        $region87: #{filter_conv_forward.2} parent=63 // pred_region
          %420 = dma.done [#allocation15], 16
        $region88: #{filter_conv_forward.2} parent=63 // pred_fallthru
          _
        %p421 = scmp.lt.s32.totalorder %s26, 1
        %s422 = scalar_select %p421, %s26, 1
        %s423 = smul.addr %s422, 64
        %s424 = smul.addr %s423, 8
        %s425 = scalar_lea.vmem %s0, %s424
        %p426 = pneg %p47
        %p427 = pneg %p44
        %p428 = pneg %p68
        %p429 = pneg %p65
        %p430 = pneg %p89
        %p431 = pneg %p86
        %p432 = pneg %p110
        %p433 = pneg %p107
        %p434 = pneg %p131
        %p435 = pneg %p128
        %p436 = pneg %p152
        %p437 = pneg %p149
        %p438 = pneg %p173
        %p439 = pneg %p170
        %p440 = pneg %p194
        %p441 = pneg %p191
        %p442 = pneg %p215
        %p443 = pneg %p212
        %p444 = pneg %p236
        %p445 = pneg %p233
        %p446 = pneg %p257
        %p447 = pneg %p254
        %p448 = pneg %p283
        %p449 = pneg %p280
        %p450 = scmp.lt.s32.totalorder %s26, 1
        %s451 = scalar_select %p450, %s26, 1
        %s452 = smul.addr %s451, 4
        %s453 = smul.addr %s452, 4
        %s454 = scalar_lea.vmem %s11, %s453
        %p455 = scmp.lt.s32.totalorder %s26, 1
        %s456 = scalar_select %p455, %s26, 1
        %s457 = smul.addr %s456, 64
        %s458 = smul.addr %s457, 8
        %s459 = scalar_lea.vmem %s0, %s458
        %p460 = scmp.lt.s32.totalorder %s26, 1
        %s461 = scalar_select %p460, %s26, 1
        %s462 = smul.addr %s461, 4
        %s463 = smul.addr %s462, 4
        %s464 = scalar_lea.vmem %s11, %s463
        %v466 = vld [vmem:[%s459] sm:$0xff]
        %v467 = vld [vmem:[%s459 + $0x8] sm:$0xff]
        %v468 = vld [vmem:[%s459 + $0x10] sm:$0xff]
        %v469 = vld [vmem:[%s459 + $0x18] sm:$0xff]
        %v470 = vld [vmem:[%s459 + $0x20] sm:$0xff]
        %v471 = vld [vmem:[%s459 + $0x28] sm:$0xff]
        %v472 = vld [vmem:[%s459 + $0x30] sm:$0xff]
        %v473 = vld [vmem:[%s459 + $0x38] sm:$0xff]
        %v474 = vld [vmem:[%s459 + $0x40] sm:$0xff]
        %v475 = vld [vmem:[%s459 + $0x48] sm:$0xff]
        %v476 = vld [vmem:[%s459 + $0x50] sm:$0xff]
        %v477 = vld [vmem:[%s459 + $0x58] sm:$0xff]
        %v478 = vld [vmem:[%s459 + $0x60] sm:$0xff]
        %v479 = vld [vmem:[%s459 + $0x68] sm:$0xff]
        %v480 = vld [vmem:[%s459 + $0x70] sm:$0xff]
        %v481 = vld [vmem:[%s459 + $0x78] sm:$0xff]
        %v482 = vld [vmem:[%s459 + $0x80] sm:$0xff]
        %v483 = vld [vmem:[%s459 + $0x88] sm:$0xff]
        %v484 = vld [vmem:[%s459 + $0x90] sm:$0xff]
        %v485 = vld [vmem:[%s459 + $0x98] sm:$0xff]
        %v486 = vld [vmem:[%s459 + $0xa0] sm:$0xff]
        %v487 = vld [vmem:[%s459 + $0xa8] sm:$0xff]
        %v488 = vld [vmem:[%s459 + $0xb0] sm:$0xff]
        %v489 = vld [vmem:[%s459 + $0xb8] sm:$0xff]
        %v490 = vld [vmem:[%s459 + $0xc0] sm:$0xff]
        %v491 = vld [vmem:[%s459 + $0xc8] sm:$0xff]
        %v492 = vld [vmem:[%s459 + $0xd0] sm:$0xff]
        %v493 = vld [vmem:[%s459 + $0xd8] sm:$0xff]
        %v494 = vld [vmem:[%s459 + $0xe0] sm:$0xff]
        %v495 = vld [vmem:[%s459 + $0xe8] sm:$0xff]
        %v496 = vld [vmem:[%s459 + $0xf0] sm:$0xff]
        %v497 = vld [vmem:[%s459 + $0xf8] sm:$0xff]
        %v498 = vld [vmem:[%s459 + $0x100] sm:$0xff]
        %v499 = vld [vmem:[%s459 + $0x108] sm:$0xff]
        %v500 = vld [vmem:[%s459 + $0x110] sm:$0xff]
        %v501 = vld [vmem:[%s459 + $0x118] sm:$0xff]
        %v502 = vld [vmem:[%s459 + $0x120] sm:$0xff]
        %v503 = vld [vmem:[%s459 + $0x128] sm:$0xff]
        %v504 = vld [vmem:[%s459 + $0x130] sm:$0xff]
        %v505 = vld [vmem:[%s459 + $0x138] sm:$0xff]
        %v506 = vld [vmem:[%s459 + $0x140] sm:$0xff]
        %v507 = vld [vmem:[%s459 + $0x148] sm:$0xff]
        %v508 = vld [vmem:[%s459 + $0x150] sm:$0xff]
        %v509 = vld [vmem:[%s459 + $0x158] sm:$0xff]
        %v510 = vld [vmem:[%s459 + $0x160] sm:$0xff]
        %v511 = vld [vmem:[%s459 + $0x168] sm:$0xff]
        %v512 = vld [vmem:[%s459 + $0x170] sm:$0xff]
        %v513 = vld [vmem:[%s459 + $0x178] sm:$0xff]
        %v514 = vld [vmem:[%s459 + $0x180] sm:$0xff]
        %v515 = vld [vmem:[%s459 + $0x188] sm:$0xff]
        %v516 = vld [vmem:[%s459 + $0x190] sm:$0xff]
        %v517 = vld [vmem:[%s459 + $0x198] sm:$0xff]
        %v518 = vld [vmem:[%s459 + $0x1a0] sm:$0xff]
        %v519 = vld [vmem:[%s459 + $0x1a8] sm:$0xff]
        %v520 = vld [vmem:[%s459 + $0x1b0] sm:$0xff]
        %v521 = vld [vmem:[%s459 + $0x1b8] sm:$0xff]
        %v522 = vld [vmem:[%s459 + $0x1c0] sm:$0xff]
        %v523 = vld [vmem:[%s459 + $0x1c8] sm:$0xff]
        %v524 = vld [vmem:[%s459 + $0x1d0] sm:$0xff]
        %v525 = vld [vmem:[%s459 + $0x1d8] sm:$0xff]
        %v526 = vld [vmem:[%s459 + $0x1e0] sm:$0xff]
        %v527 = vld [vmem:[%s459 + $0x1e8] sm:$0xff]
        %v528 = vld [vmem:[%s459 + $0x1f0] sm:$0xff]
        %v529 = vld [vmem:[%s459 + $0x1f8] sm:$0xff]
        %v530 = vpack.c.bf16 %v467, %v466
        %v531 = vpack.c.bf16 %v469, %v468
        %v532 = vpack.c.bf16 %v471, %v470
        %v533 = vpack.c.bf16 %v473, %v472
        %v534 = vpack.c.bf16 %v475, %v474
        %v535 = vpack.c.bf16 %v477, %v476
        %v536 = vpack.c.bf16 %v479, %v478
        %v537 = vpack.c.bf16 %v481, %v480
        %v538 = vpack.c.bf16 %v483, %v482
        %v539 = vpack.c.bf16 %v485, %v484
        %v540 = vpack.c.bf16 %v487, %v486
        %v541 = vpack.c.bf16 %v489, %v488
        %v542 = vpack.c.bf16 %v491, %v490
        %v543 = vpack.c.bf16 %v493, %v492
        %v544 = vpack.c.bf16 %v495, %v494
        %v545 = vpack.c.bf16 %v497, %v496
        %v546 = vpack.c.bf16 %v499, %v498
        %v547 = vpack.c.bf16 %v501, %v500
        %v548 = vpack.c.bf16 %v503, %v502
        %v549 = vpack.c.bf16 %v505, %v504
        %v550 = vpack.c.bf16 %v507, %v506
        %v551 = vpack.c.bf16 %v509, %v508
        %v552 = vpack.c.bf16 %v511, %v510
        %v553 = vpack.c.bf16 %v513, %v512
        %v554 = vpack.c.bf16 %v515, %v514
        %v555 = vpack.c.bf16 %v517, %v516
        %v556 = vpack.c.bf16 %v519, %v518
        %v557 = vpack.c.bf16 %v521, %v520
        %v558 = vpack.c.bf16 %v523, %v522
        %v559 = vpack.c.bf16 %v525, %v524
        %v560 = vpack.c.bf16 %v527, %v526
        %v561 = vpack.c.bf16 %v529, %v528
        %v562 = vld [vmem:[%s1] sm:$0xf]
        %v563 = vld [vmem:[%s1 + $0x4] sm:$0x3]
        %v564 = vld [vmem:[#allocation8] sm:$0x1]
        %v566 = vlaneseq
        %v567 = vshrl.u32 %v566, 7
        %v568 = vsub.s32 0, %v567
        %v569 = vrot.slane %v564, %v568
        %v573 = vunpack.c.l.b16 %v562
        %v574 = vunpack.c.l.b16 %v563
        %v575 = vpack.c.b16 %v574, %v573
        %vm576 = vcmask 97280
        %v578 = vsel %vm576, %v530, 0
        %v581 = vsel %vm576, %v531, 0
        %v584 = vsel %vm576, %v532, 0
        %v587 = vsel %vm576, %v533, 0
        %v590 = vsel %vm576, %v534, 0
        %v593 = vsel %vm576, %v535, 0
        %v596 = vsel %vm576, %v536, 0
        %v599 = vsel %vm576, %v537, 0
        %v602 = vsel %vm576, %v538, 0
        %v605 = vsel %vm576, %v539, 0
        %v608 = vsel %vm576, %v540, 0
        %v611 = vsel %vm576, %v541, 0
        %v614 = vsel %vm576, %v542, 0
        %v617 = vsel %vm576, %v543, 0
        %v620 = vsel %vm576, %v544, 0
        %v623 = vsel %vm576, %v545, 0
        %v626 = vsel %vm576, %v546, 0
        %v629 = vsel %vm576, %v547, 0
        %v632 = vsel %vm576, %v548, 0
        %v635 = vsel %vm576, %v549, 0
        %v638 = vsel %vm576, %v550, 0
        %v641 = vsel %vm576, %v551, 0
        %v644 = vsel %vm576, %v552, 0
        %v647 = vsel %vm576, %v553, 0
        %v650 = vsel %vm576, %v554, 0
        %v653 = vsel %vm576, %v555, 0
        %v656 = vsel %vm576, %v556, 0
        %v659 = vsel %vm576, %v557, 0
        %v662 = vsel %vm576, %v558, 0
        %v665 = vsel %vm576, %v559, 0
        %v668 = vsel %vm576, %v560, 0
        %v671 = vsel %vm576, %v561, 0
        %vm673 = vcmask 1045504
        %v675 = vsel %vm673, %v575, 0
        %677 = vmatprep.subr.bf16.mxu0 0
        %678 = vmatpush1.bf16.msra.mxu0 0
        %679 = vmatprep.subr.bf16.mxu0 0
        %680 = vmatpush1.bf16.msra.mxu0 0
        %681 = vmatprep.subr.bf16.mxu0 0
        %682 = vmatpush1.bf16.msra.mxu0 0
        %683 = vmatprep.subr.bf16.mxu0 0
        %684 = vmatpush1.bf16.msra.mxu0 0
        %685 = vmatprep.subr.bf16.mxu0 0
        %686 = vmatpush1.bf16.msra.mxu0 0
        %687 = vmatprep.subr.bf16.mxu0 0
        %688 = vmatpush1.bf16.msra.mxu0 0
        %689 = vmatprep.subr.bf16.mxu0 0
        %690 = vmatpush1.bf16.msra.mxu0 0
        %691 = vmatprep.subr.bf16.mxu0 0
        %692 = vmatpush1.bf16.msra.mxu0 %v675
        %693 = vmatprep.subr.bf16.mxu0 0
        %694 = vmatpush2.bf16.msra.mxu0 0
        %695 = vmatprep.subr.bf16.mxu0 0
        %696 = vmatpush2.bf16.msra.mxu0 0
        %697 = vmatprep.subr.bf16.mxu0 0
        %698 = vmatpush2.bf16.msra.mxu0 0
        %699 = vmatprep.subr.bf16.mxu0 0
        %700 = vmatpush2.bf16.msra.mxu0 0
        %701 = vmatprep.subr.bf16.mxu0 0
        %702 = vmatpush2.bf16.msra.mxu0 0
        %703 = vmatprep.subr.bf16.mxu0 0
        %704 = vmatpush2.bf16.msra.mxu0 0
        %705 = vmatprep.subr.bf16.mxu0 0
        %706 = vmatpush2.bf16.msra.mxu0 0
        %707 = vmatprep.subr.bf16.mxu0 0
        %708 = vmatpush2.bf16.msra.mxu0 0
        %709 = vmatprep.mubr.bf16.mxu0 0
        %710 = vmatmul.mubr.bf16.gmra.mxu0 %v578
        %v711 = vpop.f32.mrf.mxu0
        %v712 = vadd.f32 %v569, %v711
        %v713 = vpop.f32.mrf.mxu0
        %v714 = vpop.f32.mrf.mxu0
        %v715 = vadd.f32 %v569, %v714
        %v716 = vpop.f32.mrf.mxu0
        %717 = vmatprep.mubr.bf16.mxu0 0
        %718 = vmatmul.mubr.bf16.gmra.mxu0 %v581
        %v719 = vpop.f32.mrf.mxu0
        %v720 = vadd.f32 %v569, %v719
        %v721 = vpop.f32.mrf.mxu0
        %v722 = vpop.f32.mrf.mxu0
        %v723 = vadd.f32 %v569, %v722
        %v724 = vpop.f32.mrf.mxu0
        %725 = vmatprep.mubr.bf16.mxu0 0
        %726 = vmatmul.mubr.bf16.gmra.mxu0 %v584
        %v727 = vpop.f32.mrf.mxu0
        %v728 = vadd.f32 %v569, %v727
        %v729 = vpop.f32.mrf.mxu0
        %v730 = vpop.f32.mrf.mxu0
        %v731 = vadd.f32 %v569, %v730
        %v732 = vpop.f32.mrf.mxu0
        %733 = vmatprep.mubr.bf16.mxu0 0
        %734 = vmatmul.mubr.bf16.gmra.mxu0 %v587
        %v735 = vpop.f32.mrf.mxu0
        %v736 = vadd.f32 %v569, %v735
        %v737 = vpop.f32.mrf.mxu0
        %v738 = vpop.f32.mrf.mxu0
        %v739 = vadd.f32 %v569, %v738
        %v740 = vpop.f32.mrf.mxu0
        %741 = vmatprep.mubr.bf16.mxu0 0
        %742 = vmatmul.mubr.bf16.gmra.mxu0 %v590
        %v743 = vpop.f32.mrf.mxu0
        %v744 = vadd.f32 %v569, %v743
        %v745 = vpop.f32.mrf.mxu0
        %v746 = vpop.f32.mrf.mxu0
        %v747 = vadd.f32 %v569, %v746
        %v748 = vpop.f32.mrf.mxu0
        %749 = vmatprep.mubr.bf16.mxu0 0
        %750 = vmatmul.mubr.bf16.gmra.mxu0 %v593
        %v751 = vpop.f32.mrf.mxu0
        %v752 = vadd.f32 %v569, %v751
        %v753 = vpop.f32.mrf.mxu0
        %v754 = vpop.f32.mrf.mxu0
        %v755 = vadd.f32 %v569, %v754
        %v756 = vpop.f32.mrf.mxu0
        %757 = vmatprep.mubr.bf16.mxu0 0
        %758 = vmatmul.mubr.bf16.gmra.mxu0 %v596
        %v759 = vpop.f32.mrf.mxu0
        %v760 = vadd.f32 %v569, %v759
        %v761 = vpop.f32.mrf.mxu0
        %v762 = vpop.f32.mrf.mxu0
        %v763 = vadd.f32 %v569, %v762
        %v764 = vpop.f32.mrf.mxu0
        %765 = vmatprep.mubr.bf16.mxu0 0
        %766 = vmatmul.mubr.bf16.gmra.mxu0 %v599
        %v767 = vpop.f32.mrf.mxu0
        %v768 = vadd.f32 %v569, %v767
        %v769 = vpop.f32.mrf.mxu0
        %v770 = vpop.f32.mrf.mxu0
        %v771 = vadd.f32 %v569, %v770
        %v772 = vpop.f32.mrf.mxu0
        %773 = vmatprep.mubr.bf16.mxu0 0
        %774 = vmatmul.mubr.bf16.gmra.mxu0 %v602
        %v775 = vpop.f32.mrf.mxu0
        %v776 = vadd.f32 %v569, %v775
        %v777 = vpop.f32.mrf.mxu0
        %v778 = vpop.f32.mrf.mxu0
        %v779 = vadd.f32 %v569, %v778
        %v780 = vpop.f32.mrf.mxu0
        %781 = vmatprep.mubr.bf16.mxu0 0
        %782 = vmatmul.mubr.bf16.gmra.mxu0 %v605
        %v783 = vpop.f32.mrf.mxu0
        %v784 = vadd.f32 %v569, %v783
        %v785 = vpop.f32.mrf.mxu0
        %v786 = vpop.f32.mrf.mxu0
        %v787 = vadd.f32 %v569, %v786
        %v788 = vpop.f32.mrf.mxu0
        %789 = vmatprep.mubr.bf16.mxu0 0
        %790 = vmatmul.mubr.bf16.gmra.mxu0 %v608
        %v791 = vpop.f32.mrf.mxu0
        %v792 = vadd.f32 %v569, %v791
        %v793 = vpop.f32.mrf.mxu0
        %v794 = vpop.f32.mrf.mxu0
        %v795 = vadd.f32 %v569, %v794
        %v796 = vpop.f32.mrf.mxu0
        %797 = vmatprep.mubr.bf16.mxu0 0
        %798 = vmatmul.mubr.bf16.gmra.mxu0 %v611
        %v799 = vpop.f32.mrf.mxu0
        %v800 = vadd.f32 %v569, %v799
        %v801 = vpop.f32.mrf.mxu0
        %v802 = vpop.f32.mrf.mxu0
        %v803 = vadd.f32 %v569, %v802
        %v804 = vpop.f32.mrf.mxu0
        %805 = vmatprep.mubr.bf16.mxu0 0
        %806 = vmatmul.mubr.bf16.gmra.mxu0 %v614
        %v807 = vpop.f32.mrf.mxu0
        %v808 = vadd.f32 %v569, %v807
        %v809 = vpop.f32.mrf.mxu0
        %v810 = vpop.f32.mrf.mxu0
        %v811 = vadd.f32 %v569, %v810
        %v812 = vpop.f32.mrf.mxu0
        %813 = vmatprep.mubr.bf16.mxu0 0
        %814 = vmatmul.mubr.bf16.gmra.mxu0 %v617
        %v815 = vpop.f32.mrf.mxu0
        %v816 = vadd.f32 %v569, %v815
        %v817 = vpop.f32.mrf.mxu0
        %v818 = vpop.f32.mrf.mxu0
        %v819 = vadd.f32 %v569, %v818
        %v820 = vpop.f32.mrf.mxu0
        %821 = vmatprep.mubr.bf16.mxu0 0
        %822 = vmatmul.mubr.bf16.gmra.mxu0 %v620
        %v823 = vpop.f32.mrf.mxu0
        %v824 = vadd.f32 %v569, %v823
        %v825 = vpop.f32.mrf.mxu0
        %v826 = vpop.f32.mrf.mxu0
        %v827 = vadd.f32 %v569, %v826
        %v828 = vpop.f32.mrf.mxu0
        %829 = vmatprep.mubr.bf16.mxu0 0
        %830 = vmatmul.mubr.bf16.gmra.mxu0 %v623
        %v831 = vpop.f32.mrf.mxu0
        %v832 = vadd.f32 %v569, %v831
        %v833 = vpop.f32.mrf.mxu0
        %v834 = vpop.f32.mrf.mxu0
        %v835 = vadd.f32 %v569, %v834
        %v836 = vpop.f32.mrf.mxu0
        %837 = vmatprep.mubr.bf16.mxu0 0
        %838 = vmatmul.mubr.bf16.gmra.mxu0 %v626
        %v839 = vpop.f32.mrf.mxu0
        %v840 = vadd.f32 %v569, %v839
        %v841 = vpop.f32.mrf.mxu0
        %v842 = vpop.f32.mrf.mxu0
        %v843 = vadd.f32 %v569, %v842
        %v844 = vpop.f32.mrf.mxu0
        %845 = vmatprep.mubr.bf16.mxu0 0
        %846 = vmatmul.mubr.bf16.gmra.mxu0 %v629
        %v847 = vpop.f32.mrf.mxu0
        %v848 = vadd.f32 %v569, %v847
        %v849 = vpop.f32.mrf.mxu0
        %v850 = vpop.f32.mrf.mxu0
        %v851 = vadd.f32 %v569, %v850
        %v852 = vpop.f32.mrf.mxu0
        %853 = vmatprep.mubr.bf16.mxu0 0
        %854 = vmatmul.mubr.bf16.gmra.mxu0 %v632
        %v855 = vpop.f32.mrf.mxu0
        %v856 = vadd.f32 %v569, %v855
        %v857 = vpop.f32.mrf.mxu0
        %v858 = vpop.f32.mrf.mxu0
        %v859 = vadd.f32 %v569, %v858
        %v860 = vpop.f32.mrf.mxu0
        %861 = vmatprep.mubr.bf16.mxu0 0
        %862 = vmatmul.mubr.bf16.gmra.mxu0 %v635
        %v863 = vpop.f32.mrf.mxu0
        %v864 = vadd.f32 %v569, %v863
        %v865 = vpop.f32.mrf.mxu0
        %v866 = vpop.f32.mrf.mxu0
        %v867 = vadd.f32 %v569, %v866
        %v868 = vpop.f32.mrf.mxu0
        %869 = vmatprep.mubr.bf16.mxu0 0
        %870 = vmatmul.mubr.bf16.gmra.mxu0 %v638
        %v871 = vpop.f32.mrf.mxu0
        %v872 = vadd.f32 %v569, %v871
        %v873 = vpop.f32.mrf.mxu0
        %v874 = vpop.f32.mrf.mxu0
        %v875 = vadd.f32 %v569, %v874
        %v876 = vpop.f32.mrf.mxu0
        %877 = vmatprep.mubr.bf16.mxu0 0
        %878 = vmatmul.mubr.bf16.gmra.mxu0 %v641
        %v879 = vpop.f32.mrf.mxu0
        %v880 = vadd.f32 %v569, %v879
        %v881 = vpop.f32.mrf.mxu0
        %v882 = vpop.f32.mrf.mxu0
        %v883 = vadd.f32 %v569, %v882
        %v884 = vpop.f32.mrf.mxu0
        %885 = vmatprep.mubr.bf16.mxu0 0
        %886 = vmatmul.mubr.bf16.gmra.mxu0 %v644
        %v887 = vpop.f32.mrf.mxu0
        %v888 = vadd.f32 %v569, %v887
        %v889 = vpop.f32.mrf.mxu0
        %v890 = vpop.f32.mrf.mxu0
        %v891 = vadd.f32 %v569, %v890
        %v892 = vpop.f32.mrf.mxu0
        %893 = vmatprep.mubr.bf16.mxu0 0
        %894 = vmatmul.mubr.bf16.gmra.mxu0 %v647
        %v895 = vpop.f32.mrf.mxu0
        %v896 = vadd.f32 %v569, %v895
        %v897 = vpop.f32.mrf.mxu0
        %v898 = vpop.f32.mrf.mxu0
        %v899 = vadd.f32 %v569, %v898
        %v900 = vpop.f32.mrf.mxu0
        %901 = vmatprep.mubr.bf16.mxu0 0
        %902 = vmatmul.mubr.bf16.gmra.mxu0 %v650
        %v903 = vpop.f32.mrf.mxu0
        %v904 = vadd.f32 %v569, %v903
        %v905 = vpop.f32.mrf.mxu0
        %v906 = vpop.f32.mrf.mxu0
        %v907 = vadd.f32 %v569, %v906
        %v908 = vpop.f32.mrf.mxu0
        %909 = vmatprep.mubr.bf16.mxu0 0
        %910 = vmatmul.mubr.bf16.gmra.mxu0 %v653
        %v911 = vpop.f32.mrf.mxu0
        %v912 = vadd.f32 %v569, %v911
        %v913 = vpop.f32.mrf.mxu0
        %v914 = vpop.f32.mrf.mxu0
        %v915 = vadd.f32 %v569, %v914
        %v916 = vpop.f32.mrf.mxu0
        %917 = vmatprep.mubr.bf16.mxu0 0
        %918 = vmatmul.mubr.bf16.gmra.mxu0 %v656
        %v919 = vpop.f32.mrf.mxu0
        %v920 = vadd.f32 %v569, %v919
        %v921 = vpop.f32.mrf.mxu0
        %v922 = vpop.f32.mrf.mxu0
        %v923 = vadd.f32 %v569, %v922
        %v924 = vpop.f32.mrf.mxu0
        %925 = vmatprep.mubr.bf16.mxu0 0
        %926 = vmatmul.mubr.bf16.gmra.mxu0 %v659
        %v927 = vpop.f32.mrf.mxu0
        %v928 = vadd.f32 %v569, %v927
        %v929 = vpop.f32.mrf.mxu0
        %v930 = vpop.f32.mrf.mxu0
        %v931 = vadd.f32 %v569, %v930
        %v932 = vpop.f32.mrf.mxu0
        %933 = vmatprep.mubr.bf16.mxu0 0
        %934 = vmatmul.mubr.bf16.gmra.mxu0 %v662
        %v935 = vpop.f32.mrf.mxu0
        %v936 = vadd.f32 %v569, %v935
        %v937 = vpop.f32.mrf.mxu0
        %v938 = vpop.f32.mrf.mxu0
        %v939 = vadd.f32 %v569, %v938
        %v940 = vpop.f32.mrf.mxu0
        %941 = vmatprep.mubr.bf16.mxu0 0
        %942 = vmatmul.mubr.bf16.gmra.mxu0 %v665
        %v943 = vpop.f32.mrf.mxu0
        %v944 = vadd.f32 %v569, %v943
        %v945 = vpop.f32.mrf.mxu0
        %v946 = vpop.f32.mrf.mxu0
        %v947 = vadd.f32 %v569, %v946
        %v948 = vpop.f32.mrf.mxu0
        %949 = vmatprep.mubr.bf16.mxu0 0
        %950 = vmatmul.mubr.bf16.gmra.mxu0 %v668
        %v951 = vpop.f32.mrf.mxu0
        %v952 = vadd.f32 %v569, %v951
        %v953 = vpop.f32.mrf.mxu0
        %v954 = vpop.f32.mrf.mxu0
        %v955 = vadd.f32 %v569, %v954
        %v956 = vpop.f32.mrf.mxu0
        %957 = vmatprep.mubr.bf16.mxu0 0
        %958 = vmatmul.mubr.bf16.gmra.mxu0 %v671
        %v959 = vpop.f32.mrf.mxu0
        %v960 = vadd.f32 %v569, %v959
        %v961 = vpop.f32.mrf.mxu0
        %v962 = vpop.f32.mrf.mxu0
        %v963 = vadd.f32 %v569, %v962
        %v964 = vpop.f32.mrf.mxu0
        %965 = vdwg.mxu0
        %vm966 = vcmp.gt.f32.partialorder %v712, 0.0
        %vm967 = vcmp.gt.f32.partialorder %v715, 0.0
        %vm968 = vcmp.gt.f32.partialorder %v720, 0.0
        %vm969 = vcmp.gt.f32.partialorder %v723, 0.0
        %vm970 = vcmp.gt.f32.partialorder %v728, 0.0
        %vm971 = vcmp.gt.f32.partialorder %v731, 0.0
        %vm972 = vcmp.gt.f32.partialorder %v736, 0.0
        %vm973 = vcmp.gt.f32.partialorder %v739, 0.0
        %vm974 = vcmp.gt.f32.partialorder %v744, 0.0
        %vm975 = vcmp.gt.f32.partialorder %v747, 0.0
        %vm976 = vcmp.gt.f32.partialorder %v752, 0.0
        %vm977 = vcmp.gt.f32.partialorder %v755, 0.0
        %vm978 = vcmp.gt.f32.partialorder %v760, 0.0
        %vm979 = vcmp.gt.f32.partialorder %v763, 0.0
        %vm980 = vcmp.gt.f32.partialorder %v768, 0.0
        %vm981 = vcmp.gt.f32.partialorder %v771, 0.0
        %vm982 = vcmp.gt.f32.partialorder %v776, 0.0
        %vm983 = vcmp.gt.f32.partialorder %v779, 0.0
        %vm984 = vcmp.gt.f32.partialorder %v784, 0.0
        %vm985 = vcmp.gt.f32.partialorder %v787, 0.0
        %vm986 = vcmp.gt.f32.partialorder %v792, 0.0
        %vm987 = vcmp.gt.f32.partialorder %v795, 0.0
        %vm988 = vcmp.gt.f32.partialorder %v800, 0.0
        %vm989 = vcmp.gt.f32.partialorder %v803, 0.0
        %vm990 = vcmp.gt.f32.partialorder %v808, 0.0
        %vm991 = vcmp.gt.f32.partialorder %v811, 0.0
        %vm992 = vcmp.gt.f32.partialorder %v816, 0.0
        %vm993 = vcmp.gt.f32.partialorder %v819, 0.0
        %vm994 = vcmp.gt.f32.partialorder %v824, 0.0
        %vm995 = vcmp.gt.f32.partialorder %v827, 0.0
        %vm996 = vcmp.gt.f32.partialorder %v832, 0.0
        %vm997 = vcmp.gt.f32.partialorder %v835, 0.0
        %vm998 = vcmp.gt.f32.partialorder %v840, 0.0
        %vm999 = vcmp.gt.f32.partialorder %v843, 0.0
        %vm1000 = vcmp.gt.f32.partialorder %v848, 0.0
        %vm1001 = vcmp.gt.f32.partialorder %v851, 0.0
        %vm1002 = vcmp.gt.f32.partialorder %v856, 0.0
        %vm1003 = vcmp.gt.f32.partialorder %v859, 0.0
        %vm1004 = vcmp.gt.f32.partialorder %v864, 0.0
        %vm1005 = vcmp.gt.f32.partialorder %v867, 0.0
        %vm1006 = vcmp.gt.f32.partialorder %v872, 0.0
        %vm1007 = vcmp.gt.f32.partialorder %v875, 0.0
        %vm1008 = vcmp.gt.f32.partialorder %v880, 0.0
        %vm1009 = vcmp.gt.f32.partialorder %v883, 0.0
        %vm1010 = vcmp.gt.f32.partialorder %v888, 0.0
        %vm1011 = vcmp.gt.f32.partialorder %v891, 0.0
        %vm1012 = vcmp.gt.f32.partialorder %v896, 0.0
        %vm1013 = vcmp.gt.f32.partialorder %v899, 0.0
        %vm1014 = vcmp.gt.f32.partialorder %v904, 0.0
        %vm1015 = vcmp.gt.f32.partialorder %v907, 0.0
        %vm1016 = vcmp.gt.f32.partialorder %v912, 0.0
        %vm1017 = vcmp.gt.f32.partialorder %v915, 0.0
        %vm1018 = vcmp.gt.f32.partialorder %v920, 0.0
        %vm1019 = vcmp.gt.f32.partialorder %v923, 0.0
        %vm1020 = vcmp.gt.f32.partialorder %v928, 0.0
        %vm1021 = vcmp.gt.f32.partialorder %v931, 0.0
        %vm1022 = vcmp.gt.f32.partialorder %v936, 0.0
        %vm1023 = vcmp.gt.f32.partialorder %v939, 0.0
        %vm1024 = vcmp.gt.f32.partialorder %v944, 0.0
        %vm1025 = vcmp.gt.f32.partialorder %v947, 0.0
        %vm1026 = vcmp.gt.f32.partialorder %v952, 0.0
        %vm1027 = vcmp.gt.f32.partialorder %v955, 0.0
        %vm1028 = vcmp.gt.f32.partialorder %v960, 0.0
        %vm1029 = vcmp.gt.f32.partialorder %v963, 0.0
        %v1030 = vmul.f32 %v712, 0.1
        %v1031 = vmul.f32 %v715, 0.1
        %v1032 = vmul.f32 %v720, 0.1
        %v1033 = vmul.f32 %v723, 0.1
        %v1034 = vmul.f32 %v728, 0.1
        %v1035 = vmul.f32 %v731, 0.1
        %v1036 = vmul.f32 %v736, 0.1
        %v1037 = vmul.f32 %v739, 0.1
        %v1038 = vmul.f32 %v744, 0.1
        %v1039 = vmul.f32 %v747, 0.1
        %v1040 = vmul.f32 %v752, 0.1
        %v1041 = vmul.f32 %v755, 0.1
        %v1042 = vmul.f32 %v760, 0.1
        %v1043 = vmul.f32 %v763, 0.1
        %v1044 = vmul.f32 %v768, 0.1
        %v1045 = vmul.f32 %v771, 0.1
        %v1046 = vmul.f32 %v776, 0.1
        %v1047 = vmul.f32 %v779, 0.1
        %v1048 = vmul.f32 %v784, 0.1
        %v1049 = vmul.f32 %v787, 0.1
        %v1050 = vmul.f32 %v792, 0.1
        %v1051 = vmul.f32 %v795, 0.1
        %v1052 = vmul.f32 %v800, 0.1
        %v1053 = vmul.f32 %v803, 0.1
        %v1054 = vmul.f32 %v808, 0.1
        %v1055 = vmul.f32 %v811, 0.1
        %v1056 = vmul.f32 %v816, 0.1
        %v1057 = vmul.f32 %v819, 0.1
        %v1058 = vmul.f32 %v824, 0.1
        %v1059 = vmul.f32 %v827, 0.1
        %v1060 = vmul.f32 %v832, 0.1
        %v1061 = vmul.f32 %v835, 0.1
        %v1062 = vmul.f32 %v840, 0.1
        %v1063 = vmul.f32 %v843, 0.1
        %v1064 = vmul.f32 %v848, 0.1
        %v1065 = vmul.f32 %v851, 0.1
        %v1066 = vmul.f32 %v856, 0.1
        %v1067 = vmul.f32 %v859, 0.1
        %v1068 = vmul.f32 %v864, 0.1
        %v1069 = vmul.f32 %v867, 0.1
        %v1070 = vmul.f32 %v872, 0.1
        %v1071 = vmul.f32 %v875, 0.1
        %v1072 = vmul.f32 %v880, 0.1
        %v1073 = vmul.f32 %v883, 0.1
        %v1074 = vmul.f32 %v888, 0.1
        %v1075 = vmul.f32 %v891, 0.1
        %v1076 = vmul.f32 %v896, 0.1
        %v1077 = vmul.f32 %v899, 0.1
        %v1078 = vmul.f32 %v904, 0.1
        %v1079 = vmul.f32 %v907, 0.1
        %v1080 = vmul.f32 %v912, 0.1
        %v1081 = vmul.f32 %v915, 0.1
        %v1082 = vmul.f32 %v920, 0.1
        %v1083 = vmul.f32 %v923, 0.1
        %v1084 = vmul.f32 %v928, 0.1
        %v1085 = vmul.f32 %v931, 0.1
        %v1086 = vmul.f32 %v936, 0.1
        %v1087 = vmul.f32 %v939, 0.1
        %v1088 = vmul.f32 %v944, 0.1
        %v1089 = vmul.f32 %v947, 0.1
        %v1090 = vmul.f32 %v952, 0.1
        %v1091 = vmul.f32 %v955, 0.1
        %v1092 = vmul.f32 %v960, 0.1
        %v1093 = vmul.f32 %v963, 0.1
        %v1094 = vsel %vm966, %v712, %v1030
        %v1095 = vsel %vm967, %v715, %v1031
        %v1096 = vsel %vm968, %v720, %v1032
        %v1097 = vsel %vm969, %v723, %v1033
        %v1098 = vsel %vm970, %v728, %v1034
        %v1099 = vsel %vm971, %v731, %v1035
        %v1100 = vsel %vm972, %v736, %v1036
        %v1101 = vsel %vm973, %v739, %v1037
        %v1102 = vsel %vm974, %v744, %v1038
        %v1103 = vsel %vm975, %v747, %v1039
        %v1104 = vsel %vm976, %v752, %v1040
        %v1105 = vsel %vm977, %v755, %v1041
        %v1106 = vsel %vm978, %v760, %v1042
        %v1107 = vsel %vm979, %v763, %v1043
        %v1108 = vsel %vm980, %v768, %v1044
        %v1109 = vsel %vm981, %v771, %v1045
        %v1110 = vsel %vm982, %v776, %v1046
        %v1111 = vsel %vm983, %v779, %v1047
        %v1112 = vsel %vm984, %v784, %v1048
        %v1113 = vsel %vm985, %v787, %v1049
        %v1114 = vsel %vm986, %v792, %v1050
        %v1115 = vsel %vm987, %v795, %v1051
        %v1116 = vsel %vm988, %v800, %v1052
        %v1117 = vsel %vm989, %v803, %v1053
        %v1118 = vsel %vm990, %v808, %v1054
        %v1119 = vsel %vm991, %v811, %v1055
        %v1120 = vsel %vm992, %v816, %v1056
        %v1121 = vsel %vm993, %v819, %v1057
        %v1122 = vsel %vm994, %v824, %v1058
        %v1123 = vsel %vm995, %v827, %v1059
        %v1124 = vsel %vm996, %v832, %v1060
        %v1125 = vsel %vm997, %v835, %v1061
        %v1126 = vsel %vm998, %v840, %v1062
        %v1127 = vsel %vm999, %v843, %v1063
        %v1128 = vsel %vm1000, %v848, %v1064
        %v1129 = vsel %vm1001, %v851, %v1065
        %v1130 = vsel %vm1002, %v856, %v1066
        %v1131 = vsel %vm1003, %v859, %v1067
        %v1132 = vsel %vm1004, %v864, %v1068
        %v1133 = vsel %vm1005, %v867, %v1069
        %v1134 = vsel %vm1006, %v872, %v1070
        %v1135 = vsel %vm1007, %v875, %v1071
        %v1136 = vsel %vm1008, %v880, %v1072
        %v1137 = vsel %vm1009, %v883, %v1073
        %v1138 = vsel %vm1010, %v888, %v1074
        %v1139 = vsel %vm1011, %v891, %v1075
        %v1140 = vsel %vm1012, %v896, %v1076
        %v1141 = vsel %vm1013, %v899, %v1077
        %v1142 = vsel %vm1014, %v904, %v1078
        %v1143 = vsel %vm1015, %v907, %v1079
        %v1144 = vsel %vm1016, %v912, %v1080
        %v1145 = vsel %vm1017, %v915, %v1081
        %v1146 = vsel %vm1018, %v920, %v1082
        %v1147 = vsel %vm1019, %v923, %v1083
        %v1148 = vsel %vm1020, %v928, %v1084
        %v1149 = vsel %vm1021, %v931, %v1085
        %v1150 = vsel %vm1022, %v936, %v1086
        %v1151 = vsel %vm1023, %v939, %v1087
        %v1152 = vsel %vm1024, %v944, %v1088
        %v1153 = vsel %vm1025, %v947, %v1089
        %v1154 = vsel %vm1026, %v952, %v1090
        %v1155 = vsel %vm1027, %v955, %v1091
        %v1156 = vsel %vm1028, %v960, %v1092
        %v1157 = vsel %vm1029, %v963, %v1093
        %vm1158 = vcmask 64512
        %1159 = vst.msk [vmem:[#allocation2] sm:$0xff] %vm1158, 0.0
        %1160 = vst.msk [vmem:[#allocation2 + $0x8] sm:$0xff] %vm1158, %v1094
        %1161 = vst.msk [vmem:[#allocation2 + $0x10] sm:$0xff] %vm1158, %v1095
        %1162 = vst.msk [vmem:[#allocation2 + $0x18] sm:$0xff] %vm1158, %v1096
        %1163 = vst.msk [vmem:[#allocation2 + $0x20] sm:$0xff] %vm1158, %v1097
        %1164 = vst.msk [vmem:[#allocation2 + $0x28] sm:$0xff] %vm1158, %v1098
        %1165 = vst.msk [vmem:[#allocation2 + $0x30] sm:$0xff] %vm1158, %v1099
        %1166 = vst.msk [vmem:[#allocation2 + $0x38] sm:$0xff] %vm1158, %v1100
        %1167 = vst.msk [vmem:[#allocation2 + $0x40] sm:$0xff] %vm1158, %v1101
        %1168 = vst.msk [vmem:[#allocation2 + $0x48] sm:$0xff] %vm1158, %v1102
        %1169 = vst.msk [vmem:[#allocation2 + $0x50] sm:$0xff] %vm1158, %v1103
        %1170 = vst.msk [vmem:[#allocation2 + $0x58] sm:$0xff] %vm1158, %v1104
        %1171 = vst.msk [vmem:[#allocation2 + $0x60] sm:$0xff] %vm1158, %v1105
        %1172 = vst.msk [vmem:[#allocation2 + $0x68] sm:$0xff] %vm1158, %v1106
        %1173 = vst.msk [vmem:[#allocation2 + $0x70] sm:$0xff] %vm1158, %v1107
        %1174 = vst.msk [vmem:[#allocation2 + $0x78] sm:$0xff] %vm1158, %v1108
        %1175 = vst.msk [vmem:[#allocation2 + $0x80] sm:$0xff] %vm1158, %v1109
        %1176 = vst.msk [vmem:[#allocation2 + $0x88] sm:$0xff] %vm1158, %v1110
        %1177 = vst.msk [vmem:[#allocation2 + $0x90] sm:$0xff] %vm1158, %v1111
        %1178 = vst.msk [vmem:[#allocation2 + $0x98] sm:$0xff] %vm1158, %v1112
        %1179 = vst.msk [vmem:[#allocation2 + $0xa0] sm:$0xff] %vm1158, %v1113
        %1180 = vst.msk [vmem:[#allocation2 + $0xa8] sm:$0xff] %vm1158, %v1114
        %1181 = vst.msk [vmem:[#allocation2 + $0xb0] sm:$0xff] %vm1158, %v1115
        %1182 = vst.msk [vmem:[#allocation2 + $0xb8] sm:$0xff] %vm1158, %v1116
        %1183 = vst.msk [vmem:[#allocation2 + $0xc0] sm:$0xff] %vm1158, %v1117
        %1184 = vst.msk [vmem:[#allocation2 + $0xc8] sm:$0xff] %vm1158, %v1118
        %1185 = vst.msk [vmem:[#allocation2 + $0xd0] sm:$0xff] %vm1158, %v1119
        %1186 = vst.msk [vmem:[#allocation2 + $0xd8] sm:$0xff] %vm1158, %v1120
        %1187 = vst.msk [vmem:[#allocation2 + $0xe0] sm:$0xff] %vm1158, %v1121
        %1188 = vst.msk [vmem:[#allocation2 + $0xe8] sm:$0xff] %vm1158, %v1122
        %1189 = vst.msk [vmem:[#allocation2 + $0xf0] sm:$0xff] %vm1158, %v1123
        %1190 = vst.msk [vmem:[#allocation2 + $0xf8] sm:$0xff] %vm1158, %v1124
        %1191 = vst.msk [vmem:[#allocation2 + $0x100] sm:$0xff] %vm1158, %v1125
        %1192 = vst.msk [vmem:[#allocation2 + $0x108] sm:$0xff] %vm1158, %v1126
        %1193 = vst.msk [vmem:[#allocation2 + $0x110] sm:$0xff] %vm1158, %v1127
        %1194 = vst.msk [vmem:[#allocation2 + $0x118] sm:$0xff] %vm1158, %v1128
        %1195 = vst.msk [vmem:[#allocation2 + $0x120] sm:$0xff] %vm1158, %v1129
        %1196 = vst.msk [vmem:[#allocation2 + $0x128] sm:$0xff] %vm1158, %v1130
        %1197 = vst.msk [vmem:[#allocation2 + $0x130] sm:$0xff] %vm1158, %v1131
        %1198 = vst.msk [vmem:[#allocation2 + $0x138] sm:$0xff] %vm1158, %v1132
        %1199 = vst.msk [vmem:[#allocation2 + $0x140] sm:$0xff] %vm1158, %v1133
        %1200 = vst.msk [vmem:[#allocation2 + $0x148] sm:$0xff] %vm1158, %v1134
        %1201 = vst.msk [vmem:[#allocation2 + $0x150] sm:$0xff] %vm1158, %v1135
        %1202 = vst.msk [vmem:[#allocation2 + $0x158] sm:$0xff] %vm1158, %v1136
        %1203 = vst.msk [vmem:[#allocation2 + $0x160] sm:$0xff] %vm1158, %v1137
        %1204 = vst.msk [vmem:[#allocation2 + $0x168] sm:$0xff] %vm1158, %v1138
        %1205 = vst.msk [vmem:[#allocation2 + $0x170] sm:$0xff] %vm1158, %v1139
        %1206 = vst.msk [vmem:[#allocation2 + $0x178] sm:$0xff] %vm1158, %v1140
        %1207 = vst.msk [vmem:[#allocation2 + $0x180] sm:$0xff] %vm1158, %v1141
        %1208 = vst.msk [vmem:[#allocation2 + $0x188] sm:$0xff] %vm1158, %v1142
        %1209 = vst.msk [vmem:[#allocation2 + $0x190] sm:$0xff] %vm1158, %v1143
        %1210 = vst.msk [vmem:[#allocation2 + $0x198] sm:$0xff] %vm1158, %v1144
        %1211 = vst.msk [vmem:[#allocation2 + $0x1a0] sm:$0xff] %vm1158, %v1145
        %1212 = vst.msk [vmem:[#allocation2 + $0x1a8] sm:$0xff] %vm1158, %v1146
        %1213 = vst.msk [vmem:[#allocation2 + $0x1b0] sm:$0xff] %vm1158, %v1147
        %1214 = vst.msk [vmem:[#allocation2 + $0x1b8] sm:$0xff] %vm1158, %v1148
        %1215 = vst.msk [vmem:[#allocation2 + $0x1c0] sm:$0xff] %vm1158, %v1149
        %1216 = vst.msk [vmem:[#allocation2 + $0x1c8] sm:$0xff] %vm1158, %v1150
        %1217 = vst.msk [vmem:[#allocation2 + $0x1d0] sm:$0xff] %vm1158, %v1151
        %1218 = vst.msk [vmem:[#allocation2 + $0x1d8] sm:$0xff] %vm1158, %v1152
        %1219 = vst.msk [vmem:[#allocation2 + $0x1e0] sm:$0xff] %vm1158, %v1153
        %1220 = vst.msk [vmem:[#allocation2 + $0x1e8] sm:$0xff] %vm1158, %v1154
        %1221 = vst.msk [vmem:[#allocation2 + $0x1f0] sm:$0xff] %vm1158, %v1155
        %1222 = vst.msk [vmem:[#allocation2 + $0x1f8] sm:$0xff] %vm1158, %v1156
        %1223 = vst.msk [vmem:[#allocation2 + $0x200] sm:$0xff] %vm1158, %v1157
        %1224 = vst.msk [vmem:[#allocation2 + $0x208] sm:$0xff] %vm1158, 0.0
        %s1225 = scalar_lea.vmem [#allocation2], 7
        %v1226 = vld [vmem:[%s1225] ss:$2 sm:$0xff]
        %s1227 = scalar_lea.vmem [#allocation2], 23
        %v1228 = vld [vmem:[%s1227] ss:$2 sm:$0xff]
        %s1229 = scalar_lea.vmem [#allocation2], 39
        %v1230 = vld [vmem:[%s1229] ss:$2 sm:$0xff]
        %s1231 = scalar_lea.vmem [#allocation2], 55
        %v1232 = vld [vmem:[%s1231] ss:$2 sm:$0xff]
        %s1233 = scalar_lea.vmem [#allocation2], 71
        %v1234 = vld [vmem:[%s1233] ss:$2 sm:$0xff]
        %s1235 = scalar_lea.vmem [#allocation2], 87
        %v1236 = vld [vmem:[%s1235] ss:$2 sm:$0xff]
        %s1237 = scalar_lea.vmem [#allocation2], 103
        %v1238 = vld [vmem:[%s1237] ss:$2 sm:$0xff]
        %s1239 = scalar_lea.vmem [#allocation2], 119
        %v1240 = vld [vmem:[%s1239] ss:$2 sm:$0xff]
        %s1241 = scalar_lea.vmem [#allocation2], 135
        %v1242 = vld [vmem:[%s1241] ss:$2 sm:$0xff]
        %s1243 = scalar_lea.vmem [#allocation2], 151
        %v1244 = vld [vmem:[%s1243] ss:$2 sm:$0xff]
        %s1245 = scalar_lea.vmem [#allocation2], 167
        %v1246 = vld [vmem:[%s1245] ss:$2 sm:$0xff]
        %s1247 = scalar_lea.vmem [#allocation2], 183
        %v1248 = vld [vmem:[%s1247] ss:$2 sm:$0xff]
        %s1249 = scalar_lea.vmem [#allocation2], 199
        %v1250 = vld [vmem:[%s1249] ss:$2 sm:$0xff]
        %s1251 = scalar_lea.vmem [#allocation2], 215
        %v1252 = vld [vmem:[%s1251] ss:$2 sm:$0xff]
        %s1253 = scalar_lea.vmem [#allocation2], 231
        %v1254 = vld [vmem:[%s1253] ss:$2 sm:$0xff]
        %s1255 = scalar_lea.vmem [#allocation2], 247
        %v1256 = vld [vmem:[%s1255] ss:$2 sm:$0xff]
        %s1257 = scalar_lea.vmem [#allocation2], 263
        %v1258 = vld [vmem:[%s1257] ss:$2 sm:$0xff]
        %s1259 = scalar_lea.vmem [#allocation2], 279
        %v1260 = vld [vmem:[%s1259] ss:$2 sm:$0xff]
        %s1261 = scalar_lea.vmem [#allocation2], 295
        %v1262 = vld [vmem:[%s1261] ss:$2 sm:$0xff]
        %s1263 = scalar_lea.vmem [#allocation2], 311
        %v1264 = vld [vmem:[%s1263] ss:$2 sm:$0xff]
        %s1265 = scalar_lea.vmem [#allocation2], 327
        %v1266 = vld [vmem:[%s1265] ss:$2 sm:$0xff]
        %s1267 = scalar_lea.vmem [#allocation2], 343
        %v1268 = vld [vmem:[%s1267] ss:$2 sm:$0xff]
        %s1269 = scalar_lea.vmem [#allocation2], 359
        %v1270 = vld [vmem:[%s1269] ss:$2 sm:$0xff]
        %s1271 = scalar_lea.vmem [#allocation2], 375
        %v1272 = vld [vmem:[%s1271] ss:$2 sm:$0xff]
        %s1273 = scalar_lea.vmem [#allocation2], 391
        %v1274 = vld [vmem:[%s1273] ss:$2 sm:$0xff]
        %s1275 = scalar_lea.vmem [#allocation2], 407
        %v1276 = vld [vmem:[%s1275] ss:$2 sm:$0xff]
        %s1277 = scalar_lea.vmem [#allocation2], 423
        %v1278 = vld [vmem:[%s1277] ss:$2 sm:$0xff]
        %s1279 = scalar_lea.vmem [#allocation2], 439
        %v1280 = vld [vmem:[%s1279] ss:$2 sm:$0xff]
        %s1281 = scalar_lea.vmem [#allocation2], 455
        %v1282 = vld [vmem:[%s1281] ss:$2 sm:$0xff]
        %s1283 = scalar_lea.vmem [#allocation2], 471
        %v1284 = vld [vmem:[%s1283] ss:$2 sm:$0xff]
        %s1285 = scalar_lea.vmem [#allocation2], 487
        %v1286 = vld [vmem:[%s1285] ss:$2 sm:$0xff]
        %s1287 = scalar_lea.vmem [#allocation2], 503
        %v1288 = vld [vmem:[%s1287] ss:$2 sm:$0xff]
        %s1289 = scalar_lea.vmem [#allocation2], 8
        %v1290 = vld [vmem:[%s1289] ss:$2 sm:$0xff]
        %s1291 = scalar_lea.vmem [#allocation2], 24
        %v1292 = vld [vmem:[%s1291] ss:$2 sm:$0xff]
        %s1293 = scalar_lea.vmem [#allocation2], 40
        %v1294 = vld [vmem:[%s1293] ss:$2 sm:$0xff]
        %s1295 = scalar_lea.vmem [#allocation2], 56
        %v1296 = vld [vmem:[%s1295] ss:$2 sm:$0xff]
        %s1297 = scalar_lea.vmem [#allocation2], 72
        %v1298 = vld [vmem:[%s1297] ss:$2 sm:$0xff]
        %s1299 = scalar_lea.vmem [#allocation2], 88
        %v1300 = vld [vmem:[%s1299] ss:$2 sm:$0xff]
        %s1301 = scalar_lea.vmem [#allocation2], 104
        %v1302 = vld [vmem:[%s1301] ss:$2 sm:$0xff]
        %s1303 = scalar_lea.vmem [#allocation2], 120
        %v1304 = vld [vmem:[%s1303] ss:$2 sm:$0xff]
        %s1305 = scalar_lea.vmem [#allocation2], 136
        %v1306 = vld [vmem:[%s1305] ss:$2 sm:$0xff]
        %s1307 = scalar_lea.vmem [#allocation2], 152
        %v1308 = vld [vmem:[%s1307] ss:$2 sm:$0xff]
        %s1309 = scalar_lea.vmem [#allocation2], 168
        %v1310 = vld [vmem:[%s1309] ss:$2 sm:$0xff]
        %s1311 = scalar_lea.vmem [#allocation2], 184
        %v1312 = vld [vmem:[%s1311] ss:$2 sm:$0xff]
        %s1313 = scalar_lea.vmem [#allocation2], 200
        %v1314 = vld [vmem:[%s1313] ss:$2 sm:$0xff]
        %s1315 = scalar_lea.vmem [#allocation2], 216
        %v1316 = vld [vmem:[%s1315] ss:$2 sm:$0xff]
        %s1317 = scalar_lea.vmem [#allocation2], 232
        %v1318 = vld [vmem:[%s1317] ss:$2 sm:$0xff]
        %s1319 = scalar_lea.vmem [#allocation2], 248
        %v1320 = vld [vmem:[%s1319] ss:$2 sm:$0xff]
        %s1321 = scalar_lea.vmem [#allocation2], 264
        %v1322 = vld [vmem:[%s1321] ss:$2 sm:$0xff]
        %s1323 = scalar_lea.vmem [#allocation2], 280
        %v1324 = vld [vmem:[%s1323] ss:$2 sm:$0xff]
        %s1325 = scalar_lea.vmem [#allocation2], 296
        %v1326 = vld [vmem:[%s1325] ss:$2 sm:$0xff]
        %s1327 = scalar_lea.vmem [#allocation2], 312
        %v1328 = vld [vmem:[%s1327] ss:$2 sm:$0xff]
        %s1329 = scalar_lea.vmem [#allocation2], 328
        %v1330 = vld [vmem:[%s1329] ss:$2 sm:$0xff]
        %s1331 = scalar_lea.vmem [#allocation2], 344
        %v1332 = vld [vmem:[%s1331] ss:$2 sm:$0xff]
        %s1333 = scalar_lea.vmem [#allocation2], 360
        %v1334 = vld [vmem:[%s1333] ss:$2 sm:$0xff]
        %s1335 = scalar_lea.vmem [#allocation2], 376
        %v1336 = vld [vmem:[%s1335] ss:$2 sm:$0xff]
        %s1337 = scalar_lea.vmem [#allocation2], 392
        %v1338 = vld [vmem:[%s1337] ss:$2 sm:$0xff]
        %s1339 = scalar_lea.vmem [#allocation2], 408
        %v1340 = vld [vmem:[%s1339] ss:$2 sm:$0xff]
        %s1341 = scalar_lea.vmem [#allocation2], 424
        %v1342 = vld [vmem:[%s1341] ss:$2 sm:$0xff]
        %s1343 = scalar_lea.vmem [#allocation2], 440
        %v1344 = vld [vmem:[%s1343] ss:$2 sm:$0xff]
        %s1345 = scalar_lea.vmem [#allocation2], 456
        %v1346 = vld [vmem:[%s1345] ss:$2 sm:$0xff]
        %s1347 = scalar_lea.vmem [#allocation2], 472
        %v1348 = vld [vmem:[%s1347] ss:$2 sm:$0xff]
        %s1349 = scalar_lea.vmem [#allocation2], 488
        %v1350 = vld [vmem:[%s1349] ss:$2 sm:$0xff]
        %s1351 = scalar_lea.vmem [#allocation2], 504
        %v1352 = vld [vmem:[%s1351] ss:$2 sm:$0xff]
        %s1353 = scalar_lea.vmem [#allocation2], 9
        %v1354 = vld [vmem:[%s1353] ss:$2 sm:$0xff]
        %s1355 = scalar_lea.vmem [#allocation2], 25
        %v1356 = vld [vmem:[%s1355] ss:$2 sm:$0xff]
        %s1357 = scalar_lea.vmem [#allocation2], 41
        %v1358 = vld [vmem:[%s1357] ss:$2 sm:$0xff]
        %s1359 = scalar_lea.vmem [#allocation2], 57
        %v1360 = vld [vmem:[%s1359] ss:$2 sm:$0xff]
        %s1361 = scalar_lea.vmem [#allocation2], 73
        %v1362 = vld [vmem:[%s1361] ss:$2 sm:$0xff]
        %s1363 = scalar_lea.vmem [#allocation2], 89
        %v1364 = vld [vmem:[%s1363] ss:$2 sm:$0xff]
        %s1365 = scalar_lea.vmem [#allocation2], 105
        %v1366 = vld [vmem:[%s1365] ss:$2 sm:$0xff]
        %s1367 = scalar_lea.vmem [#allocation2], 121
        %v1368 = vld [vmem:[%s1367] ss:$2 sm:$0xff]
        %s1369 = scalar_lea.vmem [#allocation2], 137
        %v1370 = vld [vmem:[%s1369] ss:$2 sm:$0xff]
        %s1371 = scalar_lea.vmem [#allocation2], 153
        %v1372 = vld [vmem:[%s1371] ss:$2 sm:$0xff]
        %s1373 = scalar_lea.vmem [#allocation2], 169
        %v1374 = vld [vmem:[%s1373] ss:$2 sm:$0xff]
        %s1375 = scalar_lea.vmem [#allocation2], 185
        %v1376 = vld [vmem:[%s1375] ss:$2 sm:$0xff]
        %s1377 = scalar_lea.vmem [#allocation2], 201
        %v1378 = vld [vmem:[%s1377] ss:$2 sm:$0xff]
        %s1379 = scalar_lea.vmem [#allocation2], 217
        %v1380 = vld [vmem:[%s1379] ss:$2 sm:$0xff]
        %s1381 = scalar_lea.vmem [#allocation2], 233
        %v1382 = vld [vmem:[%s1381] ss:$2 sm:$0xff]
        %s1383 = scalar_lea.vmem [#allocation2], 249
        %v1384 = vld [vmem:[%s1383] ss:$2 sm:$0xff]
        %s1385 = scalar_lea.vmem [#allocation2], 265
        %v1386 = vld [vmem:[%s1385] ss:$2 sm:$0xff]
        %s1387 = scalar_lea.vmem [#allocation2], 281
        %v1388 = vld [vmem:[%s1387] ss:$2 sm:$0xff]
        %s1389 = scalar_lea.vmem [#allocation2], 297
        %v1390 = vld [vmem:[%s1389] ss:$2 sm:$0xff]
        %s1391 = scalar_lea.vmem [#allocation2], 313
        %v1392 = vld [vmem:[%s1391] ss:$2 sm:$0xff]
        %s1393 = scalar_lea.vmem [#allocation2], 329
        %v1394 = vld [vmem:[%s1393] ss:$2 sm:$0xff]
        %s1395 = scalar_lea.vmem [#allocation2], 345
        %v1396 = vld [vmem:[%s1395] ss:$2 sm:$0xff]
        %s1397 = scalar_lea.vmem [#allocation2], 361
        %v1398 = vld [vmem:[%s1397] ss:$2 sm:$0xff]
        %s1399 = scalar_lea.vmem [#allocation2], 377
        %v1400 = vld [vmem:[%s1399] ss:$2 sm:$0xff]
        %s1401 = scalar_lea.vmem [#allocation2], 393
        %v1402 = vld [vmem:[%s1401] ss:$2 sm:$0xff]
        %s1403 = scalar_lea.vmem [#allocation2], 409
        %v1404 = vld [vmem:[%s1403] ss:$2 sm:$0xff]
        %s1405 = scalar_lea.vmem [#allocation2], 425
        %v1406 = vld [vmem:[%s1405] ss:$2 sm:$0xff]
        %s1407 = scalar_lea.vmem [#allocation2], 441
        %v1408 = vld [vmem:[%s1407] ss:$2 sm:$0xff]
        %s1409 = scalar_lea.vmem [#allocation2], 457
        %v1410 = vld [vmem:[%s1409] ss:$2 sm:$0xff]
        %s1411 = scalar_lea.vmem [#allocation2], 473
        %v1412 = vld [vmem:[%s1411] ss:$2 sm:$0xff]
        %s1413 = scalar_lea.vmem [#allocation2], 489
        %v1414 = vld [vmem:[%s1413] ss:$2 sm:$0xff]
        %s1415 = scalar_lea.vmem [#allocation2], 505
        %v1416 = vld [vmem:[%s1415] ss:$2 sm:$0xff]
        %s1417 = scalar_lea.vmem [#allocation2], 10
        %v1418 = vld [vmem:[%s1417] ss:$2 sm:$0xff]
        %s1419 = scalar_lea.vmem [#allocation2], 26
        %v1420 = vld [vmem:[%s1419] ss:$2 sm:$0xff]
        %s1421 = scalar_lea.vmem [#allocation2], 42
        %v1422 = vld [vmem:[%s1421] ss:$2 sm:$0xff]
        %s1423 = scalar_lea.vmem [#allocation2], 58
        %v1424 = vld [vmem:[%s1423] ss:$2 sm:$0xff]
        %s1425 = scalar_lea.vmem [#allocation2], 74
        %v1426 = vld [vmem:[%s1425] ss:$2 sm:$0xff]
        %s1427 = scalar_lea.vmem [#allocation2], 90
        %v1428 = vld [vmem:[%s1427] ss:$2 sm:$0xff]
        %s1429 = scalar_lea.vmem [#allocation2], 106
        %v1430 = vld [vmem:[%s1429] ss:$2 sm:$0xff]
        %s1431 = scalar_lea.vmem [#allocation2], 122
        %v1432 = vld [vmem:[%s1431] ss:$2 sm:$0xff]
        %s1433 = scalar_lea.vmem [#allocation2], 138
        %v1434 = vld [vmem:[%s1433] ss:$2 sm:$0xff]
        %s1435 = scalar_lea.vmem [#allocation2], 154
        %v1436 = vld [vmem:[%s1435] ss:$2 sm:$0xff]
        %s1437 = scalar_lea.vmem [#allocation2], 170
        %v1438 = vld [vmem:[%s1437] ss:$2 sm:$0xff]
        %s1439 = scalar_lea.vmem [#allocation2], 186
        %v1440 = vld [vmem:[%s1439] ss:$2 sm:$0xff]
        %s1441 = scalar_lea.vmem [#allocation2], 202
        %v1442 = vld [vmem:[%s1441] ss:$2 sm:$0xff]
        %s1443 = scalar_lea.vmem [#allocation2], 218
        %v1444 = vld [vmem:[%s1443] ss:$2 sm:$0xff]
        %s1445 = scalar_lea.vmem [#allocation2], 234
        %v1446 = vld [vmem:[%s1445] ss:$2 sm:$0xff]
        %s1447 = scalar_lea.vmem [#allocation2], 250
        %v1448 = vld [vmem:[%s1447] ss:$2 sm:$0xff]
        %s1449 = scalar_lea.vmem [#allocation2], 266
        %v1450 = vld [vmem:[%s1449] ss:$2 sm:$0xff]
        %s1451 = scalar_lea.vmem [#allocation2], 282
        %v1452 = vld [vmem:[%s1451] ss:$2 sm:$0xff]
        %s1453 = scalar_lea.vmem [#allocation2], 298
        %v1454 = vld [vmem:[%s1453] ss:$2 sm:$0xff]
        %s1455 = scalar_lea.vmem [#allocation2], 314
        %v1456 = vld [vmem:[%s1455] ss:$2 sm:$0xff]
        %s1457 = scalar_lea.vmem [#allocation2], 330
        %v1458 = vld [vmem:[%s1457] ss:$2 sm:$0xff]
        %s1459 = scalar_lea.vmem [#allocation2], 346
        %v1460 = vld [vmem:[%s1459] ss:$2 sm:$0xff]
        %s1461 = scalar_lea.vmem [#allocation2], 362
        %v1462 = vld [vmem:[%s1461] ss:$2 sm:$0xff]
        %s1463 = scalar_lea.vmem [#allocation2], 378
        %v1464 = vld [vmem:[%s1463] ss:$2 sm:$0xff]
        %s1465 = scalar_lea.vmem [#allocation2], 394
        %v1466 = vld [vmem:[%s1465] ss:$2 sm:$0xff]
        %s1467 = scalar_lea.vmem [#allocation2], 410
        %v1468 = vld [vmem:[%s1467] ss:$2 sm:$0xff]
        %s1469 = scalar_lea.vmem [#allocation2], 426
        %v1470 = vld [vmem:[%s1469] ss:$2 sm:$0xff]
        %s1471 = scalar_lea.vmem [#allocation2], 442
        %v1472 = vld [vmem:[%s1471] ss:$2 sm:$0xff]
        %s1473 = scalar_lea.vmem [#allocation2], 458
        %v1474 = vld [vmem:[%s1473] ss:$2 sm:$0xff]
        %s1475 = scalar_lea.vmem [#allocation2], 474
        %v1476 = vld [vmem:[%s1475] ss:$2 sm:$0xff]
        %s1477 = scalar_lea.vmem [#allocation2], 490
        %v1478 = vld [vmem:[%s1477] ss:$2 sm:$0xff]
        %s1479 = scalar_lea.vmem [#allocation2], 506
        %v1480 = vld [vmem:[%s1479] ss:$2 sm:$0xff]
        %1513 = vrot.lane.b32.xlu0 %v1290, 8
        %v1514 = vpop.permute.xlu0 %1513
        %1515 = vrot.lane.b32.xlu0 %v1292, 8
        %v1516 = vpop.permute.xlu0 %1515
        %1517 = vrot.lane.b32.xlu0 %v1294, 8
        %v1518 = vpop.permute.xlu0 %1517
        %1519 = vrot.lane.b32.xlu0 %v1296, 8
        %v1520 = vpop.permute.xlu0 %1519
        %1521 = vrot.lane.b32.xlu0 %v1298, 8
        %v1522 = vpop.permute.xlu0 %1521
        %1523 = vrot.lane.b32.xlu0 %v1300, 8
        %v1524 = vpop.permute.xlu0 %1523
        %1525 = vrot.lane.b32.xlu0 %v1302, 8
        %v1526 = vpop.permute.xlu0 %1525
        %1527 = vrot.lane.b32.xlu0 %v1304, 8
        %v1528 = vpop.permute.xlu0 %1527
        %1529 = vrot.lane.b32.xlu0 %v1306, 8
        %v1530 = vpop.permute.xlu0 %1529
        %1531 = vrot.lane.b32.xlu0 %v1308, 8
        %v1532 = vpop.permute.xlu0 %1531
        %1533 = vrot.lane.b32.xlu0 %v1310, 8
        %v1534 = vpop.permute.xlu0 %1533
        %1535 = vrot.lane.b32.xlu0 %v1312, 8
        %v1536 = vpop.permute.xlu0 %1535
        %1537 = vrot.lane.b32.xlu0 %v1314, 8
        %v1538 = vpop.permute.xlu0 %1537
        %1539 = vrot.lane.b32.xlu0 %v1316, 8
        %v1540 = vpop.permute.xlu0 %1539
        %1541 = vrot.lane.b32.xlu0 %v1318, 8
        %v1542 = vpop.permute.xlu0 %1541
        %1543 = vrot.lane.b32.xlu0 %v1320, 8
        %v1544 = vpop.permute.xlu0 %1543
        %1545 = vrot.lane.b32.xlu0 %v1322, 8
        %v1546 = vpop.permute.xlu0 %1545
        %1547 = vrot.lane.b32.xlu0 %v1324, 8
        %v1548 = vpop.permute.xlu0 %1547
        %1549 = vrot.lane.b32.xlu0 %v1326, 8
        %v1550 = vpop.permute.xlu0 %1549
        %1551 = vrot.lane.b32.xlu0 %v1328, 8
        %v1552 = vpop.permute.xlu0 %1551
        %1553 = vrot.lane.b32.xlu0 %v1330, 8
        %v1554 = vpop.permute.xlu0 %1553
        %1555 = vrot.lane.b32.xlu0 %v1332, 8
        %v1556 = vpop.permute.xlu0 %1555
        %1557 = vrot.lane.b32.xlu0 %v1334, 8
        %v1558 = vpop.permute.xlu0 %1557
        %1559 = vrot.lane.b32.xlu0 %v1336, 8
        %v1560 = vpop.permute.xlu0 %1559
        %1561 = vrot.lane.b32.xlu0 %v1338, 8
        %v1562 = vpop.permute.xlu0 %1561
        %1563 = vrot.lane.b32.xlu0 %v1340, 8
        %v1564 = vpop.permute.xlu0 %1563
        %1565 = vrot.lane.b32.xlu0 %v1342, 8
        %v1566 = vpop.permute.xlu0 %1565
        %1567 = vrot.lane.b32.xlu0 %v1344, 8
        %v1568 = vpop.permute.xlu0 %1567
        %1569 = vrot.lane.b32.xlu0 %v1346, 8
        %v1570 = vpop.permute.xlu0 %1569
        %1571 = vrot.lane.b32.xlu0 %v1348, 8
        %v1572 = vpop.permute.xlu0 %1571
        %1573 = vrot.lane.b32.xlu0 %v1350, 8
        %v1574 = vpop.permute.xlu0 %1573
        %1575 = vrot.lane.b32.xlu0 %v1352, 8
        %v1576 = vpop.permute.xlu0 %1575
        %1641 = vrot.lane.b32.xlu0 %v1354, 16
        %v1642 = vpop.permute.xlu0 %1641
        %1643 = vrot.lane.b32.xlu0 %v1356, 16
        %v1644 = vpop.permute.xlu0 %1643
        %1645 = vrot.lane.b32.xlu0 %v1358, 16
        %v1646 = vpop.permute.xlu0 %1645
        %1647 = vrot.lane.b32.xlu0 %v1360, 16
        %v1648 = vpop.permute.xlu0 %1647
        %1649 = vrot.lane.b32.xlu0 %v1362, 16
        %v1650 = vpop.permute.xlu0 %1649
        %1651 = vrot.lane.b32.xlu0 %v1364, 16
        %v1652 = vpop.permute.xlu0 %1651
        %1653 = vrot.lane.b32.xlu0 %v1366, 16
        %v1654 = vpop.permute.xlu0 %1653
        %1655 = vrot.lane.b32.xlu0 %v1368, 16
        %v1656 = vpop.permute.xlu0 %1655
        %1657 = vrot.lane.b32.xlu0 %v1370, 16
        %v1658 = vpop.permute.xlu0 %1657
        %1659 = vrot.lane.b32.xlu0 %v1372, 16
        %v1660 = vpop.permute.xlu0 %1659
        %1661 = vrot.lane.b32.xlu0 %v1374, 16
        %v1662 = vpop.permute.xlu0 %1661
        %1663 = vrot.lane.b32.xlu0 %v1376, 16
        %v1664 = vpop.permute.xlu0 %1663
        %1665 = vrot.lane.b32.xlu0 %v1378, 16
        %v1666 = vpop.permute.xlu0 %1665
        %1667 = vrot.lane.b32.xlu0 %v1380, 16
        %v1668 = vpop.permute.xlu0 %1667
        %1669 = vrot.lane.b32.xlu0 %v1382, 16
        %v1670 = vpop.permute.xlu0 %1669
        %1671 = vrot.lane.b32.xlu0 %v1384, 16
        %v1672 = vpop.permute.xlu0 %1671
        %1673 = vrot.lane.b32.xlu0 %v1386, 16
        %v1674 = vpop.permute.xlu0 %1673
        %1675 = vrot.lane.b32.xlu0 %v1388, 16
        %v1676 = vpop.permute.xlu0 %1675
        %1677 = vrot.lane.b32.xlu0 %v1390, 16
        %v1678 = vpop.permute.xlu0 %1677
        %1679 = vrot.lane.b32.xlu0 %v1392, 16
        %v1680 = vpop.permute.xlu0 %1679
        %1681 = vrot.lane.b32.xlu0 %v1394, 16
        %v1682 = vpop.permute.xlu0 %1681
        %1683 = vrot.lane.b32.xlu0 %v1396, 16
        %v1684 = vpop.permute.xlu0 %1683
        %1685 = vrot.lane.b32.xlu0 %v1398, 16
        %v1686 = vpop.permute.xlu0 %1685
        %1687 = vrot.lane.b32.xlu0 %v1400, 16
        %v1688 = vpop.permute.xlu0 %1687
        %1689 = vrot.lane.b32.xlu0 %v1402, 16
        %v1690 = vpop.permute.xlu0 %1689
        %1691 = vrot.lane.b32.xlu0 %v1404, 16
        %v1692 = vpop.permute.xlu0 %1691
        %1693 = vrot.lane.b32.xlu0 %v1406, 16
        %v1694 = vpop.permute.xlu0 %1693
        %1695 = vrot.lane.b32.xlu0 %v1408, 16
        %v1696 = vpop.permute.xlu0 %1695
        %1697 = vrot.lane.b32.xlu0 %v1410, 16
        %v1698 = vpop.permute.xlu0 %1697
        %1699 = vrot.lane.b32.xlu0 %v1412, 16
        %v1700 = vpop.permute.xlu0 %1699
        %1701 = vrot.lane.b32.xlu0 %v1414, 16
        %v1702 = vpop.permute.xlu0 %1701
        %1703 = vrot.lane.b32.xlu0 %v1416, 16
        %v1704 = vpop.permute.xlu0 %1703
        %1769 = vrot.lane.b32.xlu0 %v1418, 24
        %v1770 = vpop.permute.xlu0 %1769
        %1771 = vrot.lane.b32.xlu0 %v1420, 24
        %v1772 = vpop.permute.xlu0 %1771
        %1773 = vrot.lane.b32.xlu0 %v1422, 24
        %v1774 = vpop.permute.xlu0 %1773
        %1775 = vrot.lane.b32.xlu0 %v1424, 24
        %v1776 = vpop.permute.xlu0 %1775
        %1777 = vrot.lane.b32.xlu0 %v1426, 24
        %v1778 = vpop.permute.xlu0 %1777
        %1779 = vrot.lane.b32.xlu0 %v1428, 24
        %v1780 = vpop.permute.xlu0 %1779
        %1781 = vrot.lane.b32.xlu0 %v1430, 24
        %v1782 = vpop.permute.xlu0 %1781
        %1783 = vrot.lane.b32.xlu0 %v1432, 24
        %v1784 = vpop.permute.xlu0 %1783
        %1785 = vrot.lane.b32.xlu0 %v1434, 24
        %v1786 = vpop.permute.xlu0 %1785
        %1787 = vrot.lane.b32.xlu0 %v1436, 24
        %v1788 = vpop.permute.xlu0 %1787
        %1789 = vrot.lane.b32.xlu0 %v1438, 24
        %v1790 = vpop.permute.xlu0 %1789
        %1791 = vrot.lane.b32.xlu0 %v1440, 24
        %v1792 = vpop.permute.xlu0 %1791
        %1793 = vrot.lane.b32.xlu0 %v1442, 24
        %v1794 = vpop.permute.xlu0 %1793
        %1795 = vrot.lane.b32.xlu0 %v1444, 24
        %v1796 = vpop.permute.xlu0 %1795
        %1797 = vrot.lane.b32.xlu0 %v1446, 24
        %v1798 = vpop.permute.xlu0 %1797
        %1799 = vrot.lane.b32.xlu0 %v1448, 24
        %v1800 = vpop.permute.xlu0 %1799
        %1801 = vrot.lane.b32.xlu0 %v1450, 24
        %v1802 = vpop.permute.xlu0 %1801
        %1803 = vrot.lane.b32.xlu0 %v1452, 24
        %v1804 = vpop.permute.xlu0 %1803
        %1805 = vrot.lane.b32.xlu0 %v1454, 24
        %v1806 = vpop.permute.xlu0 %1805
        %1807 = vrot.lane.b32.xlu0 %v1456, 24
        %v1808 = vpop.permute.xlu0 %1807
        %1809 = vrot.lane.b32.xlu0 %v1458, 24
        %v1810 = vpop.permute.xlu0 %1809
        %1811 = vrot.lane.b32.xlu0 %v1460, 24
        %v1812 = vpop.permute.xlu0 %1811
        %1813 = vrot.lane.b32.xlu0 %v1462, 24
        %v1814 = vpop.permute.xlu0 %1813
        %1815 = vrot.lane.b32.xlu0 %v1464, 24
        %v1816 = vpop.permute.xlu0 %1815
        %1817 = vrot.lane.b32.xlu0 %v1466, 24
        %v1818 = vpop.permute.xlu0 %1817
        %1819 = vrot.lane.b32.xlu0 %v1468, 24
        %v1820 = vpop.permute.xlu0 %1819
        %1821 = vrot.lane.b32.xlu0 %v1470, 24
        %v1822 = vpop.permute.xlu0 %1821
        %1823 = vrot.lane.b32.xlu0 %v1472, 24
        %v1824 = vpop.permute.xlu0 %1823
        %1825 = vrot.lane.b32.xlu0 %v1474, 24
        %v1826 = vpop.permute.xlu0 %1825
        %1827 = vrot.lane.b32.xlu0 %v1476, 24
        %v1828 = vpop.permute.xlu0 %1827
        %1829 = vrot.lane.b32.xlu0 %v1478, 24
        %v1830 = vpop.permute.xlu0 %1829
        %1831 = vrot.lane.b32.xlu0 %v1480, 24
        %v1832 = vpop.permute.xlu0 %1831
        %v1865 = vsel %vm1158, %v1226, %v1514
        %v1866 = vsel %vm1158, %v1228, %v1516
        %v1867 = vsel %vm1158, %v1230, %v1518
        %v1868 = vsel %vm1158, %v1232, %v1520
        %v1869 = vsel %vm1158, %v1234, %v1522
        %v1870 = vsel %vm1158, %v1236, %v1524
        %v1871 = vsel %vm1158, %v1238, %v1526
        %v1872 = vsel %vm1158, %v1240, %v1528
        %v1873 = vsel %vm1158, %v1242, %v1530
        %v1874 = vsel %vm1158, %v1244, %v1532
        %v1875 = vsel %vm1158, %v1246, %v1534
        %v1876 = vsel %vm1158, %v1248, %v1536
        %v1877 = vsel %vm1158, %v1250, %v1538
        %v1878 = vsel %vm1158, %v1252, %v1540
        %v1879 = vsel %vm1158, %v1254, %v1542
        %v1880 = vsel %vm1158, %v1256, %v1544
        %v1881 = vsel %vm1158, %v1258, %v1546
        %v1882 = vsel %vm1158, %v1260, %v1548
        %v1883 = vsel %vm1158, %v1262, %v1550
        %v1884 = vsel %vm1158, %v1264, %v1552
        %v1885 = vsel %vm1158, %v1266, %v1554
        %v1886 = vsel %vm1158, %v1268, %v1556
        %v1887 = vsel %vm1158, %v1270, %v1558
        %v1888 = vsel %vm1158, %v1272, %v1560
        %v1889 = vsel %vm1158, %v1274, %v1562
        %v1890 = vsel %vm1158, %v1276, %v1564
        %v1891 = vsel %vm1158, %v1278, %v1566
        %v1892 = vsel %vm1158, %v1280, %v1568
        %v1893 = vsel %vm1158, %v1282, %v1570
        %v1894 = vsel %vm1158, %v1284, %v1572
        %v1895 = vsel %vm1158, %v1286, %v1574
        %v1896 = vsel %vm1158, %v1288, %v1576
        %vm1897 = vcmask 130048
        %v1898 = vsel %vm1897, %v1865, %v1642
        %v1899 = vsel %vm1897, %v1866, %v1644
        %v1900 = vsel %vm1897, %v1867, %v1646
        %v1901 = vsel %vm1897, %v1868, %v1648
        %v1902 = vsel %vm1897, %v1869, %v1650
        %v1903 = vsel %vm1897, %v1870, %v1652
        %v1904 = vsel %vm1897, %v1871, %v1654
        %v1905 = vsel %vm1897, %v1872, %v1656
        %v1906 = vsel %vm1897, %v1873, %v1658
        %v1907 = vsel %vm1897, %v1874, %v1660
        %v1908 = vsel %vm1897, %v1875, %v1662
        %v1909 = vsel %vm1897, %v1876, %v1664
        %v1910 = vsel %vm1897, %v1877, %v1666
        %v1911 = vsel %vm1897, %v1878, %v1668
        %v1912 = vsel %vm1897, %v1879, %v1670
        %v1913 = vsel %vm1897, %v1880, %v1672
        %v1914 = vsel %vm1897, %v1881, %v1674
        %v1915 = vsel %vm1897, %v1882, %v1676
        %v1916 = vsel %vm1897, %v1883, %v1678
        %v1917 = vsel %vm1897, %v1884, %v1680
        %v1918 = vsel %vm1897, %v1885, %v1682
        %v1919 = vsel %vm1897, %v1886, %v1684
        %v1920 = vsel %vm1897, %v1887, %v1686
        %v1921 = vsel %vm1897, %v1888, %v1688
        %v1922 = vsel %vm1897, %v1889, %v1690
        %v1923 = vsel %vm1897, %v1890, %v1692
        %v1924 = vsel %vm1897, %v1891, %v1694
        %v1925 = vsel %vm1897, %v1892, %v1696
        %v1926 = vsel %vm1897, %v1893, %v1698
        %v1927 = vsel %vm1897, %v1894, %v1700
        %v1928 = vsel %vm1897, %v1895, %v1702
        %v1929 = vsel %vm1897, %v1896, %v1704
        %vm1930 = vcmask 195584
        %v1931 = vsel %vm1930, %v1898, %v1770
        %v1932 = vsel %vm1930, %v1899, %v1772
        %v1933 = vsel %vm1930, %v1900, %v1774
        %v1934 = vsel %vm1930, %v1901, %v1776
        %v1935 = vsel %vm1930, %v1902, %v1778
        %v1936 = vsel %vm1930, %v1903, %v1780
        %v1937 = vsel %vm1930, %v1904, %v1782
        %v1938 = vsel %vm1930, %v1905, %v1784
        %v1939 = vsel %vm1930, %v1906, %v1786
        %v1940 = vsel %vm1930, %v1907, %v1788
        %v1941 = vsel %vm1930, %v1908, %v1790
        %v1942 = vsel %vm1930, %v1909, %v1792
        %v1943 = vsel %vm1930, %v1910, %v1794
        %v1944 = vsel %vm1930, %v1911, %v1796
        %v1945 = vsel %vm1930, %v1912, %v1798
        %v1946 = vsel %vm1930, %v1913, %v1800
        %v1947 = vsel %vm1930, %v1914, %v1802
        %v1948 = vsel %vm1930, %v1915, %v1804
        %v1949 = vsel %vm1930, %v1916, %v1806
        %v1950 = vsel %vm1930, %v1917, %v1808
        %v1951 = vsel %vm1930, %v1918, %v1810
        %v1952 = vsel %vm1930, %v1919, %v1812
        %v1953 = vsel %vm1930, %v1920, %v1814
        %v1954 = vsel %vm1930, %v1921, %v1816
        %v1955 = vsel %vm1930, %v1922, %v1818
        %v1956 = vsel %vm1930, %v1923, %v1820
        %v1957 = vsel %vm1930, %v1924, %v1822
        %v1958 = vsel %vm1930, %v1925, %v1824
        %v1959 = vsel %vm1930, %v1926, %v1826
        %v1960 = vsel %vm1930, %v1927, %v1828
        %v1961 = vsel %vm1930, %v1928, %v1830
        %v1962 = vsel %vm1930, %v1929, %v1832
        %v1963 = vpack.c.bf16 %v1932, %v1931
        %v1964 = vpack.c.bf16 %v1934, %v1933
        %v1965 = vpack.c.bf16 %v1936, %v1935
        %v1966 = vpack.c.bf16 %v1938, %v1937
        %v1967 = vpack.c.bf16 %v1940, %v1939
        %v1968 = vpack.c.bf16 %v1942, %v1941
        %v1969 = vpack.c.bf16 %v1944, %v1943
        %v1970 = vpack.c.bf16 %v1946, %v1945
        %v1971 = vpack.c.bf16 %v1948, %v1947
        %v1972 = vpack.c.bf16 %v1950, %v1949
        %v1973 = vpack.c.bf16 %v1952, %v1951
        %v1974 = vpack.c.bf16 %v1954, %v1953
        %v1975 = vpack.c.bf16 %v1956, %v1955
        %v1976 = vpack.c.bf16 %v1958, %v1957
        %v1977 = vpack.c.bf16 %v1960, %v1959
        %v1978 = vpack.c.bf16 %v1962, %v1961
        %v1979 = vld [vmem:[%s2] sm:$0xf]
        %v1980 = vld [vmem:[%s2 + $0x4] sm:$0xf]
        %v1981 = vld [vmem:[%s2 + $0x8] sm:$0xf]
        %v1982 = vld [vmem:[%s2 + $0xc] sm:$0xf]
        %v1983 = vld [vmem:[#allocation10] sm:$0x1]
        %v1985 = vlaneseq
        %v1986 = vshrl.u32 %v1985, 7
        %v1987 = vsub.s32 0, %v1986
        %v1988 = vrot.slane %v1983, %v1987
        %v1994 = vunpack.c.l.b16 %v1979
        %v1995 = vunpack.c.l.b16 %v1980
        %v1996 = vunpack.c.l.b16 %v1981
        %v1997 = vunpack.c.l.b16 %v1982
        %v1998 = vpack.c.b16 %v1995, %v1994
        %v1999 = vpack.c.b16 %v1997, %v1996
        %vm2002 = vcmask 261120
        %v2004 = vsel %vm2002, %v1963, 0
        %v2007 = vsel %vm2002, %v1964, 0
        %v2010 = vsel %vm2002, %v1965, 0
        %v2013 = vsel %vm2002, %v1966, 0
        %v2016 = vsel %vm2002, %v1967, 0
        %v2019 = vsel %vm2002, %v1968, 0
        %v2022 = vsel %vm2002, %v1969, 0
        %v2025 = vsel %vm2002, %v1970, 0
        %v2028 = vsel %vm2002, %v1971, 0
        %v2031 = vsel %vm2002, %v1972, 0
        %v2034 = vsel %vm2002, %v1973, 0
        %v2037 = vsel %vm2002, %v1974, 0
        %v2040 = vsel %vm2002, %v1975, 0
        %v2043 = vsel %vm2002, %v1976, 0
        %v2046 = vsel %vm2002, %v1977, 0
        %v2049 = vsel %vm2002, %v1978, 0
        %2051 = vmatprep.subr.bf16.mxu0 0
        %2052 = vmatpush1.bf16.msra.mxu0 0
        %2053 = vmatprep.subr.bf16.mxu0 0
        %2054 = vmatpush1.bf16.msra.mxu0 0
        %2055 = vmatprep.subr.bf16.mxu0 0
        %2056 = vmatpush1.bf16.msra.mxu0 0
        %2057 = vmatprep.subr.bf16.mxu0 0
        %2058 = vmatpush1.bf16.msra.mxu0 0
        %2059 = vmatprep.subr.bf16.mxu0 0
        %2060 = vmatpush1.bf16.msra.mxu0 0
        %2061 = vmatprep.subr.bf16.mxu0 0
        %2062 = vmatpush1.bf16.msra.mxu0 0
        %2063 = vmatprep.subr.bf16.mxu0 0
        %2064 = vmatpush1.bf16.msra.mxu0 %v1999
        %2065 = vmatprep.subr.bf16.mxu0 0
        %2066 = vmatpush1.bf16.msra.mxu0 %v1998
        %2067 = vmatprep.subr.bf16.mxu0 0
        %2068 = vmatpush2.bf16.msra.mxu0 0
        %2069 = vmatprep.subr.bf16.mxu0 0
        %2070 = vmatpush2.bf16.msra.mxu0 0
        %2071 = vmatprep.subr.bf16.mxu0 0
        %2072 = vmatpush2.bf16.msra.mxu0 0
        %2073 = vmatprep.subr.bf16.mxu0 0
        %2074 = vmatpush2.bf16.msra.mxu0 0
        %2075 = vmatprep.subr.bf16.mxu0 0
        %2076 = vmatpush2.bf16.msra.mxu0 0
        %2077 = vmatprep.subr.bf16.mxu0 0
        %2078 = vmatpush2.bf16.msra.mxu0 0
        %2079 = vmatprep.subr.bf16.mxu0 0
        %2080 = vmatpush2.bf16.msra.mxu0 0
        %2081 = vmatprep.subr.bf16.mxu0 0
        %2082 = vmatpush2.bf16.msra.mxu0 0
        %2083 = vmatprep.mubr.bf16.mxu0 0
        %2084 = vmatmul.mubr.bf16.gmra.mxu0 %v2004
        %v2085 = vpop.f32.mrf.mxu0
        %v2086 = vadd.f32 %v1988, %v2085
        %v2087 = vpop.f32.mrf.mxu0
        %v2088 = vpop.f32.mrf.mxu0
        %v2089 = vadd.f32 %v1988, %v2088
        %v2090 = vpop.f32.mrf.mxu0
        %2091 = vmatprep.mubr.bf16.mxu0 0
        %2092 = vmatmul.mubr.bf16.gmra.mxu0 %v2007
        %v2093 = vpop.f32.mrf.mxu0
        %v2094 = vadd.f32 %v1988, %v2093
        %v2095 = vpop.f32.mrf.mxu0
        %v2096 = vpop.f32.mrf.mxu0
        %v2097 = vadd.f32 %v1988, %v2096
        %v2098 = vpop.f32.mrf.mxu0
        %2099 = vmatprep.mubr.bf16.mxu0 0
        %2100 = vmatmul.mubr.bf16.gmra.mxu0 %v2010
        %v2101 = vpop.f32.mrf.mxu0
        %v2102 = vadd.f32 %v1988, %v2101
        %v2103 = vpop.f32.mrf.mxu0
        %v2104 = vpop.f32.mrf.mxu0
        %v2105 = vadd.f32 %v1988, %v2104
        %v2106 = vpop.f32.mrf.mxu0
        %2107 = vmatprep.mubr.bf16.mxu0 0
        %2108 = vmatmul.mubr.bf16.gmra.mxu0 %v2013
        %v2109 = vpop.f32.mrf.mxu0
        %v2110 = vadd.f32 %v1988, %v2109
        %v2111 = vpop.f32.mrf.mxu0
        %v2112 = vpop.f32.mrf.mxu0
        %v2113 = vadd.f32 %v1988, %v2112
        %v2114 = vpop.f32.mrf.mxu0
        %2115 = vmatprep.mubr.bf16.mxu0 0
        %2116 = vmatmul.mubr.bf16.gmra.mxu0 %v2016
        %v2117 = vpop.f32.mrf.mxu0
        %v2118 = vadd.f32 %v1988, %v2117
        %v2119 = vpop.f32.mrf.mxu0
        %v2120 = vpop.f32.mrf.mxu0
        %v2121 = vadd.f32 %v1988, %v2120
        %v2122 = vpop.f32.mrf.mxu0
        %2123 = vmatprep.mubr.bf16.mxu0 0
        %2124 = vmatmul.mubr.bf16.gmra.mxu0 %v2019
        %v2125 = vpop.f32.mrf.mxu0
        %v2126 = vadd.f32 %v1988, %v2125
        %v2127 = vpop.f32.mrf.mxu0
        %v2128 = vpop.f32.mrf.mxu0
        %v2129 = vadd.f32 %v1988, %v2128
        %v2130 = vpop.f32.mrf.mxu0
        %2131 = vmatprep.mubr.bf16.mxu0 0
        %2132 = vmatmul.mubr.bf16.gmra.mxu0 %v2022
        %v2133 = vpop.f32.mrf.mxu0
        %v2134 = vadd.f32 %v1988, %v2133
        %v2135 = vpop.f32.mrf.mxu0
        %v2136 = vpop.f32.mrf.mxu0
        %v2137 = vadd.f32 %v1988, %v2136
        %v2138 = vpop.f32.mrf.mxu0
        %2139 = vmatprep.mubr.bf16.mxu0 0
        %2140 = vmatmul.mubr.bf16.gmra.mxu0 %v2025
        %v2141 = vpop.f32.mrf.mxu0
        %v2142 = vadd.f32 %v1988, %v2141
        %v2143 = vpop.f32.mrf.mxu0
        %v2144 = vpop.f32.mrf.mxu0
        %v2145 = vadd.f32 %v1988, %v2144
        %v2146 = vpop.f32.mrf.mxu0
        %2147 = vmatprep.mubr.bf16.mxu0 0
        %2148 = vmatmul.mubr.bf16.gmra.mxu0 %v2028
        %v2149 = vpop.f32.mrf.mxu0
        %v2150 = vadd.f32 %v1988, %v2149
        %v2151 = vpop.f32.mrf.mxu0
        %v2152 = vpop.f32.mrf.mxu0
        %v2153 = vadd.f32 %v1988, %v2152
        %v2154 = vpop.f32.mrf.mxu0
        %2155 = vmatprep.mubr.bf16.mxu0 0
        %2156 = vmatmul.mubr.bf16.gmra.mxu0 %v2031
        %v2157 = vpop.f32.mrf.mxu0
        %v2158 = vadd.f32 %v1988, %v2157
        %v2159 = vpop.f32.mrf.mxu0
        %v2160 = vpop.f32.mrf.mxu0
        %v2161 = vadd.f32 %v1988, %v2160
        %v2162 = vpop.f32.mrf.mxu0
        %2163 = vmatprep.mubr.bf16.mxu0 0
        %2164 = vmatmul.mubr.bf16.gmra.mxu0 %v2034
        %v2165 = vpop.f32.mrf.mxu0
        %v2166 = vadd.f32 %v1988, %v2165
        %v2167 = vpop.f32.mrf.mxu0
        %v2168 = vpop.f32.mrf.mxu0
        %v2169 = vadd.f32 %v1988, %v2168
        %v2170 = vpop.f32.mrf.mxu0
        %2171 = vmatprep.mubr.bf16.mxu0 0
        %2172 = vmatmul.mubr.bf16.gmra.mxu0 %v2037
        %v2173 = vpop.f32.mrf.mxu0
        %v2174 = vadd.f32 %v1988, %v2173
        %v2175 = vpop.f32.mrf.mxu0
        %v2176 = vpop.f32.mrf.mxu0
        %v2177 = vadd.f32 %v1988, %v2176
        %v2178 = vpop.f32.mrf.mxu0
        %2179 = vmatprep.mubr.bf16.mxu0 0
        %2180 = vmatmul.mubr.bf16.gmra.mxu0 %v2040
        %v2181 = vpop.f32.mrf.mxu0
        %v2182 = vadd.f32 %v1988, %v2181
        %v2183 = vpop.f32.mrf.mxu0
        %v2184 = vpop.f32.mrf.mxu0
        %v2185 = vadd.f32 %v1988, %v2184
        %v2186 = vpop.f32.mrf.mxu0
        %2187 = vmatprep.mubr.bf16.mxu0 0
        %2188 = vmatmul.mubr.bf16.gmra.mxu0 %v2043
        %v2189 = vpop.f32.mrf.mxu0
        %v2190 = vadd.f32 %v1988, %v2189
        %v2191 = vpop.f32.mrf.mxu0
        %v2192 = vpop.f32.mrf.mxu0
        %v2193 = vadd.f32 %v1988, %v2192
        %v2194 = vpop.f32.mrf.mxu0
        %2195 = vmatprep.mubr.bf16.mxu0 0
        %2196 = vmatmul.mubr.bf16.gmra.mxu0 %v2046
        %v2197 = vpop.f32.mrf.mxu0
        %v2198 = vadd.f32 %v1988, %v2197
        %v2199 = vpop.f32.mrf.mxu0
        %v2200 = vpop.f32.mrf.mxu0
        %v2201 = vadd.f32 %v1988, %v2200
        %v2202 = vpop.f32.mrf.mxu0
        %2203 = vmatprep.mubr.bf16.mxu0 0
        %2204 = vmatmul.mubr.bf16.gmra.mxu0 %v2049
        %v2205 = vpop.f32.mrf.mxu0
        %v2206 = vadd.f32 %v1988, %v2205
        %v2207 = vpop.f32.mrf.mxu0
        %v2208 = vpop.f32.mrf.mxu0
        %v2209 = vadd.f32 %v1988, %v2208
        %v2210 = vpop.f32.mrf.mxu0
        %2211 = vdwg.mxu0
        %vm2212 = vcmp.gt.f32.partialorder %v2086, 0.0
        %vm2213 = vcmp.gt.f32.partialorder %v2089, 0.0
        %vm2214 = vcmp.gt.f32.partialorder %v2094, 0.0
        %vm2215 = vcmp.gt.f32.partialorder %v2097, 0.0
        %vm2216 = vcmp.gt.f32.partialorder %v2102, 0.0
        %vm2217 = vcmp.gt.f32.partialorder %v2105, 0.0
        %vm2218 = vcmp.gt.f32.partialorder %v2110, 0.0
        %vm2219 = vcmp.gt.f32.partialorder %v2113, 0.0
        %vm2220 = vcmp.gt.f32.partialorder %v2118, 0.0
        %vm2221 = vcmp.gt.f32.partialorder %v2121, 0.0
        %vm2222 = vcmp.gt.f32.partialorder %v2126, 0.0
        %vm2223 = vcmp.gt.f32.partialorder %v2129, 0.0
        %vm2224 = vcmp.gt.f32.partialorder %v2134, 0.0
        %vm2225 = vcmp.gt.f32.partialorder %v2137, 0.0
        %vm2226 = vcmp.gt.f32.partialorder %v2142, 0.0
        %vm2227 = vcmp.gt.f32.partialorder %v2145, 0.0
        %vm2228 = vcmp.gt.f32.partialorder %v2150, 0.0
        %vm2229 = vcmp.gt.f32.partialorder %v2153, 0.0
        %vm2230 = vcmp.gt.f32.partialorder %v2158, 0.0
        %vm2231 = vcmp.gt.f32.partialorder %v2161, 0.0
        %vm2232 = vcmp.gt.f32.partialorder %v2166, 0.0
        %vm2233 = vcmp.gt.f32.partialorder %v2169, 0.0
        %vm2234 = vcmp.gt.f32.partialorder %v2174, 0.0
        %vm2235 = vcmp.gt.f32.partialorder %v2177, 0.0
        %vm2236 = vcmp.gt.f32.partialorder %v2182, 0.0
        %vm2237 = vcmp.gt.f32.partialorder %v2185, 0.0
        %vm2238 = vcmp.gt.f32.partialorder %v2190, 0.0
        %vm2239 = vcmp.gt.f32.partialorder %v2193, 0.0
        %vm2240 = vcmp.gt.f32.partialorder %v2198, 0.0
        %vm2241 = vcmp.gt.f32.partialorder %v2201, 0.0
        %vm2242 = vcmp.gt.f32.partialorder %v2206, 0.0
        %vm2243 = vcmp.gt.f32.partialorder %v2209, 0.0
        %v2244 = vmul.f32 %v2086, 0.1
        %v2245 = vmul.f32 %v2089, 0.1
        %v2246 = vmul.f32 %v2094, 0.1
        %v2247 = vmul.f32 %v2097, 0.1
        %v2248 = vmul.f32 %v2102, 0.1
        %v2249 = vmul.f32 %v2105, 0.1
        %v2250 = vmul.f32 %v2110, 0.1
        %v2251 = vmul.f32 %v2113, 0.1
        %v2252 = vmul.f32 %v2118, 0.1
        %v2253 = vmul.f32 %v2121, 0.1
        %v2254 = vmul.f32 %v2126, 0.1
        %v2255 = vmul.f32 %v2129, 0.1
        %v2256 = vmul.f32 %v2134, 0.1
        %v2257 = vmul.f32 %v2137, 0.1
        %v2258 = vmul.f32 %v2142, 0.1
        %v2259 = vmul.f32 %v2145, 0.1
        %v2260 = vmul.f32 %v2150, 0.1
        %v2261 = vmul.f32 %v2153, 0.1
        %v2262 = vmul.f32 %v2158, 0.1
        %v2263 = vmul.f32 %v2161, 0.1
        %v2264 = vmul.f32 %v2166, 0.1
        %v2265 = vmul.f32 %v2169, 0.1
        %v2266 = vmul.f32 %v2174, 0.1
        %v2267 = vmul.f32 %v2177, 0.1
        %v2268 = vmul.f32 %v2182, 0.1
        %v2269 = vmul.f32 %v2185, 0.1
        %v2270 = vmul.f32 %v2190, 0.1
        %v2271 = vmul.f32 %v2193, 0.1
        %v2272 = vmul.f32 %v2198, 0.1
        %v2273 = vmul.f32 %v2201, 0.1
        %v2274 = vmul.f32 %v2206, 0.1
        %v2275 = vmul.f32 %v2209, 0.1
        %v2276 = vsel %vm2212, %v2086, %v2244
        %v2277 = vsel %vm2213, %v2089, %v2245
        %v2278 = vsel %vm2214, %v2094, %v2246
        %v2279 = vsel %vm2215, %v2097, %v2247
        %v2280 = vsel %vm2216, %v2102, %v2248
        %v2281 = vsel %vm2217, %v2105, %v2249
        %v2282 = vsel %vm2218, %v2110, %v2250
        %v2283 = vsel %vm2219, %v2113, %v2251
        %v2284 = vsel %vm2220, %v2118, %v2252
        %v2285 = vsel %vm2221, %v2121, %v2253
        %v2286 = vsel %vm2222, %v2126, %v2254
        %v2287 = vsel %vm2223, %v2129, %v2255
        %v2288 = vsel %vm2224, %v2134, %v2256
        %v2289 = vsel %vm2225, %v2137, %v2257
        %v2290 = vsel %vm2226, %v2142, %v2258
        %v2291 = vsel %vm2227, %v2145, %v2259
        %v2292 = vsel %vm2228, %v2150, %v2260
        %v2293 = vsel %vm2229, %v2153, %v2261
        %v2294 = vsel %vm2230, %v2158, %v2262
        %v2295 = vsel %vm2231, %v2161, %v2263
        %v2296 = vsel %vm2232, %v2166, %v2264
        %v2297 = vsel %vm2233, %v2169, %v2265
        %v2298 = vsel %vm2234, %v2174, %v2266
        %v2299 = vsel %vm2235, %v2177, %v2267
        %v2300 = vsel %vm2236, %v2182, %v2268
        %v2301 = vsel %vm2237, %v2185, %v2269
        %v2302 = vsel %vm2238, %v2190, %v2270
        %v2303 = vsel %vm2239, %v2193, %v2271
        %v2304 = vsel %vm2240, %v2198, %v2272
        %v2305 = vsel %vm2241, %v2201, %v2273
        %v2306 = vsel %vm2242, %v2206, %v2274
        %v2307 = vsel %vm2243, %v2209, %v2275
        %2308 = vst.msk [vmem:[#allocation3] sm:$0xff] %vm1897, 0.0
        %2309 = vst.msk [vmem:[#allocation3 + $0x8] sm:$0xff] %vm1897, %v2276
        %2310 = vst.msk [vmem:[#allocation3 + $0x10] sm:$0xff] %vm1897, %v2277
        %2311 = vst.msk [vmem:[#allocation3 + $0x18] sm:$0xff] %vm1897, %v2278
        %2312 = vst.msk [vmem:[#allocation3 + $0x20] sm:$0xff] %vm1897, %v2279
        %2313 = vst.msk [vmem:[#allocation3 + $0x28] sm:$0xff] %vm1897, %v2280
        %2314 = vst.msk [vmem:[#allocation3 + $0x30] sm:$0xff] %vm1897, %v2281
        %2315 = vst.msk [vmem:[#allocation3 + $0x38] sm:$0xff] %vm1897, %v2282
        %2316 = vst.msk [vmem:[#allocation3 + $0x40] sm:$0xff] %vm1897, %v2283
        %2317 = vst.msk [vmem:[#allocation3 + $0x48] sm:$0xff] %vm1897, %v2284
        %2318 = vst.msk [vmem:[#allocation3 + $0x50] sm:$0xff] %vm1897, %v2285
        %2319 = vst.msk [vmem:[#allocation3 + $0x58] sm:$0xff] %vm1897, %v2286
        %2320 = vst.msk [vmem:[#allocation3 + $0x60] sm:$0xff] %vm1897, %v2287
        %2321 = vst.msk [vmem:[#allocation3 + $0x68] sm:$0xff] %vm1897, %v2288
        %2322 = vst.msk [vmem:[#allocation3 + $0x70] sm:$0xff] %vm1897, %v2289
        %2323 = vst.msk [vmem:[#allocation3 + $0x78] sm:$0xff] %vm1897, %v2290
        %2324 = vst.msk [vmem:[#allocation3 + $0x80] sm:$0xff] %vm1897, %v2291
        %2325 = vst.msk [vmem:[#allocation3 + $0x88] sm:$0xff] %vm1897, %v2292
        %2326 = vst.msk [vmem:[#allocation3 + $0x90] sm:$0xff] %vm1897, %v2293
        %2327 = vst.msk [vmem:[#allocation3 + $0x98] sm:$0xff] %vm1897, %v2294
        %2328 = vst.msk [vmem:[#allocation3 + $0xa0] sm:$0xff] %vm1897, %v2295
        %2329 = vst.msk [vmem:[#allocation3 + $0xa8] sm:$0xff] %vm1897, %v2296
        %2330 = vst.msk [vmem:[#allocation3 + $0xb0] sm:$0xff] %vm1897, %v2297
        %2331 = vst.msk [vmem:[#allocation3 + $0xb8] sm:$0xff] %vm1897, %v2298
        %2332 = vst.msk [vmem:[#allocation3 + $0xc0] sm:$0xff] %vm1897, %v2299
        %2333 = vst.msk [vmem:[#allocation3 + $0xc8] sm:$0xff] %vm1897, %v2300
        %2334 = vst.msk [vmem:[#allocation3 + $0xd0] sm:$0xff] %vm1897, %v2301
        %2335 = vst.msk [vmem:[#allocation3 + $0xd8] sm:$0xff] %vm1897, %v2302
        %2336 = vst.msk [vmem:[#allocation3 + $0xe0] sm:$0xff] %vm1897, %v2303
        %2337 = vst.msk [vmem:[#allocation3 + $0xe8] sm:$0xff] %vm1897, %v2304
        %2338 = vst.msk [vmem:[#allocation3 + $0xf0] sm:$0xff] %vm1897, %v2305
        %2339 = vst.msk [vmem:[#allocation3 + $0xf8] sm:$0xff] %vm1897, %v2306
        %2340 = vst.msk [vmem:[#allocation3 + $0x100] sm:$0xff] %vm1897, %v2307
        %2341 = vst.msk [vmem:[#allocation3 + $0x108] sm:$0xff] %vm1897, 0.0
        %s2342 = scalar_lea.vmem [#allocation3], 7
        %v2343 = vld [vmem:[%s2342] ss:$2 sm:$0xff]
        %s2344 = scalar_lea.vmem [#allocation3], 23
        %v2345 = vld [vmem:[%s2344] ss:$2 sm:$0xff]
        %s2346 = scalar_lea.vmem [#allocation3], 39
        %v2347 = vld [vmem:[%s2346] ss:$2 sm:$0xff]
        %s2348 = scalar_lea.vmem [#allocation3], 55
        %v2349 = vld [vmem:[%s2348] ss:$2 sm:$0xff]
        %s2350 = scalar_lea.vmem [#allocation3], 71
        %v2351 = vld [vmem:[%s2350] ss:$2 sm:$0xff]
        %s2352 = scalar_lea.vmem [#allocation3], 87
        %v2353 = vld [vmem:[%s2352] ss:$2 sm:$0xff]
        %s2354 = scalar_lea.vmem [#allocation3], 103
        %v2355 = vld [vmem:[%s2354] ss:$2 sm:$0xff]
        %s2356 = scalar_lea.vmem [#allocation3], 119
        %v2357 = vld [vmem:[%s2356] ss:$2 sm:$0xff]
        %s2358 = scalar_lea.vmem [#allocation3], 135
        %v2359 = vld [vmem:[%s2358] ss:$2 sm:$0xff]
        %s2360 = scalar_lea.vmem [#allocation3], 151
        %v2361 = vld [vmem:[%s2360] ss:$2 sm:$0xff]
        %s2362 = scalar_lea.vmem [#allocation3], 167
        %v2363 = vld [vmem:[%s2362] ss:$2 sm:$0xff]
        %s2364 = scalar_lea.vmem [#allocation3], 183
        %v2365 = vld [vmem:[%s2364] ss:$2 sm:$0xff]
        %s2366 = scalar_lea.vmem [#allocation3], 199
        %v2367 = vld [vmem:[%s2366] ss:$2 sm:$0xff]
        %s2368 = scalar_lea.vmem [#allocation3], 215
        %v2369 = vld [vmem:[%s2368] ss:$2 sm:$0xff]
        %s2370 = scalar_lea.vmem [#allocation3], 231
        %v2371 = vld [vmem:[%s2370] ss:$2 sm:$0xff]
        %s2372 = scalar_lea.vmem [#allocation3], 247
        %v2373 = vld [vmem:[%s2372] ss:$2 sm:$0xff]
        %s2374 = scalar_lea.vmem [#allocation3], 8
        %v2375 = vld [vmem:[%s2374] ss:$2 sm:$0xff]
        %s2376 = scalar_lea.vmem [#allocation3], 24
        %v2377 = vld [vmem:[%s2376] ss:$2 sm:$0xff]
        %s2378 = scalar_lea.vmem [#allocation3], 40
        %v2379 = vld [vmem:[%s2378] ss:$2 sm:$0xff]
        %s2380 = scalar_lea.vmem [#allocation3], 56
        %v2381 = vld [vmem:[%s2380] ss:$2 sm:$0xff]
        %s2382 = scalar_lea.vmem [#allocation3], 72
        %v2383 = vld [vmem:[%s2382] ss:$2 sm:$0xff]
        %s2384 = scalar_lea.vmem [#allocation3], 88
        %v2385 = vld [vmem:[%s2384] ss:$2 sm:$0xff]
        %s2386 = scalar_lea.vmem [#allocation3], 104
        %v2387 = vld [vmem:[%s2386] ss:$2 sm:$0xff]
        %s2388 = scalar_lea.vmem [#allocation3], 120
        %v2389 = vld [vmem:[%s2388] ss:$2 sm:$0xff]
        %s2390 = scalar_lea.vmem [#allocation3], 136
        %v2391 = vld [vmem:[%s2390] ss:$2 sm:$0xff]
        %s2392 = scalar_lea.vmem [#allocation3], 152
        %v2393 = vld [vmem:[%s2392] ss:$2 sm:$0xff]
        %s2394 = scalar_lea.vmem [#allocation3], 168
        %v2395 = vld [vmem:[%s2394] ss:$2 sm:$0xff]
        %s2396 = scalar_lea.vmem [#allocation3], 184
        %v2397 = vld [vmem:[%s2396] ss:$2 sm:$0xff]
        %s2398 = scalar_lea.vmem [#allocation3], 200
        %v2399 = vld [vmem:[%s2398] ss:$2 sm:$0xff]
        %s2400 = scalar_lea.vmem [#allocation3], 216
        %v2401 = vld [vmem:[%s2400] ss:$2 sm:$0xff]
        %s2402 = scalar_lea.vmem [#allocation3], 232
        %v2403 = vld [vmem:[%s2402] ss:$2 sm:$0xff]
        %s2404 = scalar_lea.vmem [#allocation3], 248
        %v2405 = vld [vmem:[%s2404] ss:$2 sm:$0xff]
        %s2406 = scalar_lea.vmem [#allocation3], 9
        %v2407 = vld [vmem:[%s2406] ss:$2 sm:$0xff]
        %s2408 = scalar_lea.vmem [#allocation3], 25
        %v2409 = vld [vmem:[%s2408] ss:$2 sm:$0xff]
        %s2410 = scalar_lea.vmem [#allocation3], 41
        %v2411 = vld [vmem:[%s2410] ss:$2 sm:$0xff]
        %s2412 = scalar_lea.vmem [#allocation3], 57
        %v2413 = vld [vmem:[%s2412] ss:$2 sm:$0xff]
        %s2414 = scalar_lea.vmem [#allocation3], 73
        %v2415 = vld [vmem:[%s2414] ss:$2 sm:$0xff]
        %s2416 = scalar_lea.vmem [#allocation3], 89
        %v2417 = vld [vmem:[%s2416] ss:$2 sm:$0xff]
        %s2418 = scalar_lea.vmem [#allocation3], 105
        %v2419 = vld [vmem:[%s2418] ss:$2 sm:$0xff]
        %s2420 = scalar_lea.vmem [#allocation3], 121
        %v2421 = vld [vmem:[%s2420] ss:$2 sm:$0xff]
        %s2422 = scalar_lea.vmem [#allocation3], 137
        %v2423 = vld [vmem:[%s2422] ss:$2 sm:$0xff]
        %s2424 = scalar_lea.vmem [#allocation3], 153
        %v2425 = vld [vmem:[%s2424] ss:$2 sm:$0xff]
        %s2426 = scalar_lea.vmem [#allocation3], 169
        %v2427 = vld [vmem:[%s2426] ss:$2 sm:$0xff]
        %s2428 = scalar_lea.vmem [#allocation3], 185
        %v2429 = vld [vmem:[%s2428] ss:$2 sm:$0xff]
        %s2430 = scalar_lea.vmem [#allocation3], 201
        %v2431 = vld [vmem:[%s2430] ss:$2 sm:$0xff]
        %s2432 = scalar_lea.vmem [#allocation3], 217
        %v2433 = vld [vmem:[%s2432] ss:$2 sm:$0xff]
        %s2434 = scalar_lea.vmem [#allocation3], 233
        %v2435 = vld [vmem:[%s2434] ss:$2 sm:$0xff]
        %s2436 = scalar_lea.vmem [#allocation3], 249
        %v2437 = vld [vmem:[%s2436] ss:$2 sm:$0xff]
        %s2438 = scalar_lea.vmem [#allocation3], 10
        %v2439 = vld [vmem:[%s2438] ss:$2 sm:$0xff]
        %s2440 = scalar_lea.vmem [#allocation3], 26
        %v2441 = vld [vmem:[%s2440] ss:$2 sm:$0xff]
        %s2442 = scalar_lea.vmem [#allocation3], 42
        %v2443 = vld [vmem:[%s2442] ss:$2 sm:$0xff]
        %s2444 = scalar_lea.vmem [#allocation3], 58
        %v2445 = vld [vmem:[%s2444] ss:$2 sm:$0xff]
        %s2446 = scalar_lea.vmem [#allocation3], 74
        %v2447 = vld [vmem:[%s2446] ss:$2 sm:$0xff]
        %s2448 = scalar_lea.vmem [#allocation3], 90
        %v2449 = vld [vmem:[%s2448] ss:$2 sm:$0xff]
        %s2450 = scalar_lea.vmem [#allocation3], 106
        %v2451 = vld [vmem:[%s2450] ss:$2 sm:$0xff]
        %s2452 = scalar_lea.vmem [#allocation3], 122
        %v2453 = vld [vmem:[%s2452] ss:$2 sm:$0xff]
        %s2454 = scalar_lea.vmem [#allocation3], 138
        %v2455 = vld [vmem:[%s2454] ss:$2 sm:$0xff]
        %s2456 = scalar_lea.vmem [#allocation3], 154
        %v2457 = vld [vmem:[%s2456] ss:$2 sm:$0xff]
        %s2458 = scalar_lea.vmem [#allocation3], 170
        %v2459 = vld [vmem:[%s2458] ss:$2 sm:$0xff]
        %s2460 = scalar_lea.vmem [#allocation3], 186
        %v2461 = vld [vmem:[%s2460] ss:$2 sm:$0xff]
        %s2462 = scalar_lea.vmem [#allocation3], 202
        %v2463 = vld [vmem:[%s2462] ss:$2 sm:$0xff]
        %s2464 = scalar_lea.vmem [#allocation3], 218
        %v2465 = vld [vmem:[%s2464] ss:$2 sm:$0xff]
        %s2466 = scalar_lea.vmem [#allocation3], 234
        %v2467 = vld [vmem:[%s2466] ss:$2 sm:$0xff]
        %s2468 = scalar_lea.vmem [#allocation3], 250
        %v2469 = vld [vmem:[%s2468] ss:$2 sm:$0xff]
        %2486 = vrot.lane.b32.xlu0 %v2375, 16
        %v2487 = vpop.permute.xlu0 %2486
        %2488 = vrot.lane.b32.xlu0 %v2377, 16
        %v2489 = vpop.permute.xlu0 %2488
        %2490 = vrot.lane.b32.xlu0 %v2379, 16
        %v2491 = vpop.permute.xlu0 %2490
        %2492 = vrot.lane.b32.xlu0 %v2381, 16
        %v2493 = vpop.permute.xlu0 %2492
        %2494 = vrot.lane.b32.xlu0 %v2383, 16
        %v2495 = vpop.permute.xlu0 %2494
        %2496 = vrot.lane.b32.xlu0 %v2385, 16
        %v2497 = vpop.permute.xlu0 %2496
        %2498 = vrot.lane.b32.xlu0 %v2387, 16
        %v2499 = vpop.permute.xlu0 %2498
        %2500 = vrot.lane.b32.xlu0 %v2389, 16
        %v2501 = vpop.permute.xlu0 %2500
        %2502 = vrot.lane.b32.xlu0 %v2391, 16
        %v2503 = vpop.permute.xlu0 %2502
        %2504 = vrot.lane.b32.xlu0 %v2393, 16
        %v2505 = vpop.permute.xlu0 %2504
        %2506 = vrot.lane.b32.xlu0 %v2395, 16
        %v2507 = vpop.permute.xlu0 %2506
        %2508 = vrot.lane.b32.xlu0 %v2397, 16
        %v2509 = vpop.permute.xlu0 %2508
        %2510 = vrot.lane.b32.xlu0 %v2399, 16
        %v2511 = vpop.permute.xlu0 %2510
        %2512 = vrot.lane.b32.xlu0 %v2401, 16
        %v2513 = vpop.permute.xlu0 %2512
        %2514 = vrot.lane.b32.xlu0 %v2403, 16
        %v2515 = vpop.permute.xlu0 %2514
        %2516 = vrot.lane.b32.xlu0 %v2405, 16
        %v2517 = vpop.permute.xlu0 %2516
        %2550 = vrot.lane.b32.xlu0 %v2407, 32
        %v2551 = vpop.permute.xlu0 %2550
        %2552 = vrot.lane.b32.xlu0 %v2409, 32
        %v2553 = vpop.permute.xlu0 %2552
        %2554 = vrot.lane.b32.xlu0 %v2411, 32
        %v2555 = vpop.permute.xlu0 %2554
        %2556 = vrot.lane.b32.xlu0 %v2413, 32
        %v2557 = vpop.permute.xlu0 %2556
        %2558 = vrot.lane.b32.xlu0 %v2415, 32
        %v2559 = vpop.permute.xlu0 %2558
        %2560 = vrot.lane.b32.xlu0 %v2417, 32
        %v2561 = vpop.permute.xlu0 %2560
        %2562 = vrot.lane.b32.xlu0 %v2419, 32
        %v2563 = vpop.permute.xlu0 %2562
        %2564 = vrot.lane.b32.xlu0 %v2421, 32
        %v2565 = vpop.permute.xlu0 %2564
        %2566 = vrot.lane.b32.xlu0 %v2423, 32
        %v2567 = vpop.permute.xlu0 %2566
        %2568 = vrot.lane.b32.xlu0 %v2425, 32
        %v2569 = vpop.permute.xlu0 %2568
        %2570 = vrot.lane.b32.xlu0 %v2427, 32
        %v2571 = vpop.permute.xlu0 %2570
        %2572 = vrot.lane.b32.xlu0 %v2429, 32
        %v2573 = vpop.permute.xlu0 %2572
        %2574 = vrot.lane.b32.xlu0 %v2431, 32
        %v2575 = vpop.permute.xlu0 %2574
        %2576 = vrot.lane.b32.xlu0 %v2433, 32
        %v2577 = vpop.permute.xlu0 %2576
        %2578 = vrot.lane.b32.xlu0 %v2435, 32
        %v2579 = vpop.permute.xlu0 %2578
        %2580 = vrot.lane.b32.xlu0 %v2437, 32
        %v2581 = vpop.permute.xlu0 %2580
        %2614 = vrot.lane.b32.xlu0 %v2439, 48
        %v2615 = vpop.permute.xlu0 %2614
        %2616 = vrot.lane.b32.xlu0 %v2441, 48
        %v2617 = vpop.permute.xlu0 %2616
        %2618 = vrot.lane.b32.xlu0 %v2443, 48
        %v2619 = vpop.permute.xlu0 %2618
        %2620 = vrot.lane.b32.xlu0 %v2445, 48
        %v2621 = vpop.permute.xlu0 %2620
        %2622 = vrot.lane.b32.xlu0 %v2447, 48
        %v2623 = vpop.permute.xlu0 %2622
        %2624 = vrot.lane.b32.xlu0 %v2449, 48
        %v2625 = vpop.permute.xlu0 %2624
        %2626 = vrot.lane.b32.xlu0 %v2451, 48
        %v2627 = vpop.permute.xlu0 %2626
        %2628 = vrot.lane.b32.xlu0 %v2453, 48
        %v2629 = vpop.permute.xlu0 %2628
        %2630 = vrot.lane.b32.xlu0 %v2455, 48
        %v2631 = vpop.permute.xlu0 %2630
        %2632 = vrot.lane.b32.xlu0 %v2457, 48
        %v2633 = vpop.permute.xlu0 %2632
        %2634 = vrot.lane.b32.xlu0 %v2459, 48
        %v2635 = vpop.permute.xlu0 %2634
        %2636 = vrot.lane.b32.xlu0 %v2461, 48
        %v2637 = vpop.permute.xlu0 %2636
        %2638 = vrot.lane.b32.xlu0 %v2463, 48
        %v2639 = vpop.permute.xlu0 %2638
        %2640 = vrot.lane.b32.xlu0 %v2465, 48
        %v2641 = vpop.permute.xlu0 %2640
        %2642 = vrot.lane.b32.xlu0 %v2467, 48
        %v2643 = vpop.permute.xlu0 %2642
        %2644 = vrot.lane.b32.xlu0 %v2469, 48
        %v2645 = vpop.permute.xlu0 %2644
        %v2662 = vsel %vm1897, %v2343, %v2487
        %v2663 = vsel %vm1897, %v2345, %v2489
        %v2664 = vsel %vm1897, %v2347, %v2491
        %v2665 = vsel %vm1897, %v2349, %v2493
        %v2666 = vsel %vm1897, %v2351, %v2495
        %v2667 = vsel %vm1897, %v2353, %v2497
        %v2668 = vsel %vm1897, %v2355, %v2499
        %v2669 = vsel %vm1897, %v2357, %v2501
        %v2670 = vsel %vm1897, %v2359, %v2503
        %v2671 = vsel %vm1897, %v2361, %v2505
        %v2672 = vsel %vm1897, %v2363, %v2507
        %v2673 = vsel %vm1897, %v2365, %v2509
        %v2674 = vsel %vm1897, %v2367, %v2511
        %v2675 = vsel %vm1897, %v2369, %v2513
        %v2676 = vsel %vm1897, %v2371, %v2515
        %v2677 = vsel %vm1897, %v2373, %v2517
        %v2678 = vsel %vm2002, %v2662, %v2551
        %v2679 = vsel %vm2002, %v2663, %v2553
        %v2680 = vsel %vm2002, %v2664, %v2555
        %v2681 = vsel %vm2002, %v2665, %v2557
        %v2682 = vsel %vm2002, %v2666, %v2559
        %v2683 = vsel %vm2002, %v2667, %v2561
        %v2684 = vsel %vm2002, %v2668, %v2563
        %v2685 = vsel %vm2002, %v2669, %v2565
        %v2686 = vsel %vm2002, %v2670, %v2567
        %v2687 = vsel %vm2002, %v2671, %v2569
        %v2688 = vsel %vm2002, %v2672, %v2571
        %v2689 = vsel %vm2002, %v2673, %v2573
        %v2690 = vsel %vm2002, %v2674, %v2575
        %v2691 = vsel %vm2002, %v2675, %v2577
        %v2692 = vsel %vm2002, %v2676, %v2579
        %v2693 = vsel %vm2002, %v2677, %v2581
        %vm2694 = vcmask 392192
        %v2695 = vsel %vm2694, %v2678, %v2615
        %v2696 = vsel %vm2694, %v2679, %v2617
        %v2697 = vsel %vm2694, %v2680, %v2619
        %v2698 = vsel %vm2694, %v2681, %v2621
        %v2699 = vsel %vm2694, %v2682, %v2623
        %v2700 = vsel %vm2694, %v2683, %v2625
        %v2701 = vsel %vm2694, %v2684, %v2627
        %v2702 = vsel %vm2694, %v2685, %v2629
        %v2703 = vsel %vm2694, %v2686, %v2631
        %v2704 = vsel %vm2694, %v2687, %v2633
        %v2705 = vsel %vm2694, %v2688, %v2635
        %v2706 = vsel %vm2694, %v2689, %v2637
        %v2707 = vsel %vm2694, %v2690, %v2639
        %v2708 = vsel %vm2694, %v2691, %v2641
        %v2709 = vsel %vm2694, %v2692, %v2643
        %v2710 = vsel %vm2694, %v2693, %v2645
        %v2711 = vpack.c.bf16 %v2696, %v2695
        %v2712 = vpack.c.bf16 %v2698, %v2697
        %v2713 = vpack.c.bf16 %v2700, %v2699
        %v2714 = vpack.c.bf16 %v2702, %v2701
        %v2715 = vpack.c.bf16 %v2704, %v2703
        %v2716 = vpack.c.bf16 %v2706, %v2705
        %v2717 = vpack.c.bf16 %v2708, %v2707
        %v2718 = vpack.c.bf16 %v2710, %v2709
        %v2719 = vld [vmem:[%s3] sm:$0xf]
        %v2720 = vld [vmem:[%s3 + $0x4] sm:$0xf]
        %v2721 = vld [vmem:[%s3 + $0x8] sm:$0xf]
        %v2722 = vld [vmem:[%s3 + $0xc] sm:$0xf]
        %v2723 = vld [vmem:[%s3 + $0x10] sm:$0xf]
        %v2724 = vld [vmem:[%s3 + $0x14] sm:$0xf]
        %v2725 = vld [vmem:[%s3 + $0x18] sm:$0xf]
        %v2726 = vld [vmem:[%s3 + $0x1c] sm:$0xf]
        %v2727 = vld [vmem:[#allocation11] sm:$0x1]
        %v2729 = vlaneseq
        %v2730 = vshrl.u32 %v2729, 7
        %v2731 = vsub.s32 0, %v2730
        %v2732 = vrot.slane %v2727, %v2731
        %v2742 = vunpack.c.l.b16 %v2719
        %v2743 = vunpack.c.l.b16 %v2720
        %v2744 = vunpack.c.l.b16 %v2721
        %v2745 = vunpack.c.l.b16 %v2722
        %v2746 = vunpack.c.l.b16 %v2723
        %v2747 = vunpack.c.l.b16 %v2724
        %v2748 = vunpack.c.l.b16 %v2725
        %v2749 = vunpack.c.l.b16 %v2726
        %v2750 = vpack.c.b16 %v2743, %v2742
        %v2751 = vpack.c.b16 %v2745, %v2744
        %v2752 = vpack.c.b16 %v2747, %v2746
        %v2753 = vpack.c.b16 %v2749, %v2748
        %vm2758 = vcmask 523264
        %v2760 = vsel %vm2758, %v2711, 0
        %v2763 = vsel %vm2758, %v2712, 0
        %v2766 = vsel %vm2758, %v2713, 0
        %v2769 = vsel %vm2758, %v2714, 0
        %v2772 = vsel %vm2758, %v2715, 0
        %v2775 = vsel %vm2758, %v2716, 0
        %v2778 = vsel %vm2758, %v2717, 0
        %v2781 = vsel %vm2758, %v2718, 0
        %2783 = vmatprep.subr.bf16.mxu0 0
        %2784 = vmatpush1.bf16.msra.mxu0 0
        %2785 = vmatprep.subr.bf16.mxu0 0
        %2786 = vmatpush1.bf16.msra.mxu0 0
        %2787 = vmatprep.subr.bf16.mxu0 0
        %2788 = vmatpush1.bf16.msra.mxu0 0
        %2789 = vmatprep.subr.bf16.mxu0 0
        %2790 = vmatpush1.bf16.msra.mxu0 0
        %2791 = vmatprep.subr.bf16.mxu0 0
        %2792 = vmatpush1.bf16.msra.mxu0 %v2753
        %2793 = vmatprep.subr.bf16.mxu0 0
        %2794 = vmatpush1.bf16.msra.mxu0 %v2752
        %2795 = vmatprep.subr.bf16.mxu0 0
        %2796 = vmatpush1.bf16.msra.mxu0 %v2751
        %2797 = vmatprep.subr.bf16.mxu0 0
        %2798 = vmatpush1.bf16.msra.mxu0 %v2750
        %2799 = vmatprep.subr.bf16.mxu0 0
        %2800 = vmatpush2.bf16.msra.mxu0 0
        %2801 = vmatprep.subr.bf16.mxu0 0
        %2802 = vmatpush2.bf16.msra.mxu0 0
        %2803 = vmatprep.subr.bf16.mxu0 0
        %2804 = vmatpush2.bf16.msra.mxu0 0
        %2805 = vmatprep.subr.bf16.mxu0 0
        %2806 = vmatpush2.bf16.msra.mxu0 0
        %2807 = vmatprep.subr.bf16.mxu0 0
        %2808 = vmatpush2.bf16.msra.mxu0 0
        %2809 = vmatprep.subr.bf16.mxu0 0
        %2810 = vmatpush2.bf16.msra.mxu0 0
        %2811 = vmatprep.subr.bf16.mxu0 0
        %2812 = vmatpush2.bf16.msra.mxu0 0
        %2813 = vmatprep.subr.bf16.mxu0 0
        %2814 = vmatpush2.bf16.msra.mxu0 0
        %2815 = vmatprep.mubr.bf16.mxu0 0
        %2816 = vmatmul.mubr.bf16.gmra.mxu0 %v2760
        %v2817 = vpop.f32.mrf.mxu0
        %v2818 = vadd.f32 %v2732, %v2817
        %v2819 = vpop.f32.mrf.mxu0
        %v2820 = vpop.f32.mrf.mxu0
        %v2821 = vadd.f32 %v2732, %v2820
        %v2822 = vpop.f32.mrf.mxu0
        %2823 = vmatprep.mubr.bf16.mxu0 0
        %2824 = vmatmul.mubr.bf16.gmra.mxu0 %v2763
        %v2825 = vpop.f32.mrf.mxu0
        %v2826 = vadd.f32 %v2732, %v2825
        %v2827 = vpop.f32.mrf.mxu0
        %v2828 = vpop.f32.mrf.mxu0
        %v2829 = vadd.f32 %v2732, %v2828
        %v2830 = vpop.f32.mrf.mxu0
        %2831 = vmatprep.mubr.bf16.mxu0 0
        %2832 = vmatmul.mubr.bf16.gmra.mxu0 %v2766
        %v2833 = vpop.f32.mrf.mxu0
        %v2834 = vadd.f32 %v2732, %v2833
        %v2835 = vpop.f32.mrf.mxu0
        %v2836 = vpop.f32.mrf.mxu0
        %v2837 = vadd.f32 %v2732, %v2836
        %v2838 = vpop.f32.mrf.mxu0
        %2839 = vmatprep.mubr.bf16.mxu0 0
        %2840 = vmatmul.mubr.bf16.gmra.mxu0 %v2769
        %v2841 = vpop.f32.mrf.mxu0
        %v2842 = vadd.f32 %v2732, %v2841
        %v2843 = vpop.f32.mrf.mxu0
        %v2844 = vpop.f32.mrf.mxu0
        %v2845 = vadd.f32 %v2732, %v2844
        %v2846 = vpop.f32.mrf.mxu0
        %2847 = vmatprep.mubr.bf16.mxu0 0
        %2848 = vmatmul.mubr.bf16.gmra.mxu0 %v2772
        %v2849 = vpop.f32.mrf.mxu0
        %v2850 = vadd.f32 %v2732, %v2849
        %v2851 = vpop.f32.mrf.mxu0
        %v2852 = vpop.f32.mrf.mxu0
        %v2853 = vadd.f32 %v2732, %v2852
        %v2854 = vpop.f32.mrf.mxu0
        %2855 = vmatprep.mubr.bf16.mxu0 0
        %2856 = vmatmul.mubr.bf16.gmra.mxu0 %v2775
        %v2857 = vpop.f32.mrf.mxu0
        %v2858 = vadd.f32 %v2732, %v2857
        %v2859 = vpop.f32.mrf.mxu0
        %v2860 = vpop.f32.mrf.mxu0
        %v2861 = vadd.f32 %v2732, %v2860
        %v2862 = vpop.f32.mrf.mxu0
        %2863 = vmatprep.mubr.bf16.mxu0 0
        %2864 = vmatmul.mubr.bf16.gmra.mxu0 %v2778
        %v2865 = vpop.f32.mrf.mxu0
        %v2866 = vadd.f32 %v2732, %v2865
        %v2867 = vpop.f32.mrf.mxu0
        %v2868 = vpop.f32.mrf.mxu0
        %v2869 = vadd.f32 %v2732, %v2868
        %v2870 = vpop.f32.mrf.mxu0
        %2871 = vmatprep.mubr.bf16.mxu0 0
        %2872 = vmatmul.mubr.bf16.gmra.mxu0 %v2781
        %v2873 = vpop.f32.mrf.mxu0
        %v2874 = vadd.f32 %v2732, %v2873
        %v2875 = vpop.f32.mrf.mxu0
        %v2876 = vpop.f32.mrf.mxu0
        %v2877 = vadd.f32 %v2732, %v2876
        %v2878 = vpop.f32.mrf.mxu0
        %2879 = vdwg.mxu0
        %vm2880 = vcmp.gt.f32.partialorder %v2818, 0.0
        %vm2881 = vcmp.gt.f32.partialorder %v2821, 0.0
        %vm2882 = vcmp.gt.f32.partialorder %v2826, 0.0
        %vm2883 = vcmp.gt.f32.partialorder %v2829, 0.0
        %vm2884 = vcmp.gt.f32.partialorder %v2834, 0.0
        %vm2885 = vcmp.gt.f32.partialorder %v2837, 0.0
        %vm2886 = vcmp.gt.f32.partialorder %v2842, 0.0
        %vm2887 = vcmp.gt.f32.partialorder %v2845, 0.0
        %vm2888 = vcmp.gt.f32.partialorder %v2850, 0.0
        %vm2889 = vcmp.gt.f32.partialorder %v2853, 0.0
        %vm2890 = vcmp.gt.f32.partialorder %v2858, 0.0
        %vm2891 = vcmp.gt.f32.partialorder %v2861, 0.0
        %vm2892 = vcmp.gt.f32.partialorder %v2866, 0.0
        %vm2893 = vcmp.gt.f32.partialorder %v2869, 0.0
        %vm2894 = vcmp.gt.f32.partialorder %v2874, 0.0
        %vm2895 = vcmp.gt.f32.partialorder %v2877, 0.0
        %v2896 = vmul.f32 %v2818, 0.1
        %v2897 = vmul.f32 %v2821, 0.1
        %v2898 = vmul.f32 %v2826, 0.1
        %v2899 = vmul.f32 %v2829, 0.1
        %v2900 = vmul.f32 %v2834, 0.1
        %v2901 = vmul.f32 %v2837, 0.1
        %v2902 = vmul.f32 %v2842, 0.1
        %v2903 = vmul.f32 %v2845, 0.1
        %v2904 = vmul.f32 %v2850, 0.1
        %v2905 = vmul.f32 %v2853, 0.1
        %v2906 = vmul.f32 %v2858, 0.1
        %v2907 = vmul.f32 %v2861, 0.1
        %v2908 = vmul.f32 %v2866, 0.1
        %v2909 = vmul.f32 %v2869, 0.1
        %v2910 = vmul.f32 %v2874, 0.1
        %v2911 = vmul.f32 %v2877, 0.1
        %v2912 = vsel %vm2880, %v2818, %v2896
        %v2913 = vsel %vm2881, %v2821, %v2897
        %v2914 = vsel %vm2882, %v2826, %v2898
        %v2915 = vsel %vm2883, %v2829, %v2899
        %v2916 = vsel %vm2884, %v2834, %v2900
        %v2917 = vsel %vm2885, %v2837, %v2901
        %v2918 = vsel %vm2886, %v2842, %v2902
        %v2919 = vsel %vm2887, %v2845, %v2903
        %v2920 = vsel %vm2888, %v2850, %v2904
        %v2921 = vsel %vm2889, %v2853, %v2905
        %v2922 = vsel %vm2890, %v2858, %v2906
        %v2923 = vsel %vm2891, %v2861, %v2907
        %v2924 = vsel %vm2892, %v2866, %v2908
        %v2925 = vsel %vm2893, %v2869, %v2909
        %v2926 = vsel %vm2894, %v2874, %v2910
        %v2927 = vsel %vm2895, %v2877, %v2911
        %2928 = vst.msk [vmem:[#allocation4] sm:$0xff] %vm2002, 0.0
        %2929 = vst.msk [vmem:[#allocation4 + $0x8] sm:$0xff] %vm2002, %v2912
        %2930 = vst.msk [vmem:[#allocation4 + $0x10] sm:$0xff] %vm2002, %v2913
        %2931 = vst.msk [vmem:[#allocation4 + $0x18] sm:$0xff] %vm2002, %v2914
        %2932 = vst.msk [vmem:[#allocation4 + $0x20] sm:$0xff] %vm2002, %v2915
        %2933 = vst.msk [vmem:[#allocation4 + $0x28] sm:$0xff] %vm2002, %v2916
        %2934 = vst.msk [vmem:[#allocation4 + $0x30] sm:$0xff] %vm2002, %v2917
        %2935 = vst.msk [vmem:[#allocation4 + $0x38] sm:$0xff] %vm2002, %v2918
        %2936 = vst.msk [vmem:[#allocation4 + $0x40] sm:$0xff] %vm2002, %v2919
        %2937 = vst.msk [vmem:[#allocation4 + $0x48] sm:$0xff] %vm2002, %v2920
        %2938 = vst.msk [vmem:[#allocation4 + $0x50] sm:$0xff] %vm2002, %v2921
        %2939 = vst.msk [vmem:[#allocation4 + $0x58] sm:$0xff] %vm2002, %v2922
        %2940 = vst.msk [vmem:[#allocation4 + $0x60] sm:$0xff] %vm2002, %v2923
        %2941 = vst.msk [vmem:[#allocation4 + $0x68] sm:$0xff] %vm2002, %v2924
        %2942 = vst.msk [vmem:[#allocation4 + $0x70] sm:$0xff] %vm2002, %v2925
        %2943 = vst.msk [vmem:[#allocation4 + $0x78] sm:$0xff] %vm2002, %v2926
        %2944 = vst.msk [vmem:[#allocation4 + $0x80] sm:$0xff] %vm2002, %v2927
        %2945 = vst.msk [vmem:[#allocation4 + $0x88] sm:$0xff] %vm2002, 0.0
        %s2946 = scalar_lea.vmem [#allocation4], 7
        %v2947 = vld [vmem:[%s2946] ss:$2 sm:$0xff]
        %s2948 = scalar_lea.vmem [#allocation4], 23
        %v2949 = vld [vmem:[%s2948] ss:$2 sm:$0xff]
        %s2950 = scalar_lea.vmem [#allocation4], 39
        %v2951 = vld [vmem:[%s2950] ss:$2 sm:$0xff]
        %s2952 = scalar_lea.vmem [#allocation4], 55
        %v2953 = vld [vmem:[%s2952] ss:$2 sm:$0xff]
        %s2954 = scalar_lea.vmem [#allocation4], 71
        %v2955 = vld [vmem:[%s2954] ss:$2 sm:$0xff]
        %s2956 = scalar_lea.vmem [#allocation4], 87
        %v2957 = vld [vmem:[%s2956] ss:$2 sm:$0xff]
        %s2958 = scalar_lea.vmem [#allocation4], 103
        %v2959 = vld [vmem:[%s2958] ss:$2 sm:$0xff]
        %s2960 = scalar_lea.vmem [#allocation4], 119
        %v2961 = vld [vmem:[%s2960] ss:$2 sm:$0xff]
        %s2962 = scalar_lea.vmem [#allocation4], 8
        %v2963 = vld [vmem:[%s2962] ss:$2 sm:$0xff]
        %s2964 = scalar_lea.vmem [#allocation4], 24
        %v2965 = vld [vmem:[%s2964] ss:$2 sm:$0xff]
        %s2966 = scalar_lea.vmem [#allocation4], 40
        %v2967 = vld [vmem:[%s2966] ss:$2 sm:$0xff]
        %s2968 = scalar_lea.vmem [#allocation4], 56
        %v2969 = vld [vmem:[%s2968] ss:$2 sm:$0xff]
        %s2970 = scalar_lea.vmem [#allocation4], 72
        %v2971 = vld [vmem:[%s2970] ss:$2 sm:$0xff]
        %s2972 = scalar_lea.vmem [#allocation4], 88
        %v2973 = vld [vmem:[%s2972] ss:$2 sm:$0xff]
        %s2974 = scalar_lea.vmem [#allocation4], 104
        %v2975 = vld [vmem:[%s2974] ss:$2 sm:$0xff]
        %s2976 = scalar_lea.vmem [#allocation4], 120
        %v2977 = vld [vmem:[%s2976] ss:$2 sm:$0xff]
        %s2978 = scalar_lea.vmem [#allocation4], 9
        %v2979 = vld [vmem:[%s2978] ss:$2 sm:$0xff]
        %s2980 = scalar_lea.vmem [#allocation4], 25
        %v2981 = vld [vmem:[%s2980] ss:$2 sm:$0xff]
        %s2982 = scalar_lea.vmem [#allocation4], 41
        %v2983 = vld [vmem:[%s2982] ss:$2 sm:$0xff]
        %s2984 = scalar_lea.vmem [#allocation4], 57
        %v2985 = vld [vmem:[%s2984] ss:$2 sm:$0xff]
        %s2986 = scalar_lea.vmem [#allocation4], 73
        %v2987 = vld [vmem:[%s2986] ss:$2 sm:$0xff]
        %s2988 = scalar_lea.vmem [#allocation4], 89
        %v2989 = vld [vmem:[%s2988] ss:$2 sm:$0xff]
        %s2990 = scalar_lea.vmem [#allocation4], 105
        %v2991 = vld [vmem:[%s2990] ss:$2 sm:$0xff]
        %s2992 = scalar_lea.vmem [#allocation4], 121
        %v2993 = vld [vmem:[%s2992] ss:$2 sm:$0xff]
        %s2994 = scalar_lea.vmem [#allocation4], 10
        %v2995 = vld [vmem:[%s2994] ss:$2 sm:$0xff]
        %s2996 = scalar_lea.vmem [#allocation4], 26
        %v2997 = vld [vmem:[%s2996] ss:$2 sm:$0xff]
        %s2998 = scalar_lea.vmem [#allocation4], 42
        %v2999 = vld [vmem:[%s2998] ss:$2 sm:$0xff]
        %s3000 = scalar_lea.vmem [#allocation4], 58
        %v3001 = vld [vmem:[%s3000] ss:$2 sm:$0xff]
        %s3002 = scalar_lea.vmem [#allocation4], 74
        %v3003 = vld [vmem:[%s3002] ss:$2 sm:$0xff]
        %s3004 = scalar_lea.vmem [#allocation4], 90
        %v3005 = vld [vmem:[%s3004] ss:$2 sm:$0xff]
        %s3006 = scalar_lea.vmem [#allocation4], 106
        %v3007 = vld [vmem:[%s3006] ss:$2 sm:$0xff]
        %s3008 = scalar_lea.vmem [#allocation4], 122
        %v3009 = vld [vmem:[%s3008] ss:$2 sm:$0xff]
        %3018 = vrot.lane.b32.xlu0 %v2963, 32
        %v3019 = vpop.permute.xlu0 %3018
        %3020 = vrot.lane.b32.xlu0 %v2965, 32
        %v3021 = vpop.permute.xlu0 %3020
        %3022 = vrot.lane.b32.xlu0 %v2967, 32
        %v3023 = vpop.permute.xlu0 %3022
        %3024 = vrot.lane.b32.xlu0 %v2969, 32
        %v3025 = vpop.permute.xlu0 %3024
        %3026 = vrot.lane.b32.xlu0 %v2971, 32
        %v3027 = vpop.permute.xlu0 %3026
        %3028 = vrot.lane.b32.xlu0 %v2973, 32
        %v3029 = vpop.permute.xlu0 %3028
        %3030 = vrot.lane.b32.xlu0 %v2975, 32
        %v3031 = vpop.permute.xlu0 %3030
        %3032 = vrot.lane.b32.xlu0 %v2977, 32
        %v3033 = vpop.permute.xlu0 %3032
        %3050 = vrot.lane.b32.xlu0 %v2979, 64
        %v3051 = vpop.permute.xlu0 %3050
        %3052 = vrot.lane.b32.xlu0 %v2981, 64
        %v3053 = vpop.permute.xlu0 %3052
        %3054 = vrot.lane.b32.xlu0 %v2983, 64
        %v3055 = vpop.permute.xlu0 %3054
        %3056 = vrot.lane.b32.xlu0 %v2985, 64
        %v3057 = vpop.permute.xlu0 %3056
        %3058 = vrot.lane.b32.xlu0 %v2987, 64
        %v3059 = vpop.permute.xlu0 %3058
        %3060 = vrot.lane.b32.xlu0 %v2989, 64
        %v3061 = vpop.permute.xlu0 %3060
        %3062 = vrot.lane.b32.xlu0 %v2991, 64
        %v3063 = vpop.permute.xlu0 %3062
        %3064 = vrot.lane.b32.xlu0 %v2993, 64
        %v3065 = vpop.permute.xlu0 %3064
        %3082 = vrot.lane.b32.xlu0 %v2995, 96
        %v3083 = vpop.permute.xlu0 %3082
        %3084 = vrot.lane.b32.xlu0 %v2997, 96
        %v3085 = vpop.permute.xlu0 %3084
        %3086 = vrot.lane.b32.xlu0 %v2999, 96
        %v3087 = vpop.permute.xlu0 %3086
        %3088 = vrot.lane.b32.xlu0 %v3001, 96
        %v3089 = vpop.permute.xlu0 %3088
        %3090 = vrot.lane.b32.xlu0 %v3003, 96
        %v3091 = vpop.permute.xlu0 %3090
        %3092 = vrot.lane.b32.xlu0 %v3005, 96
        %v3093 = vpop.permute.xlu0 %3092
        %3094 = vrot.lane.b32.xlu0 %v3007, 96
        %v3095 = vpop.permute.xlu0 %3094
        %3096 = vrot.lane.b32.xlu0 %v3009, 96
        %v3097 = vpop.permute.xlu0 %3096
        %v3106 = vsel %vm2002, %v2947, %v3019
        %v3107 = vsel %vm2002, %v2949, %v3021
        %v3108 = vsel %vm2002, %v2951, %v3023
        %v3109 = vsel %vm2002, %v2953, %v3025
        %v3110 = vsel %vm2002, %v2955, %v3027
        %v3111 = vsel %vm2002, %v2957, %v3029
        %v3112 = vsel %vm2002, %v2959, %v3031
        %v3113 = vsel %vm2002, %v2961, %v3033
        %v3114 = vsel %vm2758, %v3106, %v3051
        %v3115 = vsel %vm2758, %v3107, %v3053
        %v3116 = vsel %vm2758, %v3108, %v3055
        %v3117 = vsel %vm2758, %v3109, %v3057
        %v3118 = vsel %vm2758, %v3110, %v3059
        %v3119 = vsel %vm2758, %v3111, %v3061
        %v3120 = vsel %vm2758, %v3112, %v3063
        %v3121 = vsel %vm2758, %v3113, %v3065
        %vm3122 = vcmask 785408
        %v3123 = vsel %vm3122, %v3114, %v3083
        %v3124 = vsel %vm3122, %v3115, %v3085
        %v3125 = vsel %vm3122, %v3116, %v3087
        %v3126 = vsel %vm3122, %v3117, %v3089
        %v3127 = vsel %vm3122, %v3118, %v3091
        %v3128 = vsel %vm3122, %v3119, %v3093
        %v3129 = vsel %vm3122, %v3120, %v3095
        %v3130 = vsel %vm3122, %v3121, %v3097
        %v3131 = vpack.c.bf16 %v3124, %v3123
        %v3132 = vpack.c.bf16 %v3126, %v3125
        %v3133 = vpack.c.bf16 %v3128, %v3127
        %v3134 = vpack.c.bf16 %v3130, %v3129
        %v3135 = vld [vmem:[%s4] sm:$0xf]
        %v3136 = vld [vmem:[%s4 + $0x4] sm:$0xf]
        %v3137 = vld [vmem:[%s4 + $0x8] sm:$0xf]
        %v3138 = vld [vmem:[%s4 + $0xc] sm:$0xf]
        %v3139 = vld [vmem:[%s4 + $0x10] sm:$0xf]
        %v3140 = vld [vmem:[%s4 + $0x14] sm:$0xf]
        %v3141 = vld [vmem:[%s4 + $0x18] sm:$0xf]
        %v3142 = vld [vmem:[%s4 + $0x1c] sm:$0xf]
        %v3143 = vld [vmem:[%s4 + $0x20] sm:$0xf]
        %v3144 = vld [vmem:[%s4 + $0x24] sm:$0xf]
        %v3145 = vld [vmem:[%s4 + $0x28] sm:$0xf]
        %v3146 = vld [vmem:[%s4 + $0x2c] sm:$0xf]
        %v3147 = vld [vmem:[%s4 + $0x30] sm:$0xf]
        %v3148 = vld [vmem:[%s4 + $0x34] sm:$0xf]
        %v3149 = vld [vmem:[%s4 + $0x38] sm:$0xf]
        %v3150 = vld [vmem:[%s4 + $0x3c] sm:$0xf]
        %v3151 = vld [vmem:[#allocation13] sm:$0x1]
        %v3153 = vlaneseq
        %v3154 = vshrl.u32 %v3153, 7
        %v3155 = vsub.s32 0, %v3154
        %v3156 = vrot.slane %v3151, %v3155
        %v3174 = vunpack.c.l.b16 %v3135
        %v3175 = vunpack.c.l.b16 %v3136
        %v3176 = vunpack.c.l.b16 %v3137
        %v3177 = vunpack.c.l.b16 %v3138
        %v3178 = vunpack.c.l.b16 %v3139
        %v3179 = vunpack.c.l.b16 %v3140
        %v3180 = vunpack.c.l.b16 %v3141
        %v3181 = vunpack.c.l.b16 %v3142
        %v3182 = vunpack.c.l.b16 %v3143
        %v3183 = vunpack.c.l.b16 %v3144
        %v3184 = vunpack.c.l.b16 %v3145
        %v3185 = vunpack.c.l.b16 %v3146
        %v3186 = vunpack.c.l.b16 %v3147
        %v3187 = vunpack.c.l.b16 %v3148
        %v3188 = vunpack.c.l.b16 %v3149
        %v3189 = vunpack.c.l.b16 %v3150
        %v3190 = vpack.c.b16 %v3175, %v3174
        %v3191 = vpack.c.b16 %v3177, %v3176
        %v3192 = vpack.c.b16 %v3179, %v3178
        %v3193 = vpack.c.b16 %v3181, %v3180
        %v3194 = vpack.c.b16 %v3183, %v3182
        %v3195 = vpack.c.b16 %v3185, %v3184
        %v3196 = vpack.c.b16 %v3187, %v3186
        %v3197 = vpack.c.b16 %v3189, %v3188
        %3206 = vmatprep.subr.bf16.mxu0 0
        %3207 = vmatpush1.bf16.msra.mxu0 %v3197
        %3208 = vmatprep.subr.bf16.mxu0 0
        %3209 = vmatpush1.bf16.msra.mxu0 %v3196
        %3210 = vmatprep.subr.bf16.mxu0 0
        %3211 = vmatpush1.bf16.msra.mxu0 %v3195
        %3212 = vmatprep.subr.bf16.mxu0 0
        %3213 = vmatpush1.bf16.msra.mxu0 %v3194
        %3214 = vmatprep.subr.bf16.mxu0 0
        %3215 = vmatpush1.bf16.msra.mxu0 %v3193
        %3216 = vmatprep.subr.bf16.mxu0 0
        %3217 = vmatpush1.bf16.msra.mxu0 %v3192
        %3218 = vmatprep.subr.bf16.mxu0 0
        %3219 = vmatpush1.bf16.msra.mxu0 %v3191
        %3220 = vmatprep.subr.bf16.mxu0 0
        %3221 = vmatpush1.bf16.msra.mxu0 %v3190
        %3222 = vmatprep.subr.bf16.mxu0 0
        %3223 = vmatpush2.bf16.msra.mxu0 0
        %3224 = vmatprep.subr.bf16.mxu0 0
        %3225 = vmatpush2.bf16.msra.mxu0 0
        %3226 = vmatprep.subr.bf16.mxu0 0
        %3227 = vmatpush2.bf16.msra.mxu0 0
        %3228 = vmatprep.subr.bf16.mxu0 0
        %3229 = vmatpush2.bf16.msra.mxu0 0
        %3230 = vmatprep.subr.bf16.mxu0 0
        %3231 = vmatpush2.bf16.msra.mxu0 0
        %3232 = vmatprep.subr.bf16.mxu0 0
        %3233 = vmatpush2.bf16.msra.mxu0 0
        %3234 = vmatprep.subr.bf16.mxu0 0
        %3235 = vmatpush2.bf16.msra.mxu0 0
        %3236 = vmatprep.subr.bf16.mxu0 0
        %3237 = vmatpush2.bf16.msra.mxu0 0
        %3238 = vmatprep.mubr.bf16.mxu0 0
        %3239 = vmatmul.mubr.bf16.gmra.mxu0 %v3131
        %v3240 = vpop.f32.mrf.mxu0
        %v3241 = vadd.f32 %v3156, %v3240
        %v3242 = vpop.f32.mrf.mxu0
        %v3243 = vpop.f32.mrf.mxu0
        %v3244 = vadd.f32 %v3156, %v3243
        %v3245 = vpop.f32.mrf.mxu0
        %3246 = vmatprep.mubr.bf16.mxu0 0
        %3247 = vmatmul.mubr.bf16.gmra.mxu0 %v3132
        %v3248 = vpop.f32.mrf.mxu0
        %v3249 = vadd.f32 %v3156, %v3248
        %v3250 = vpop.f32.mrf.mxu0
        %v3251 = vpop.f32.mrf.mxu0
        %v3252 = vadd.f32 %v3156, %v3251
        %v3253 = vpop.f32.mrf.mxu0
        %3254 = vmatprep.mubr.bf16.mxu0 0
        %3255 = vmatmul.mubr.bf16.gmra.mxu0 %v3133
        %v3256 = vpop.f32.mrf.mxu0
        %v3257 = vadd.f32 %v3156, %v3256
        %v3258 = vpop.f32.mrf.mxu0
        %v3259 = vpop.f32.mrf.mxu0
        %v3260 = vadd.f32 %v3156, %v3259
        %v3261 = vpop.f32.mrf.mxu0
        %3262 = vmatprep.mubr.bf16.mxu0 0
        %3263 = vmatmul.mubr.bf16.gmra.mxu0 %v3134
        %v3264 = vpop.f32.mrf.mxu0
        %v3265 = vadd.f32 %v3156, %v3264
        %v3266 = vpop.f32.mrf.mxu0
        %v3267 = vpop.f32.mrf.mxu0
        %v3268 = vadd.f32 %v3156, %v3267
        %v3269 = vpop.f32.mrf.mxu0
        %3270 = vdwg.mxu0
        %vm3271 = vcmp.gt.f32.partialorder %v3241, 0.0
        %vm3272 = vcmp.gt.f32.partialorder %v3244, 0.0
        %vm3273 = vcmp.gt.f32.partialorder %v3249, 0.0
        %vm3274 = vcmp.gt.f32.partialorder %v3252, 0.0
        %vm3275 = vcmp.gt.f32.partialorder %v3257, 0.0
        %vm3276 = vcmp.gt.f32.partialorder %v3260, 0.0
        %vm3277 = vcmp.gt.f32.partialorder %v3265, 0.0
        %vm3278 = vcmp.gt.f32.partialorder %v3268, 0.0
        %v3279 = vmul.f32 %v3241, 0.1
        %v3280 = vmul.f32 %v3244, 0.1
        %v3281 = vmul.f32 %v3249, 0.1
        %v3282 = vmul.f32 %v3252, 0.1
        %v3283 = vmul.f32 %v3257, 0.1
        %v3284 = vmul.f32 %v3260, 0.1
        %v3285 = vmul.f32 %v3265, 0.1
        %v3286 = vmul.f32 %v3268, 0.1
        %v3287 = vsel %vm3271, %v3241, %v3279
        %v3288 = vsel %vm3272, %v3244, %v3280
        %v3289 = vsel %vm3273, %v3249, %v3281
        %v3290 = vsel %vm3274, %v3252, %v3282
        %v3291 = vsel %vm3275, %v3257, %v3283
        %v3292 = vsel %vm3276, %v3260, %v3284
        %v3293 = vsel %vm3277, %v3265, %v3285
        %v3294 = vsel %vm3278, %v3268, %v3286
        %3295 = vst.msk [vmem:[#allocation5] sm:$0xff] %vm2758, 0.0
        %3296 = vst.msk [vmem:[#allocation5 + $0x8] sm:$0xff] %vm2758, %v3287
        %3297 = vst.msk [vmem:[#allocation5 + $0x10] sm:$0xff] %vm2758, %v3288
        %3298 = vst.msk [vmem:[#allocation5 + $0x18] sm:$0xff] %vm2758, %v3289
        %3299 = vst.msk [vmem:[#allocation5 + $0x20] sm:$0xff] %vm2758, %v3290
        %3300 = vst.msk [vmem:[#allocation5 + $0x28] sm:$0xff] %vm2758, %v3291
        %3301 = vst.msk [vmem:[#allocation5 + $0x30] sm:$0xff] %vm2758, %v3292
        %3302 = vst.msk [vmem:[#allocation5 + $0x38] sm:$0xff] %vm2758, %v3293
        %3303 = vst.msk [vmem:[#allocation5 + $0x40] sm:$0xff] %vm2758, %v3294
        %3304 = vst.msk [vmem:[#allocation5 + $0x48] sm:$0xff] %vm2758, 0.0
        %s3305 = scalar_lea.vmem [#allocation5], 7
        %v3306 = vld [vmem:[%s3305] ss:$2 sm:$0xff]
        %s3307 = scalar_lea.vmem [#allocation5], 23
        %v3308 = vld [vmem:[%s3307] ss:$2 sm:$0xff]
        %s3309 = scalar_lea.vmem [#allocation5], 39
        %v3310 = vld [vmem:[%s3309] ss:$2 sm:$0xff]
        %s3311 = scalar_lea.vmem [#allocation5], 55
        %v3312 = vld [vmem:[%s3311] ss:$2 sm:$0xff]
        %s3313 = scalar_lea.vmem [#allocation5], 8
        %v3314 = vld [vmem:[%s3313] ss:$2 sm:$0xff]
        %s3315 = scalar_lea.vmem [#allocation5], 24
        %v3316 = vld [vmem:[%s3315] ss:$2 sm:$0xff]
        %s3317 = scalar_lea.vmem [#allocation5], 40
        %v3318 = vld [vmem:[%s3317] ss:$2 sm:$0xff]
        %s3319 = scalar_lea.vmem [#allocation5], 56
        %v3320 = vld [vmem:[%s3319] ss:$2 sm:$0xff]
        %s3321 = scalar_lea.vmem [#allocation5], 9
        %v3322 = vld [vmem:[%s3321] ss:$2 sm:$0xff]
        %s3323 = scalar_lea.vmem [#allocation5], 25
        %v3324 = vld [vmem:[%s3323] ss:$2 sm:$0xff]
        %s3325 = scalar_lea.vmem [#allocation5], 41
        %v3326 = vld [vmem:[%s3325] ss:$2 sm:$0xff]
        %s3327 = scalar_lea.vmem [#allocation5], 57
        %v3328 = vld [vmem:[%s3327] ss:$2 sm:$0xff]
        %s3329 = scalar_lea.vmem [#allocation5], 10
        %v3330 = vld [vmem:[%s3329] ss:$2 sm:$0xff]
        %s3331 = scalar_lea.vmem [#allocation5], 26
        %v3332 = vld [vmem:[%s3331] ss:$2 sm:$0xff]
        %s3333 = scalar_lea.vmem [#allocation5], 42
        %v3334 = vld [vmem:[%s3333] ss:$2 sm:$0xff]
        %s3335 = scalar_lea.vmem [#allocation5], 58
        %v3336 = vld [vmem:[%s3335] ss:$2 sm:$0xff]
        %3341 = vrot.lane.b32.xlu0 %v3314, 64
        %v3342 = vpop.permute.xlu0 %3341
        %3343 = vrot.lane.b32.xlu0 %v3316, 64
        %v3344 = vpop.permute.xlu0 %3343
        %3345 = vrot.lane.b32.xlu0 %v3318, 64
        %v3346 = vpop.permute.xlu0 %3345
        %3347 = vrot.lane.b32.xlu0 %v3320, 64
        %v3348 = vpop.permute.xlu0 %3347
        %3357 = vrot.lane.b32.xlu0 %v3330, 64
        %v3358 = vpop.permute.xlu0 %3357
        %3359 = vrot.lane.b32.xlu0 %v3332, 64
        %v3360 = vpop.permute.xlu0 %3359
        %3361 = vrot.lane.b32.xlu0 %v3334, 64
        %v3362 = vpop.permute.xlu0 %3361
        %3363 = vrot.lane.b32.xlu0 %v3336, 64
        %v3364 = vpop.permute.xlu0 %3363
        %v3369 = vsel %vm2758, %v3306, %v3342
        %v3370 = vsel %vm2758, %v3308, %v3344
        %v3371 = vsel %vm2758, %v3310, %v3346
        %v3372 = vsel %vm2758, %v3312, %v3348
        %v3373 = vsel %vm2758, %v3322, %v3358
        %v3374 = vsel %vm2758, %v3324, %v3360
        %v3375 = vsel %vm2758, %v3326, %v3362
        %v3376 = vsel %vm2758, %v3328, %v3364
        %v3377 = vpack.c.bf16 %v3370, %v3369
        %v3378 = vpack.c.bf16 %v3374, %v3373
        %v3379 = vpack.c.bf16 %v3372, %v3371
        %v3380 = vpack.c.bf16 %v3376, %v3375
        %v3381 = vld [vmem:[#allocation6] sm:$0xf]
        %v3382 = vld [vmem:[#allocation6 + $0x4] sm:$0xf]
        %v3383 = vld [vmem:[#allocation6 + $0x8] sm:$0xf]
        %v3384 = vld [vmem:[#allocation6 + $0xc] sm:$0xf]
        %v3385 = vld [vmem:[#allocation6 + $0x10] sm:$0xf]
        %v3386 = vld [vmem:[#allocation6 + $0x14] sm:$0xf]
        %v3387 = vld [vmem:[#allocation6 + $0x18] sm:$0xf]
        %v3388 = vld [vmem:[#allocation6 + $0x1c] sm:$0xf]
        %v3389 = vld [vmem:[#allocation6 + $0x20] sm:$0xf]
        %v3390 = vld [vmem:[#allocation6 + $0x24] sm:$0xf]
        %v3391 = vld [vmem:[#allocation6 + $0x28] sm:$0xf]
        %v3392 = vld [vmem:[#allocation6 + $0x2c] sm:$0xf]
        %v3393 = vld [vmem:[#allocation6 + $0x30] sm:$0xf]
        %v3394 = vld [vmem:[#allocation6 + $0x34] sm:$0xf]
        %v3395 = vld [vmem:[#allocation6 + $0x38] sm:$0xf]
        %v3396 = vld [vmem:[#allocation6 + $0x3c] sm:$0xf]
        %v3397 = vld [vmem:[#allocation6 + $0x40] sm:$0xf]
        %v3398 = vld [vmem:[#allocation6 + $0x44] sm:$0xf]
        %v3399 = vld [vmem:[#allocation6 + $0x48] sm:$0xf]
        %v3400 = vld [vmem:[#allocation6 + $0x4c] sm:$0xf]
        %v3401 = vld [vmem:[#allocation6 + $0x50] sm:$0xf]
        %v3402 = vld [vmem:[#allocation6 + $0x54] sm:$0xf]
        %v3403 = vld [vmem:[#allocation6 + $0x58] sm:$0xf]
        %v3404 = vld [vmem:[#allocation6 + $0x5c] sm:$0xf]
        %v3405 = vld [vmem:[#allocation6 + $0x60] sm:$0xf]
        %v3406 = vld [vmem:[#allocation6 + $0x64] sm:$0xf]
        %v3407 = vld [vmem:[#allocation6 + $0x68] sm:$0xf]
        %v3408 = vld [vmem:[#allocation6 + $0x6c] sm:$0xf]
        %v3409 = vld [vmem:[#allocation6 + $0x70] sm:$0xf]
        %v3410 = vld [vmem:[#allocation6 + $0x74] sm:$0xf]
        %v3411 = vld [vmem:[#allocation6 + $0x78] sm:$0xf]
        %v3412 = vld [vmem:[#allocation6 + $0x7c] sm:$0xf]
        %v3413 = vld [vmem:[#allocation14] sm:$0x1]
        %v3415 = vlaneseq
        %v3416 = vshrl.u32 %v3415, 7
        %v3417 = vsub.s32 0, %v3416
        %v3418 = vrot.slane %v3413, %v3417
        %v3452 = vunpack.c.l.b16 %v3381
        %v3453 = vunpack.c.l.b16 %v3382
        %v3454 = vunpack.c.l.b16 %v3383
        %v3455 = vunpack.c.l.b16 %v3384
        %v3456 = vunpack.c.l.b16 %v3385
        %v3457 = vunpack.c.l.b16 %v3386
        %v3458 = vunpack.c.l.b16 %v3387
        %v3459 = vunpack.c.l.b16 %v3388
        %v3460 = vunpack.c.l.b16 %v3389
        %v3461 = vunpack.c.l.b16 %v3390
        %v3462 = vunpack.c.l.b16 %v3391
        %v3463 = vunpack.c.l.b16 %v3392
        %v3464 = vunpack.c.l.b16 %v3393
        %v3465 = vunpack.c.l.b16 %v3394
        %v3466 = vunpack.c.l.b16 %v3395
        %v3467 = vunpack.c.l.b16 %v3396
        %v3468 = vunpack.c.l.b16 %v3397
        %v3469 = vunpack.c.l.b16 %v3398
        %v3470 = vunpack.c.l.b16 %v3399
        %v3471 = vunpack.c.l.b16 %v3400
        %v3472 = vunpack.c.l.b16 %v3401
        %v3473 = vunpack.c.l.b16 %v3402
        %v3474 = vunpack.c.l.b16 %v3403
        %v3475 = vunpack.c.l.b16 %v3404
        %v3476 = vunpack.c.l.b16 %v3405
        %v3477 = vunpack.c.l.b16 %v3406
        %v3478 = vunpack.c.l.b16 %v3407
        %v3479 = vunpack.c.l.b16 %v3408
        %v3480 = vunpack.c.l.b16 %v3409
        %v3481 = vunpack.c.l.b16 %v3410
        %v3482 = vunpack.c.l.b16 %v3411
        %v3483 = vunpack.c.l.b16 %v3412
        %v3484 = vpack.c.b16 %v3453, %v3452
        %v3485 = vpack.c.b16 %v3455, %v3454
        %v3486 = vpack.c.b16 %v3457, %v3456
        %v3487 = vpack.c.b16 %v3459, %v3458
        %v3488 = vpack.c.b16 %v3461, %v3460
        %v3489 = vpack.c.b16 %v3463, %v3462
        %v3490 = vpack.c.b16 %v3465, %v3464
        %v3491 = vpack.c.b16 %v3467, %v3466
        %v3492 = vpack.c.b16 %v3469, %v3468
        %v3493 = vpack.c.b16 %v3471, %v3470
        %v3494 = vpack.c.b16 %v3473, %v3472
        %v3495 = vpack.c.b16 %v3475, %v3474
        %v3496 = vpack.c.b16 %v3477, %v3476
        %v3497 = vpack.c.b16 %v3479, %v3478
        %v3498 = vpack.c.b16 %v3481, %v3480
        %v3499 = vpack.c.b16 %v3483, %v3482
        %3516 = vmatprep.subr.bf16.mxu0 0
        %3517 = vmatpush1.bf16.msra.mxu0 %v3491
        %3518 = vmatprep.subr.bf16.mxu0 0
        %3519 = vmatpush1.bf16.msra.mxu0 %v3490
        %3520 = vmatprep.subr.bf16.mxu0 0
        %3521 = vmatpush1.bf16.msra.mxu0 %v3489
        %3522 = vmatprep.subr.bf16.mxu0 0
        %3523 = vmatpush1.bf16.msra.mxu0 %v3488
        %3524 = vmatprep.subr.bf16.mxu0 0
        %3525 = vmatpush1.bf16.msra.mxu0 %v3487
        %3526 = vmatprep.subr.bf16.mxu0 0
        %3527 = vmatpush1.bf16.msra.mxu0 %v3486
        %3528 = vmatprep.subr.bf16.mxu0 0
        %3529 = vmatpush1.bf16.msra.mxu0 %v3485
        %3530 = vmatprep.subr.bf16.mxu0 0
        %3531 = vmatpush1.bf16.msra.mxu0 %v3484
        %3532 = vmatprep.subr.bf16.mxu0 0
        %3533 = vmatpush2.bf16.msra.mxu0 %v3499
        %3534 = vmatprep.subr.bf16.mxu0 0
        %3535 = vmatpush2.bf16.msra.mxu0 %v3498
        %3536 = vmatprep.subr.bf16.mxu0 0
        %3537 = vmatpush2.bf16.msra.mxu0 %v3497
        %3538 = vmatprep.subr.bf16.mxu0 0
        %3539 = vmatpush2.bf16.msra.mxu0 %v3496
        %3540 = vmatprep.subr.bf16.mxu0 0
        %3541 = vmatpush2.bf16.msra.mxu0 %v3495
        %3542 = vmatprep.subr.bf16.mxu0 0
        %3543 = vmatpush2.bf16.msra.mxu0 %v3494
        %3544 = vmatprep.subr.bf16.mxu0 0
        %3545 = vmatpush2.bf16.msra.mxu0 %v3493
        %3546 = vmatprep.subr.bf16.mxu0 0
        %3547 = vmatpush2.bf16.msra.mxu0 %v3492
        %3548 = vmatprep.mubr.bf16.mxu0 %v3378
        %3549 = vmatmul.mubr.bf16.gmra.mxu0 %v3377
        %v3550 = vpop.f32.mrf.mxu0
        %v3551 = vadd.f32 %v3418, %v3550
        %v3552 = vpop.f32.mrf.mxu0
        %v3553 = vpop.f32.mrf.mxu0
        %v3554 = vadd.f32 %v3418, %v3553
        %v3555 = vpop.f32.mrf.mxu0
        %3556 = vmatprep.mubr.bf16.mxu0 %v3380
        %3557 = vmatmul.mubr.bf16.gmra.mxu0 %v3379
        %v3558 = vpop.f32.mrf.mxu0
        %v3559 = vadd.f32 %v3418, %v3558
        %v3560 = vpop.f32.mrf.mxu0
        %v3561 = vpop.f32.mrf.mxu0
        %v3562 = vadd.f32 %v3418, %v3561
        %v3563 = vpop.f32.mrf.mxu0
        %3564 = vdwg.mxu0
        %vm3565 = vcmp.gt.f32.partialorder %v3551, 0.0
        %vm3566 = vcmp.gt.f32.partialorder %v3554, 0.0
        %vm3567 = vcmp.gt.f32.partialorder %v3559, 0.0
        %vm3568 = vcmp.gt.f32.partialorder %v3562, 0.0
        %v3569 = vmul.f32 %v3551, 0.1
        %v3570 = vmul.f32 %v3554, 0.1
        %v3571 = vmul.f32 %v3559, 0.1
        %v3572 = vmul.f32 %v3562, 0.1
        %v3573 = vsel %vm3565, %v3551, %v3569
        %v3574 = vsel %vm3566, %v3554, %v3570
        %v3575 = vsel %vm3567, %v3559, %v3571
        %v3576 = vsel %vm3568, %v3562, %v3572
        %v3577 = vpack.c.bf16 %v3574, %v3573
        %v3578 = vpack.c.bf16 %v3576, %v3575
        %v3581 = vunpack.c.l.b16 %v3577
        %v3582 = vunpack.c.h.b16 %v3577
        %v3583 = vunpack.c.l.b16 %v3578
        %v3584 = vunpack.c.h.b16 %v3578
        %v3585 = vpack.c.b16 %v3581, %v3581
        %v3586 = vpack.c.b16 %v3582, %v3582
        %v3587 = vpack.c.b16 %v3583, %v3583
        %v3588 = vpack.c.b16 %v3584, %v3584
        %3593 = vst [vmem:[%s464] sm:$0xf] %v3585
        %3594 = vst [vmem:[%s464 + $0x4] sm:$0xf] %v3586
        %3595 = vst [vmem:[%s464 + $0x8] sm:$0xf] %v3587
        %3596 = vst [vmem:[%s464 + $0xc] sm:$0xf] %v3588
        %p3597 = scmp.lt.s32.totalorder %s26, 1
        %s3598 = scalar_select %p3597, %s26, 1
        %s3599 = smul.addr %s3598, 4
        %s3600 = smul.addr %s3599, 4
        %s3601 = scalar_lea.vmem %s11, %s3600
        // Predicated region
        $region89: #{filter_conv_forward.2} parent=63 // pred_check
          %p3602 = pneg %p280
        $region90: #{filter_conv_forward.2} parent=63 // pred_check_branch
          %3604 = sbr.rel (%p3602) target = $region92
        $region91: #{filter_conv_forward.2} parent=63 // pred_region
          _
        $region92: #{filter_conv_forward.2} parent=63 // pred_fallthru
          _
      $region64: #{filter_conv_forward.2} parent=5 // pred_fallthru
        _
      %p3605 = scmp.le.s32.totalorder 2, %s21
      // Predicated region
      $region93: #{filter_conv_forward.2} parent=5 // pred_check
        %p3606 = pneg %p3605
      $region94: #{filter_conv_forward.2} parent=5 // pred_check_branch
        %3608 = sbr.rel (%p3606) target = $region96
      $region95: #{filter_conv_forward.2} parent=5 // pred_region
        %s3609 = ssub.s32 %s21, 2
        // Predicated region
        $region97: #{filter_conv_forward.2} parent=95 // pred_check
          %p3610 = pneg %p286
        $region98: #{filter_conv_forward.2} parent=95 // pred_check_branch
          %3612 = sbr.rel (%p3610) target = $region100
        $region99: #{filter_conv_forward.2} parent=95 // pred_region
          %p3613 = scmp.lt.s32.totalorder %s27, 1
          %s3614 = scalar_select %p3613, %s27, 1
          %s3615 = smul.addr %s3614, 4
          %s3616 = smul.addr %s3615, 4
          %s3617 = scalar_lea.vmem %s11, %s3616
        $region100: #{filter_conv_forward.2} parent=95 // pred_fallthru
          _
      $region96: #{filter_conv_forward.2} parent=5 // pred_fallthru
        _
    $region6: #{filter_conv_forward.2} parent=1 // loop_footer
      %s25 = sadd.s32 1, %s21
    $region7: #{filter_conv_forward.2} parent=1 // loop_footer_branch
      %20 = sbr.rel target = $region3
    $region8: #{filter_conv_forward.2} parent=1 // loop_exit
      _
    %3618 = vsyncpa [#allocation7], 1
    %s3619 = scalar_lea.sflag [#allocation7], 1
    %3620 = vsyncpa %s3619, 1
    %3621 = vsyncpa [#allocation9], 1
    %3622 = vsyncpa [#allocation12], 1
    %3623 = vsyncpa [#allocation15], 1

</llo_original>
